<compile_context>
chip_gen: v6e
topology: v6e:2x2x1
jax: 0.10.0
libtpu: 0.0.40
codegen_flags: <defaults>
</compile_context>

<pallas_src>
import functools

import jax
import jax.numpy as jnp
import numpy as np
from jax import lax
from jax.experimental import pallas as pl
from jax.experimental.pallas import tpu as pltpu

KERNEL_SIZES = (3, 4, 5)
_NEG_INF = -1e30


def _round_up(x, m):
    return ((x + m - 1) // m) * m


def cnn_kernel(x1_ref, x2_ref, w1_ref, w2_ref, vlen_ref, fcw_ref, fcb_ref, out_ref):
    """Fused conv + ReLU + time max-pool + branch diff + fc + log_softmax for Bt samples.

    Shapes per grid step:
      x1_ref/x2_ref : (Bt, S_ext, E_pad)   bf16  (bias lane == 1.0 on real token rows)
      w1_ref/w2_ref : (K_max, E_pad, CP)   bf16  (row E of k=0 slice holds the conv bias)
      vlen_ref      : (1, CP)              int32 (valid time length S-K+1 per channel, <=0 on pads)
      fcw_ref       : (2*CP, OUT_pad)      bf16  (branch-2 half negated -> branch difference)
      fcb_ref       : (1, OUT_pad)         f32   (pad columns = -1e30 -> masked in log_softmax)
      out_ref       : (Bt, OUT_pad)        f32
    """
    Bt, S_ext, E_pad = x1_ref.shape
    K_max, _, CP = w1_ref.shape
    S_al = S_ext - (K_max - 1)          # conv positions evaluated per sample (multiple of 16)
    rows = Bt * S_al

    # Per-position / per-channel validity mask, built in-kernel (free VPU filler under the MXU).
    t = lax.broadcasted_iota(jnp.int32, (S_al, CP), 0)
    valid = (t < vlen_ref[...])[None]                         # (1, S_al, CP) bool

    def branch_pool(x_ref, w_ref):
        x = x_ref[...]                                        # (Bt, S_ext, E_pad) bf16
        acc = None
        for k in range(K_max):                                # accumulate K_max MXU matmuls
            xk = x[:, k:k + S_al, :].reshape(rows, E_pad)     # layout-preserving merge (S_al % 16 == 0)
            part = jnp.dot(xk, w_ref[k], preferred_element_type=jnp.float32)
            acc = part if acc is None else acc + part
        conv = jnp.maximum(acc, 0.0).reshape(Bt, S_al, CP)    # bias already folded in via ones-lane
        conv = jnp.where(valid, conv, 0.0)                    # zero invalid positions (ReLU >= 0)
        return jnp.max(conv, axis=1)                          # (Bt, CP) f32 time max-pool

    p1 = branch_pool(x1_ref, w1_ref)
    p2 = branch_pool(x2_ref, w2_ref)

    # Branch difference folded into the packed fc weights (second half negated).
    feats = jnp.concatenate([p1, p2], axis=1).astype(jnp.bfloat16)        # (Bt, 2*CP)
    logits = jnp.dot(feats, fcw_ref[...],
                     preferred_element_type=jnp.float32) + fcb_ref[...]   # (Bt, OUT_pad)

    m = jnp.max(logits, axis=1, keepdims=True)
    sh = logits - m
    lse = jnp.log(jnp.sum(jnp.exp(sh), axis=1, keepdims=True))            # pad cols contribute 0
    out_ref[...] = (sh - lse).astype(out_ref.dtype)


def pack_cnn_params(params):
    """One-time packing (off the serving path) of weights into MXU/lane-friendly slabs."""
    E = params["emb_table1"].shape[1]
    C = params["conv_b1"][0].shape[0]
    OUT = params["fc_b"].shape[0]
    n = len(KERNEL_SIZES)
    K_max = max(KERNEL_SIZES)
    E_pad = _round_up(E + 1, 128)       # +1 lane carries a constant 1.0 to fold the conv bias
    CP = _round_up(n * C, 128)
    OUT_pad = _round_up(OUT, 128)

    def pad_table(tbl):
        tbl = np.asarray(tbl, np.float32)
        t = np.zeros((tbl.shape[0], E_pad), np.float32)
        t[:, :E] = tbl
        t[:, E] = 1.0                   # bias lane
        return jnp.asarray(t, jnp.bfloat16)

    def pack_conv(ws, bs):
        w = np.zeros((K_max, E_pad, CP), np.float32)
        for gi, (cw, cb, K) in enumerate(zip(ws, bs, KERNEL_SIZES)):
            cw = np.asarray(cw, np.float32)                   # PyTorch layout (C, K, E)
            for k in range(K):
                w[k, :E, gi * C:(gi + 1) * C] = cw[:, k, :].T
            w[0, E, gi * C:(gi + 1) * C] = np.asarray(cb, np.float32)   # bias via ones-lane
        return jnp.asarray(w, jnp.bfloat16)

    kvals = np.full((1, CP), 10**6, np.int32)                 # huge K on pad lanes -> never valid
    for gi, K in enumerate(KERNEL_SIZES):
        kvals[0, gi * C:(gi + 1) * C] = K

    fcw = np.zeros((2 * CP, OUT_pad), np.float32)
    fcT = np.asarray(params["fc_w"], np.float32).T            # (3C, OUT), feature order K3|K4|K5
    fcw[0:n * C, :OUT] = fcT                                  # branch 1 (+)
    fcw[CP:CP + n * C, :OUT] = -fcT                           # branch 2 (-)
    fcb = np.full((1, OUT_pad), _NEG_INF, np.float32)
    fcb[0, :OUT] = np.asarray(params["fc_b"], np.float32)

    return {
        "emb_table1": pad_table(params["emb_table1"]),
        "emb_table2": pad_table(params["emb_table2"]),
        "conv_w1": pack_conv(params["conv_w1"], params["conv_b1"]),
        "conv_w2": pack_conv(params["conv_w2"], params["conv_b2"]),
        "kvals": jnp.asarray(kvals),
        "fc_w": jnp.asarray(fcw, jnp.bfloat16),
        "fc_b": jnp.asarray(fcb),
    }


@functools.partial(jax.jit, static_argnames=("out_dim", "block_b"))
def cnn_forward_pallas(tokens1, tokens2, packed, *, out_dim, block_b=8):
    B, S = tokens1.shape
    K_min, K_max = min(KERNEL_SIZES), max(KERNEL_SIZES)
    if S < K_max:
        raise ValueError(f"sequence length {S} must be >= max kernel size {K_max}")

    E_pad = packed["emb_table1"].shape[1]
    CP = packed["conv_w1"].shape[2]
    OUT_pad = packed["fc_w"].shape[1]

    L = S - K_min + 1
    S_al = _round_up(L, 16)             # conv positions per sample, bf16 sublane-aligned
    S_ext = S_al + K_max - 1            # per-sample padded sequence seen by the kernel
    Bt = block_b
    Bp = _round_up(B, Bt)

    # Gather from pre-cast/pre-padded bf16 tables (no per-call full-table cast), pad seq & batch.
    # TODO(synk): move the gather in-kernel via PrefetchScalarGridSpec (tokens as scalar prefetch)
    #             to avoid the HBM round trip of the gathered embeddings (biggest win on v5e).
    emb1 = packed["emb_table1"][tokens1]
    emb2 = packed["emb_table2"][tokens2]
    emb1 = jnp.pad(emb1, ((0, Bp - B), (0, S_ext - S), (0, 0)))
    emb2 = jnp.pad(emb2, ((0, Bp - B), (0, S_ext - S), (0, 0)))

    vlen = (S + 1 - packed["kvals"]).astype(jnp.int32)        # (1, CP): S - K + 1 per channel

    out = pl.pallas_call(
        cnn_kernel,
        out_shape=jax.ShapeDtypeStruct((Bp, OUT_pad), jnp.float32),
        grid=(Bp // Bt,),                                     # batch-tiled grid
        in_specs=[
            pl.BlockSpec((Bt, S_ext, E_pad), lambda i: (i, 0, 0)),    # emb1 batch tile
            pl.BlockSpec((Bt, S_ext, E_pad), lambda i: (i, 0, 0)),    # emb2 batch tile
            pl.BlockSpec((K_max, E_pad, CP), lambda i: (0, 0, 0)),    # branch-1 conv weights (resident)
            pl.BlockSpec((K_max, E_pad, CP), lambda i: (0, 0, 0)),    # branch-2 conv weights (resident)
            pl.BlockSpec((1, CP), lambda i: (0, 0)),                  # per-channel valid length
            pl.BlockSpec((2 * CP, OUT_pad), lambda i: (0, 0)),        # packed fc weights (bf16)
            pl.BlockSpec((1, OUT_pad), lambda i: (0, 0)),             # fc bias (-1e30 on pad cols)
        ],
        out_specs=pl.BlockSpec((Bt, OUT_pad), lambda i: (i, 0)),      # lane/sublane-dense output
        compiler_params=pltpu.CompilerParams(
            dimension_semantics=("parallel",),
            vmem_limit_bytes=32 * 1024 * 1024,
        ),
    )(emb1, emb2, packed["conv_w1"], packed["conv_w2"], vlen, packed["fc_w"], packed["fc_b"])
    return out[:B, :out_dim]


def cnn_forward_reference(tokens1, tokens2, params):
    # Pure-JAX f32 reference mirroring the PyTorch forward (is_training=False, no dropout).
    def branch(tokens, table, ws, bs):
        x = table[tokens]                              # (B, S, E)
        S = x.shape[1]
        feats = []
        for w, b, K in zip(ws, bs, KERNEL_SIZES):      # w: (C, K, E)
            L = S - K + 1
            conv = jnp.stack(
                [jnp.einsum("bke,cke->bc", x[:, t:t + K, :], w) for t in range(L)],
                axis=2) + b[None, :, None]             # (B, C, L)
            conv = jnp.maximum(conv, 0.0)
            feats.append(jnp.max(conv, axis=2))        # (B, C)
        return jnp.concatenate(feats, axis=1)          # (B, 3C)

    f1 = branch(tokens1, params["emb_table1"], params["conv_w1"], params["conv_b1"])
    f2 = branch(tokens2, params["emb_table2"], params["conv_w2"], params["conv_b2"])
    diff = f1 - f2
    logits = diff @ params["fc_w"].T + params["fc_b"]
    return jax.nn.log_softmax(logits, axis=1)


def make_params(key, vocab_size, embedding_dim, kernel_dim, output_size):
    ks = jax.random.split(key, 16)
    i = iter(range(16))
    params = {
        "emb_table1": jax.random.normal(ks[next(i)], (vocab_size, embedding_dim), jnp.float32) * 0.1,
        "emb_table2": jax.random.normal(ks[next(i)], (vocab_size, embedding_dim), jnp.float32) * 0.1,
        "conv_w1": [], "conv_b1": [], "conv_w2": [], "conv_b2": [],
    }
    for K in KERNEL_SIZES:
        params["conv_w1"].append(
            jax.random.normal(ks[next(i)], (kernel_dim, K, embedding_dim), jnp.float32) * 0.1)
        params["conv_b1"].append(
            jax.random.normal(ks[next(i)], (kernel_dim,), jnp.float32) * 0.1)
    for K in KERNEL_SIZES:
        params["conv_w2"].append(
            jax.random.normal(ks[next(i)], (kernel_dim, K, embedding_dim), jnp.float32) * 0.1)
        params["conv_b2"].append(
            jax.random.normal(ks[next(i)], (kernel_dim,), jnp.float32) * 0.1)
    params["fc_w"] = jax.random.normal(
        ks[next(i)], (output_size, len(KERNEL_SIZES) * kernel_dim), jnp.float32) * 0.1
    params["fc_b"] = jax.random.normal(ks[next(i)], (output_size,), jnp.float32) * 0.1
    return params


if __name__ == "__main__":
    # Small synthetic config consistent with the module (kernel_sizes=(3,4,5)).
    VOCAB, EMB_DIM, KERNEL_DIM, OUT, B, S = 50, 32, 8, 4, 16, 8

    root = jax.random.PRNGKey(0)
    kp, kt1, kt2 = jax.random.split(root, 3)
    params = make_params(kp, VOCAB, EMB_DIM, KERNEL_DIM, OUT)
    tokens1 = jax.random.randint(kt1, (B, S), 0, VOCAB, dtype=jnp.int32)
    tokens2 = jax.random.randint(kt2, (B, S), 0, VOCAB, dtype=jnp.int32)

    packed = pack_cnn_params(params)      # one-time packing, off the per-call path

    out = jax.block_until_ready(
        cnn_forward_pallas(tokens1, tokens2, packed, out_dim=OUT, block_b=8))
    ref = jax.block_until_ready(cnn_forward_reference(tokens1, tokens2, params))

    # Kernel path uses bf16 embeddings/conv/fc weights with f32 MXU accumulation.
    np.testing.assert_allclose(np.asarray(out), np.asarray(ref), rtol=2e-2, atol=2e-2)
    print("KERNEL_OK")
</pallas_src>

<mosaic_0001>
module attributes {stable_mosaic.version = 11 : i64} {
  func.func @cnn_kernel(%arg0: i32, %arg1: memref<8x20x128xbf16, #tpu.memory_space<vmem>>, %arg2: memref<8x20x128xbf16, #tpu.memory_space<vmem>>, %arg3: memref<5x128x128xbf16, #tpu.memory_space<vmem>>, %arg4: memref<5x128x128xbf16, #tpu.memory_space<vmem>>, %arg5: memref<1x128xi32, #tpu.memory_space<vmem>>, %arg6: memref<256x128xbf16, #tpu.memory_space<vmem>>, %arg7: memref<1x128xf32, #tpu.memory_space<vmem>>, %arg8: memref<8x128xf32, #tpu.memory_space<vmem>>) attributes {dimension_semantics = [#tpu.dimension_semantics<parallel>], iteration_bounds = array<i64: 2>, scalar_prefetch = 0 : i64, scratch_operands = 0 : i64, tpu.core_type = #tpu.core_type<tc>, window_params = [{transform_indices = @transform_0, window_bounds = array<i64: 8, 20, 128>}, {transform_indices = @transform_1, window_bounds = array<i64: 8, 20, 128>}, {pipeline_mode = #tpu.pipeline_mode<synchronous>, transform_indices = @transform_2, window_bounds = array<i64: 5, 128, 128>}, {pipeline_mode = #tpu.pipeline_mode<synchronous>, transform_indices = @transform_3, window_bounds = array<i64: 5, 128, 128>}, {pipeline_mode = #tpu.pipeline_mode<synchronous>, transform_indices = @transform_4, window_bounds = array<i64: 1, 128>}, {pipeline_mode = #tpu.pipeline_mode<synchronous>, transform_indices = @transform_5, window_bounds = array<i64: 256, 128>}, {pipeline_mode = #tpu.pipeline_mode<synchronous>, transform_indices = @transform_6, window_bounds = array<i64: 1, 128>}, {transform_indices = @transform_7, window_bounds = array<i64: 8, 128>}]} {
    %0 = tpu.iota {dimensions = array<i32: 0>} : vector<16x128xi32>
    %c0 = arith.constant 0 : index
    %c0_0 = arith.constant 0 : index
    %1 = vector.load %arg5[%c0, %c0_0] : memref<1x128xi32, #tpu.memory_space<vmem>>, vector<1x128xi32>
    %2 = vector.broadcast %1 : vector<1x128xi32> to vector<16x128xi32>
    %3 = arith.cmpi slt, %0, %2 : vector<16x128xi32>
    %4 = vector.shape_cast %3 : vector<16x128xi1> to vector<1x16x128xi1>
    %c0_1 = arith.constant 0 : index
    %c0_2 = arith.constant 0 : index
    %c0_3 = arith.constant 0 : index
    %5 = vector.load %arg1[%c0_1, %c0_2, %c0_3] : memref<8x20x128xbf16, #tpu.memory_space<vmem>>, vector<8x20x128xbf16>
    %6 = vector.extract_strided_slice %5 {offsets = [0, 0, 0], sizes = [8, 16, 128], strides = [1, 1, 1]} : vector<8x20x128xbf16> to vector<8x16x128xbf16>
    %7 = vector.shape_cast %6 : vector<8x16x128xbf16> to vector<128x128xbf16>
    %c0_4 = arith.constant 0 : index
    %c0_5 = arith.constant 0 : index
    %c0_6 = arith.constant 0 : index
    %8 = vector.load %arg3[%c0_4, %c0_5, %c0_6] : memref<5x128x128xbf16, #tpu.memory_space<vmem>>, vector<1x128x128xbf16>
    %9 = vector.shape_cast %8 : vector<1x128x128xbf16> to vector<128x128xbf16>
    %cst = arith.constant dense<0.000000e+00> : vector<128x128xf32>
    %10 = tpu.matmul %7, %9, %cst {dimension_numbers = #tpu.dot_dimension_numbers<[1], [0], [0], [1], [0, 0, 1, 1], [], []>} : vector<128x128xbf16>, vector<128x128xbf16>, vector<128x128xf32> -> vector<128x128xf32>
    %11 = vector.extract_strided_slice %5 {offsets = [0, 1, 0], sizes = [8, 16, 128], strides = [1, 1, 1]} : vector<8x20x128xbf16> to vector<8x16x128xbf16>
    %12 = vector.shape_cast %11 : vector<8x16x128xbf16> to vector<128x128xbf16>
    %c1 = arith.constant 1 : index
    %c0_7 = arith.constant 0 : index
    %c0_8 = arith.constant 0 : index
    %13 = vector.load %arg3[%c1, %c0_7, %c0_8] : memref<5x128x128xbf16, #tpu.memory_space<vmem>>, vector<1x128x128xbf16>
    %14 = vector.shape_cast %13 : vector<1x128x128xbf16> to vector<128x128xbf16>
    %cst_9 = arith.constant dense<0.000000e+00> : vector<128x128xf32>
    %15 = tpu.matmul %12, %14, %cst_9 {dimension_numbers = #tpu.dot_dimension_numbers<[1], [0], [0], [1], [0, 0, 1, 1], [], []>} : vector<128x128xbf16>, vector<128x128xbf16>, vector<128x128xf32> -> vector<128x128xf32>
    %16 = arith.addf %10, %15 : vector<128x128xf32>
    %17 = vector.extract_strided_slice %5 {offsets = [0, 2, 0], sizes = [8, 16, 128], strides = [1, 1, 1]} : vector<8x20x128xbf16> to vector<8x16x128xbf16>
    %18 = vector.shape_cast %17 : vector<8x16x128xbf16> to vector<128x128xbf16>
    %c2 = arith.constant 2 : index
    %c0_10 = arith.constant 0 : index
    %c0_11 = arith.constant 0 : index
    %19 = vector.load %arg3[%c2, %c0_10, %c0_11] : memref<5x128x128xbf16, #tpu.memory_space<vmem>>, vector<1x128x128xbf16>
    %20 = vector.shape_cast %19 : vector<1x128x128xbf16> to vector<128x128xbf16>
    %cst_12 = arith.constant dense<0.000000e+00> : vector<128x128xf32>
    %21 = tpu.matmul %18, %20, %cst_12 {dimension_numbers = #tpu.dot_dimension_numbers<[1], [0], [0], [1], [0, 0, 1, 1], [], []>} : vector<128x128xbf16>, vector<128x128xbf16>, vector<128x128xf32> -> vector<128x128xf32>
    %22 = arith.addf %16, %21 : vector<128x128xf32>
    %23 = vector.extract_strided_slice %5 {offsets = [0, 3, 0], sizes = [8, 16, 128], strides = [1, 1, 1]} : vector<8x20x128xbf16> to vector<8x16x128xbf16>
    %24 = vector.shape_cast %23 : vector<8x16x128xbf16> to vector<128x128xbf16>
    %c3 = arith.constant 3 : index
    %c0_13 = arith.constant 0 : index
    %c0_14 = arith.constant 0 : index
    %25 = vector.load %arg3[%c3, %c0_13, %c0_14] : memref<5x128x128xbf16, #tpu.memory_space<vmem>>, vector<1x128x128xbf16>
    %26 = vector.shape_cast %25 : vector<1x128x128xbf16> to vector<128x128xbf16>
    %cst_15 = arith.constant dense<0.000000e+00> : vector<128x128xf32>
    %27 = tpu.matmul %24, %26, %cst_15 {dimension_numbers = #tpu.dot_dimension_numbers<[1], [0], [0], [1], [0, 0, 1, 1], [], []>} : vector<128x128xbf16>, vector<128x128xbf16>, vector<128x128xf32> -> vector<128x128xf32>
    %28 = arith.addf %22, %27 : vector<128x128xf32>
    %29 = vector.extract_strided_slice %5 {offsets = [0, 4, 0], sizes = [8, 16, 128], strides = [1, 1, 1]} : vector<8x20x128xbf16> to vector<8x16x128xbf16>
    %30 = vector.shape_cast %29 : vector<8x16x128xbf16> to vector<128x128xbf16>
    %c4 = arith.constant 4 : index
    %c0_16 = arith.constant 0 : index
    %c0_17 = arith.constant 0 : index
    %31 = vector.load %arg3[%c4, %c0_16, %c0_17] : memref<5x128x128xbf16, #tpu.memory_space<vmem>>, vector<1x128x128xbf16>
    %32 = vector.shape_cast %31 : vector<1x128x128xbf16> to vector<128x128xbf16>
    %cst_18 = arith.constant dense<0.000000e+00> : vector<128x128xf32>
    %33 = tpu.matmul %30, %32, %cst_18 {dimension_numbers = #tpu.dot_dimension_numbers<[1], [0], [0], [1], [0, 0, 1, 1], [], []>} : vector<128x128xbf16>, vector<128x128xbf16>, vector<128x128xf32> -> vector<128x128xf32>
    %34 = arith.addf %28, %33 : vector<128x128xf32>
    %cst_19 = arith.constant 0.000000e+00 : f32
    %35 = vector.broadcast %cst_19 : f32 to vector<128x128xf32>
    %36 = arith.maximumf %34, %35 : vector<128x128xf32>
    %37 = vector.shape_cast %36 : vector<128x128xf32> to vector<8x16x128xf32>
    %cst_20 = arith.constant 0.000000e+00 : f32
    %38 = vector.shape_cast %4 : vector<1x16x128xi1> to vector<1x16x128xi1>
    %39 = vector.broadcast %38 : vector<1x16x128xi1> to vector<8x16x128xi1>
    %40 = vector.broadcast %cst_20 : f32 to vector<8x16x128xf32>
    %41 = arith.select %39, %37, %40 : vector<8x16x128xi1>, vector<8x16x128xf32>
    %cst_21 = arith.constant dense<0xFF800000> : vector<8x128xf32>
    %42 = vector.multi_reduction <maximumf>, %41, %cst_21 [1] : vector<8x16x128xf32> to vector<8x128xf32>
    %c0_22 = arith.constant 0 : index
    %c0_23 = arith.constant 0 : index
    %c0_24 = arith.constant 0 : index
    %43 = vector.load %arg2[%c0_22, %c0_23, %c0_24] : memref<8x20x128xbf16, #tpu.memory_space<vmem>>, vector<8x20x128xbf16>
    %44 = vector.extract_strided_slice %43 {offsets = [0, 0, 0], sizes = [8, 16, 128], strides = [1, 1, 1]} : vector<8x20x128xbf16> to vector<8x16x128xbf16>
    %45 = vector.shape_cast %44 : vector<8x16x128xbf16> to vector<128x128xbf16>
    %c0_25 = arith.constant 0 : index
    %c0_26 = arith.constant 0 : index
    %c0_27 = arith.constant 0 : index
    %46 = vector.load %arg4[%c0_25, %c0_26, %c0_27] : memref<5x128x128xbf16, #tpu.memory_space<vmem>>, vector<1x128x128xbf16>
    %47 = vector.shape_cast %46 : vector<1x128x128xbf16> to vector<128x128xbf16>
    %cst_28 = arith.constant dense<0.000000e+00> : vector<128x128xf32>
    %48 = tpu.matmul %45, %47, %cst_28 {dimension_numbers = #tpu.dot_dimension_numbers<[1], [0], [0], [1], [0, 0, 1, 1], [], []>} : vector<128x128xbf16>, vector<128x128xbf16>, vector<128x128xf32> -> vector<128x128xf32>
    %49 = vector.extract_strided_slice %43 {offsets = [0, 1, 0], sizes = [8, 16, 128], strides = [1, 1, 1]} : vector<8x20x128xbf16> to vector<8x16x128xbf16>
    %50 = vector.shape_cast %49 : vector<8x16x128xbf16> to vector<128x128xbf16>
    %c1_29 = arith.constant 1 : index
    %c0_30 = arith.constant 0 : index
    %c0_31 = arith.constant 0 : index
    %51 = vector.load %arg4[%c1_29, %c0_30, %c0_31] : memref<5x128x128xbf16, #tpu.memory_space<vmem>>, vector<1x128x128xbf16>
    %52 = vector.shape_cast %51 : vector<1x128x128xbf16> to vector<128x128xbf16>
    %cst_32 = arith.constant dense<0.000000e+00> : vector<128x128xf32>
    %53 = tpu.matmul %50, %52, %cst_32 {dimension_numbers = #tpu.dot_dimension_numbers<[1], [0], [0], [1], [0, 0, 1, 1], [], []>} : vector<128x128xbf16>, vector<128x128xbf16>, vector<128x128xf32> -> vector<128x128xf32>
    %54 = arith.addf %48, %53 : vector<128x128xf32>
    %55 = vector.extract_strided_slice %43 {offsets = [0, 2, 0], sizes = [8, 16, 128], strides = [1, 1, 1]} : vector<8x20x128xbf16> to vector<8x16x128xbf16>
    %56 = vector.shape_cast %55 : vector<8x16x128xbf16> to vector<128x128xbf16>
    %c2_33 = arith.constant 2 : index
    %c0_34 = arith.constant 0 : index
    %c0_35 = arith.constant 0 : index
    %57 = vector.load %arg4[%c2_33, %c0_34, %c0_35] : memref<5x128x128xbf16, #tpu.memory_space<vmem>>, vector<1x128x128xbf16>
    %58 = vector.shape_cast %57 : vector<1x128x128xbf16> to vector<128x128xbf16>
    %cst_36 = arith.constant dense<0.000000e+00> : vector<128x128xf32>
    %59 = tpu.matmul %56, %58, %cst_36 {dimension_numbers = #tpu.dot_dimension_numbers<[1], [0], [0], [1], [0, 0, 1, 1], [], []>} : vector<128x128xbf16>, vector<128x128xbf16>, vector<128x128xf32> -> vector<128x128xf32>
    %60 = arith.addf %54, %59 : vector<128x128xf32>
    %61 = vector.extract_strided_slice %43 {offsets = [0, 3, 0], sizes = [8, 16, 128], strides = [1, 1, 1]} : vector<8x20x128xbf16> to vector<8x16x128xbf16>
    %62 = vector.shape_cast %61 : vector<8x16x128xbf16> to vector<128x128xbf16>
    %c3_37 = arith.constant 3 : index
    %c0_38 = arith.constant 0 : index
    %c0_39 = arith.constant 0 : index
    %63 = vector.load %arg4[%c3_37, %c0_38, %c0_39] : memref<5x128x128xbf16, #tpu.memory_space<vmem>>, vector<1x128x128xbf16>
    %64 = vector.shape_cast %63 : vector<1x128x128xbf16> to vector<128x128xbf16>
    %cst_40 = arith.constant dense<0.000000e+00> : vector<128x128xf32>
    %65 = tpu.matmul %62, %64, %cst_40 {dimension_numbers = #tpu.dot_dimension_numbers<[1], [0], [0], [1], [0, 0, 1, 1], [], []>} : vector<128x128xbf16>, vector<128x128xbf16>, vector<128x128xf32> -> vector<128x128xf32>
    %66 = arith.addf %60, %65 : vector<128x128xf32>
    %67 = vector.extract_strided_slice %43 {offsets = [0, 4, 0], sizes = [8, 16, 128], strides = [1, 1, 1]} : vector<8x20x128xbf16> to vector<8x16x128xbf16>
    %68 = vector.shape_cast %67 : vector<8x16x128xbf16> to vector<128x128xbf16>
    %c4_41 = arith.constant 4 : index
    %c0_42 = arith.constant 0 : index
    %c0_43 = arith.constant 0 : index
    %69 = vector.load %arg4[%c4_41, %c0_42, %c0_43] : memref<5x128x128xbf16, #tpu.memory_space<vmem>>, vector<1x128x128xbf16>
    %70 = vector.shape_cast %69 : vector<1x128x128xbf16> to vector<128x128xbf16>
    %cst_44 = arith.constant dense<0.000000e+00> : vector<128x128xf32>
    %71 = tpu.matmul %68, %70, %cst_44 {dimension_numbers = #tpu.dot_dimension_numbers<[1], [0], [0], [1], [0, 0, 1, 1], [], []>} : vector<128x128xbf16>, vector<128x128xbf16>, vector<128x128xf32> -> vector<128x128xf32>
    %72 = arith.addf %66, %71 : vector<128x128xf32>
    %cst_45 = arith.constant 0.000000e+00 : f32
    %73 = vector.broadcast %cst_45 : f32 to vector<128x128xf32>
    %74 = arith.maximumf %72, %73 : vector<128x128xf32>
    %75 = vector.shape_cast %74 : vector<128x128xf32> to vector<8x16x128xf32>
    %cst_46 = arith.constant 0.000000e+00 : f32
    %76 = vector.shape_cast %4 : vector<1x16x128xi1> to vector<1x16x128xi1>
    %77 = vector.broadcast %76 : vector<1x16x128xi1> to vector<8x16x128xi1>
    %78 = vector.broadcast %cst_46 : f32 to vector<8x16x128xf32>
    %79 = arith.select %77, %75, %78 : vector<8x16x128xi1>, vector<8x16x128xf32>
    %cst_47 = arith.constant dense<0xFF800000> : vector<8x128xf32>
    %80 = vector.multi_reduction <maximumf>, %79, %cst_47 [1] : vector<8x16x128xf32> to vector<8x128xf32>
    %81 = tpu.concatenate %42, %80 in 1 : vector<8x128xf32>, vector<8x128xf32> -> vector<8x256xf32>
    %82 = arith.truncf %81 : vector<8x256xf32> to vector<8x256xbf16>
    %c0_48 = arith.constant 0 : index
    %c0_49 = arith.constant 0 : index
    %83 = vector.load %arg6[%c0_48, %c0_49] : memref<256x128xbf16, #tpu.memory_space<vmem>>, vector<256x128xbf16>
    %cst_50 = arith.constant dense<0.000000e+00> : vector<8x128xf32>
    %84 = tpu.matmul %82, %83, %cst_50 {dimension_numbers = #tpu.dot_dimension_numbers<[1], [0], [0], [1], [0, 0, 1, 1], [], []>} : vector<8x256xbf16>, vector<256x128xbf16>, vector<8x128xf32> -> vector<8x128xf32>
    %c0_51 = arith.constant 0 : index
    %c0_52 = arith.constant 0 : index
    %85 = vector.load %arg7[%c0_51, %c0_52] : memref<1x128xf32, #tpu.memory_space<vmem>>, vector<1x128xf32>
    %86 = vector.broadcast %85 : vector<1x128xf32> to vector<8x128xf32>
    %87 = arith.addf %84, %86 : vector<8x128xf32>
    %cst_53 = arith.constant dense<0xFF800000> : vector<8xf32>
    %88 = vector.multi_reduction <maximumf>, %87, %cst_53 [1] : vector<8x128xf32> to vector<8xf32>
    %89 = vector.shape_cast %88 : vector<8xf32> to vector<8x1xf32>
    %90 = vector.broadcast %89 : vector<8x1xf32> to vector<8x128xf32>
    %91 = arith.subf %87, %90 : vector<8x128xf32>
    %92 = math.exp %91 : vector<8x128xf32>
    %cst_54 = arith.constant dense<0.000000e+00> : vector<8xf32>
    %93 = vector.multi_reduction <add>, %92, %cst_54 [1] : vector<8x128xf32> to vector<8xf32>
    %94 = vector.shape_cast %93 : vector<8xf32> to vector<8x1xf32>
    %95 = math.log %94 : vector<8x1xf32>
    %96 = vector.broadcast %95 : vector<8x1xf32> to vector<8x128xf32>
    %97 = arith.subf %91, %96 : vector<8x128xf32>
    %c0_55 = arith.constant 0 : index
    %c0_56 = arith.constant 0 : index
    %98 = vector.load %arg8[%c0_55, %c0_56] : memref<8x128xf32, #tpu.memory_space<vmem>>, vector<8x128xf32>
    tpu.vector_store %arg8[%c0_55, %c0_56], %97 {strides = array<i32>} : memref<8x128xf32, #tpu.memory_space<vmem>>, vector<8x128xf32>,
    return
  }
  func.func @transform_0(%arg0: i32) -> (i32, i32, i32) {
    %c0_i32 = arith.constant 0 : i32
    %c0_i32_0 = arith.constant 0 : i32
    %c0_i32_1 = arith.constant 0 : i32
    return %arg0, %c0_i32, %c0_i32_0 : i32, i32, i32
  }
  func.func @transform_1(%arg0: i32) -> (i32, i32, i32) {
    %c0_i32 = arith.constant 0 : i32
    %c0_i32_0 = arith.constant 0 : i32
    %c0_i32_1 = arith.constant 0 : i32
    return %arg0, %c0_i32, %c0_i32_0 : i32, i32, i32
  }
  func.func @transform_2(%arg0: i32) -> (i32, i32, i32) {
    %c0_i32 = arith.constant 0 : i32
    %c0_i32_0 = arith.constant 0 : i32
    %c0_i32_1 = arith.constant 0 : i32
    %c0_i32_2 = arith.constant 0 : i32
    return %c0_i32, %c0_i32_0, %c0_i32_1 : i32, i32, i32
  }
  func.func @transform_3(%arg0: i32) -> (i32, i32, i32) {
    %c0_i32 = arith.constant 0 : i32
    %c0_i32_0 = arith.constant 0 : i32
    %c0_i32_1 = arith.constant 0 : i32
    %c0_i32_2 = arith.constant 0 : i32
    return %c0_i32, %c0_i32_0, %c0_i32_1 : i32, i32, i32
  }
  func.func @transform_4(%arg0: i32) -> (i32, i32) {
    %c0_i32 = arith.constant 0 : i32
    %c0_i32_0 = arith.constant 0 : i32
    %c0_i32_1 = arith.constant 0 : i32
    return %c0_i32, %c0_i32_0 : i32, i32
  }
  func.func @transform_5(%arg0: i32) -> (i32, i32) {
    %c0_i32 = arith.constant 0 : i32
    %c0_i32_0 = arith.constant 0 : i32
    %c0_i32_1 = arith.constant 0 : i32
    return %c0_i32, %c0_i32_0 : i32, i32
  }
  func.func @transform_6(%arg0: i32) -> (i32, i32) {
    %c0_i32 = arith.constant 0 : i32
    %c0_i32_0 = arith.constant 0 : i32
    %c0_i32_1 = arith.constant 0 : i32
    return %c0_i32, %c0_i32_0 : i32, i32
  }
  func.func @transform_7(%arg0: i32) -> (i32, i32) {
    %c0_i32 = arith.constant 0 : i32
    %c0_i32_0 = arith.constant 0 : i32
    return %arg0, %c0_i32 : i32, i32
  }
}

</mosaic_0001>

<llo_original>
// kernel: cnn_forward_pallas.1
$region0: #{cnn_forward_pallas.1}
  #allocation0 [shape = 'u32[]', space=smem, size = 0x4, offset = 0x4, fixed_abs, tag = 'smem constant byte address 0x4 - core index']
  #allocation1 [shape = 'u32[144,128]{1,0:T(1,128)}', space=vmem, size = 0x12000, scoped, tag = 'internal scratch']
  %s0 = inlined_call_operand.vmem [shape: bf16[16,20,128], index: 0, kind: input, shape index: {}]
  %s1 = inlined_call_operand.vmem [shape: bf16[16,20,128], index: 1, kind: input, shape index: {}]
  %s2 = inlined_call_operand.vmem [shape: bf16[5,128,128], index: 2, kind: input, shape index: {}]
  %s3 = inlined_call_operand.vmem [shape: bf16[5,128,128], index: 3, kind: input, shape index: {}]
  %s4 = inlined_call_operand.vmem [shape: s32[1,128], index: 4, kind: input, shape index: {}]
  %s5 = inlined_call_operand.vmem [shape: bf16[256,128], index: 5, kind: input, shape index: {}]
  %s6 = inlined_call_operand.vmem [shape: f32[1,128], index: 6, kind: input, shape index: {}]
  %s7 = inlined_call_operand.vmem [shape: f32[16,128], index: 7, kind: output, shape index: {}]
  %s8 = sld [smem:[#allocation0]]
  $region61: #{cnn_forward_pallas.1} parent=0
    _
  %s10 = ssub.s32 1, %s8
  %s11 = scalar_select 0, %s10, %s8
  loop: start=0, step=1, limit=4
  $region2: #{cnn_forward_pallas.1} parent=0 // loop_pre_header
    _
  $region3: #{cnn_forward_pallas.1} parent=0 // loop_header
    %s13 = sphi 0, %s17
    %p14 = scmp.ge.s32.totalorder %s13, 4
    %s23 = sphi 0, %s25
    %s26 = sphi 0, %s23
    %s27 = sphi 0, %s26
    %s43 = sphi 0, %s27
    %s49 = sphi 0, %s51
    %s52 = sphi 0, %s49
    %s53 = sphi 0, %s52
    %s69 = sphi 0, %s53
    %s73 = sphi 0, %s73
    %s75 = sphi 0, %s73
    %s76 = sphi 0, %s75
    %s90 = sphi 0, %s76
    %s94 = sphi 0, %s94
    %s96 = sphi 0, %s94
    %s97 = sphi 0, %s96
    %s111 = sphi 0, %s97
    %s115 = sphi 0, %s115
    %s117 = sphi 0, %s115
    %s118 = sphi 0, %s117
    %s132 = sphi 0, %s118
    %s136 = sphi 0, %s136
    %s138 = sphi 0, %s136
    %s139 = sphi 0, %s138
    %s153 = sphi 0, %s139
    %s157 = sphi 0, %s157
    %s159 = sphi 0, %s157
    %s160 = sphi 0, %s159
    %s174 = sphi 0, %s160
    %s180 = sphi 0, %s182
    %s183 = sphi 0, %s180
    %s184 = sphi 0, %s183
    %s200 = sphi 0, %s184
  $region4: #{cnn_forward_pallas.1} parent=0 // loop_header_branch
    %16 = sbr.rel (%p14) target = $region8
  $region5: #{cnn_forward_pallas.1} parent=0 // loop_body
    %s18 = ssub.s32 %s13, 1
    %s19 = ssub.s32 %s13, 2
    %s20 = sadd.s32 %s13, 1
    %s21 = ssub.s32 %s13, %s20
    %p22 = scmp.eq.s32.totalorder %s21, 0
    %s24 = sadd.s32 %s23, 1
    %s25 = scalar_select %p22, %s23, %s24
    %p28 = pneg %p22
    %p29 = scmp.eq.s32.totalorder %s13, 1
    %p30 = por %p28, %p29
    %p31 = scmp.ne.s32.totalorder %s23, %s26
    %p32 = scmp.eq.s32.totalorder %s13, 0
    %p33 = por %p31, %p32
    %p34 = scmp.ne.s32.totalorder %s23, %s26
    %p35 = scmp.eq.s32.totalorder %s18, 1
    %p36 = por %p34, %p35
    %p37 = scmp.ne.s32.totalorder %s26, %s27
    %p38 = scmp.eq.s32.totalorder %s18, 0
    %p39 = por %p37, %p38
    %p40 = scmp.ne.s32.totalorder %s26, %s27
    %p41 = scmp.eq.s32.totalorder %s19, 1
    %p42 = por %p40, %p41
    %p44 = scmp.ne.s32.totalorder %s27, %s43
    %p45 = scmp.eq.s32.totalorder %s19, 0
    %p46 = por %p44, %p45
    %s47 = ssub.s32 %s13, %s20
    %p48 = scmp.eq.s32.totalorder %s47, 0
    %s50 = sadd.s32 %s49, 1
    %s51 = scalar_select %p48, %s49, %s50
    %p54 = pneg %p48
    %p55 = scmp.eq.s32.totalorder %s13, 1
    %p56 = por %p54, %p55
    %p57 = scmp.ne.s32.totalorder %s49, %s52
    %p58 = scmp.eq.s32.totalorder %s13, 0
    %p59 = por %p57, %p58
    %p60 = scmp.ne.s32.totalorder %s49, %s52
    %p61 = scmp.eq.s32.totalorder %s18, 1
    %p62 = por %p60, %p61
    %p63 = scmp.ne.s32.totalorder %s52, %s53
    %p64 = scmp.eq.s32.totalorder %s18, 0
    %p65 = por %p63, %p64
    %p66 = scmp.ne.s32.totalorder %s52, %s53
    %p67 = scmp.eq.s32.totalorder %s19, 1
    %p68 = por %p66, %p67
    %p70 = scmp.ne.s32.totalorder %s53, %s69
    %p71 = scmp.eq.s32.totalorder %s19, 0
    %p72 = por %p70, %p71
    %s74 = sadd.s32 %s73, 1
    %p77 = scmp.eq.s32.totalorder %s13, 1
    %p78 = scmp.ne.s32.totalorder %s73, %s75
    %p79 = scmp.eq.s32.totalorder %s13, 0
    %p80 = por %p78, %p79
    %p81 = scmp.ne.s32.totalorder %s73, %s75
    %p82 = scmp.eq.s32.totalorder %s18, 1
    %p83 = por %p81, %p82
    %p84 = scmp.ne.s32.totalorder %s75, %s76
    %p85 = scmp.eq.s32.totalorder %s18, 0
    %p86 = por %p84, %p85
    %p87 = scmp.ne.s32.totalorder %s75, %s76
    %p88 = scmp.eq.s32.totalorder %s19, 1
    %p89 = por %p87, %p88
    %p91 = scmp.ne.s32.totalorder %s76, %s90
    %p92 = scmp.eq.s32.totalorder %s19, 0
    %p93 = por %p91, %p92
    %s95 = sadd.s32 %s94, 1
    %p98 = scmp.eq.s32.totalorder %s13, 1
    %p99 = scmp.ne.s32.totalorder %s94, %s96
    %p100 = scmp.eq.s32.totalorder %s13, 0
    %p101 = por %p99, %p100
    %p102 = scmp.ne.s32.totalorder %s94, %s96
    %p103 = scmp.eq.s32.totalorder %s18, 1
    %p104 = por %p102, %p103
    %p105 = scmp.ne.s32.totalorder %s96, %s97
    %p106 = scmp.eq.s32.totalorder %s18, 0
    %p107 = por %p105, %p106
    %p108 = scmp.ne.s32.totalorder %s96, %s97
    %p109 = scmp.eq.s32.totalorder %s19, 1
    %p110 = por %p108, %p109
    %p112 = scmp.ne.s32.totalorder %s97, %s111
    %p113 = scmp.eq.s32.totalorder %s19, 0
    %p114 = por %p112, %p113
    %s116 = sadd.s32 %s115, 1
    %p119 = scmp.eq.s32.totalorder %s13, 1
    %p120 = scmp.ne.s32.totalorder %s115, %s117
    %p121 = scmp.eq.s32.totalorder %s13, 0
    %p122 = por %p120, %p121
    %p123 = scmp.ne.s32.totalorder %s115, %s117
    %p124 = scmp.eq.s32.totalorder %s18, 1
    %p125 = por %p123, %p124
    %p126 = scmp.ne.s32.totalorder %s117, %s118
    %p127 = scmp.eq.s32.totalorder %s18, 0
    %p128 = por %p126, %p127
    %p129 = scmp.ne.s32.totalorder %s117, %s118
    %p130 = scmp.eq.s32.totalorder %s19, 1
    %p131 = por %p129, %p130
    %p133 = scmp.ne.s32.totalorder %s118, %s132
    %p134 = scmp.eq.s32.totalorder %s19, 0
    %p135 = por %p133, %p134
    %s137 = sadd.s32 %s136, 1
    %p140 = scmp.eq.s32.totalorder %s13, 1
    %p141 = scmp.ne.s32.totalorder %s136, %s138
    %p142 = scmp.eq.s32.totalorder %s13, 0
    %p143 = por %p141, %p142
    %p144 = scmp.ne.s32.totalorder %s136, %s138
    %p145 = scmp.eq.s32.totalorder %s18, 1
    %p146 = por %p144, %p145
    %p147 = scmp.ne.s32.totalorder %s138, %s139
    %p148 = scmp.eq.s32.totalorder %s18, 0
    %p149 = por %p147, %p148
    %p150 = scmp.ne.s32.totalorder %s138, %s139
    %p151 = scmp.eq.s32.totalorder %s19, 1
    %p152 = por %p150, %p151
    %p154 = scmp.ne.s32.totalorder %s139, %s153
    %p155 = scmp.eq.s32.totalorder %s19, 0
    %p156 = por %p154, %p155
    %s158 = sadd.s32 %s157, 1
    %p161 = scmp.eq.s32.totalorder %s13, 1
    %p162 = scmp.ne.s32.totalorder %s157, %s159
    %p163 = scmp.eq.s32.totalorder %s13, 0
    %p164 = por %p162, %p163
    %p165 = scmp.ne.s32.totalorder %s157, %s159
    %p166 = scmp.eq.s32.totalorder %s18, 1
    %p167 = por %p165, %p166
    %p168 = scmp.ne.s32.totalorder %s159, %s160
    %p169 = scmp.eq.s32.totalorder %s18, 0
    %p170 = por %p168, %p169
    %p171 = scmp.ne.s32.totalorder %s159, %s160
    %p172 = scmp.eq.s32.totalorder %s19, 1
    %p173 = por %p171, %p172
    %p175 = scmp.ne.s32.totalorder %s160, %s174
    %p176 = scmp.eq.s32.totalorder %s19, 0
    %p177 = por %p175, %p176
    %s178 = ssub.s32 %s13, %s20
    %p179 = scmp.eq.s32.totalorder %s178, 0
    %s181 = sadd.s32 %s180, 1
    %s182 = scalar_select %p179, %s180, %s181
    %p185 = pneg %p179
    %p186 = scmp.eq.s32.totalorder %s13, 1
    %p187 = por %p185, %p186
    %p188 = scmp.ne.s32.totalorder %s180, %s183
    %p189 = scmp.eq.s32.totalorder %s13, 0
    %p190 = por %p188, %p189
    %p191 = scmp.ne.s32.totalorder %s180, %s183
    %p192 = scmp.eq.s32.totalorder %s18, 1
    %p193 = por %p191, %p192
    %p194 = scmp.ne.s32.totalorder %s183, %s184
    %p195 = scmp.eq.s32.totalorder %s18, 0
    %p196 = por %p194, %p195
    %p197 = scmp.ne.s32.totalorder %s183, %s184
    %p198 = scmp.eq.s32.totalorder %s19, 1
    %p199 = por %p197, %p198
    %p201 = scmp.ne.s32.totalorder %s184, %s200
    %p202 = scmp.eq.s32.totalorder %s19, 0
    %p203 = por %p201, %p202
    %p204 = scmp.le.s32.totalorder 1, %s13
    %p205 = scmp.lt.s32.totalorder %s13, 3
    %p206 = pnand %p204, %p205
    %p207 = pneg %p206
    // Predicated region
    $region9: #{cnn_forward_pallas.1} parent=5 // pred_check
      _
    $region10: #{cnn_forward_pallas.1} parent=5 // pred_check_branch
      %209 = sbr.rel (%p206) target = $region12
    $region11: #{cnn_forward_pallas.1} parent=5 // pred_region
      %s210 = ssub.s32 %s13, 1
      // Predicated region
      $region13: #{cnn_forward_pallas.1} parent=11 // pred_check
        %p211 = pneg %p86
      $region14: #{cnn_forward_pallas.1} parent=11 // pred_check_branch
        %213 = sbr.rel (%p211) target = $region16
      $region15: #{cnn_forward_pallas.1} parent=11 // pred_region
        _
      $region16: #{cnn_forward_pallas.1} parent=11 // pred_fallthru
        _
      // Predicated region
      $region17: #{cnn_forward_pallas.1} parent=11 // pred_check
        %p214 = pneg %p107
      $region18: #{cnn_forward_pallas.1} parent=11 // pred_check_branch
        %216 = sbr.rel (%p214) target = $region20
      $region19: #{cnn_forward_pallas.1} parent=11 // pred_region
        _
      $region20: #{cnn_forward_pallas.1} parent=11 // pred_fallthru
        _
      // Predicated region
      $region21: #{cnn_forward_pallas.1} parent=11 // pred_check
        %p217 = pneg %p128
      $region22: #{cnn_forward_pallas.1} parent=11 // pred_check_branch
        %219 = sbr.rel (%p217) target = $region24
      $region23: #{cnn_forward_pallas.1} parent=11 // pred_region
        _
      $region24: #{cnn_forward_pallas.1} parent=11 // pred_fallthru
        _
      // Predicated region
      $region25: #{cnn_forward_pallas.1} parent=11 // pred_check
        %p220 = pneg %p149
      $region26: #{cnn_forward_pallas.1} parent=11 // pred_check_branch
        %222 = sbr.rel (%p220) target = $region28
      $region27: #{cnn_forward_pallas.1} parent=11 // pred_region
        _
      $region28: #{cnn_forward_pallas.1} parent=11 // pred_fallthru
        _
      // Predicated region
      $region29: #{cnn_forward_pallas.1} parent=11 // pred_check
        %p223 = pneg %p170
      $region30: #{cnn_forward_pallas.1} parent=11 // pred_check_branch
        %225 = sbr.rel (%p223) target = $region32
      $region31: #{cnn_forward_pallas.1} parent=11 // pred_region
        _
      $region32: #{cnn_forward_pallas.1} parent=11 // pred_fallthru
        _
    $region12: #{cnn_forward_pallas.1} parent=5 // pred_fallthru
      _
    %p226 = scmp.lt.s32.totalorder %s13, 2
    // Predicated region
    $region33: #{cnn_forward_pallas.1} parent=5 // pred_check
      %p227 = pneg %p226
    $region34: #{cnn_forward_pallas.1} parent=5 // pred_check_branch
      %229 = sbr.rel (%p227) target = $region36
    $region35: #{cnn_forward_pallas.1} parent=5 // pred_region
      // Predicated region
      $region37: #{cnn_forward_pallas.1} parent=35 // pred_check
        %p230 = pneg %p33
      $region38: #{cnn_forward_pallas.1} parent=35 // pred_check_branch
        %232 = sbr.rel (%p230) target = $region40
      $region39: #{cnn_forward_pallas.1} parent=35 // pred_region
        %s233 = smul.u32 8, %s13
        %p234 = scmp.lt.s32.totalorder %s233, 15
        %s235 = scalar_select %p234, %s233, 15
        %s236 = smul.addr %s235, 3
        %s237 = smul.addr %s236, 4
        %s238 = scalar_lea.vmem %s0, %s237
        %s239 = smul.u32 8, %s13
      $region40: #{cnn_forward_pallas.1} parent=35 // pred_fallthru
        _
      // Predicated region
      $region41: #{cnn_forward_pallas.1} parent=35 // pred_check
        %p240 = pneg %p59
      $region42: #{cnn_forward_pallas.1} parent=35 // pred_check_branch
        %242 = sbr.rel (%p240) target = $region44
      $region43: #{cnn_forward_pallas.1} parent=35 // pred_region
        %s243 = smul.u32 8, %s13
        %p244 = scmp.lt.s32.totalorder %s243, 15
        %s245 = scalar_select %p244, %s243, 15
        %s246 = smul.addr %s245, 3
        %s247 = smul.addr %s246, 4
        %s248 = scalar_lea.vmem %s1, %s247
        %s249 = smul.u32 8, %s13
      $region44: #{cnn_forward_pallas.1} parent=35 // pred_fallthru
        _
    $region36: #{cnn_forward_pallas.1} parent=5 // pred_fallthru
      _
    %p250 = scmp.le.s32.totalorder 1, %s13
    %p251 = scmp.lt.s32.totalorder %s13, 3
    %p252 = pnand %p250, %p251
    %p253 = pneg %p252
    // Predicated region
    $region45: #{cnn_forward_pallas.1} parent=5 // pred_check
      _
    $region46: #{cnn_forward_pallas.1} parent=5 // pred_check_branch
      %255 = sbr.rel (%p252) target = $region48
    $region47: #{cnn_forward_pallas.1} parent=5 // pred_region
      %s256 = ssub.s32 %s13, 1
      %s257 = smul.u32 8, %s18
      %p258 = scmp.lt.s32.totalorder %s257, 15
      %s259 = scalar_select %p258, %s257, 15
      %s260 = smul.addr %s259, 3
      %s261 = smul.addr %s260, 4
      %s262 = scalar_lea.vmem %s0, %s261
      %p263 = pneg %p39
      %p264 = pneg %p36
      %s265 = smul.u32 8, %s18
      %p266 = scmp.lt.s32.totalorder %s265, 15
      %s267 = scalar_select %p266, %s265, 15
      %s268 = smul.addr %s267, 3
      %s269 = smul.addr %s268, 4
      %s270 = scalar_lea.vmem %s1, %s269
      %p271 = pneg %p65
      %p272 = pneg %p62
      %p273 = pneg %p86
      %p274 = pneg %p83
      %p275 = pneg %p107
      %p276 = pneg %p104
      %p277 = pneg %p128
      %p278 = pneg %p125
      %p279 = pneg %p149
      %p280 = pneg %p146
      %p281 = pneg %p170
      %p282 = pneg %p167
      %p283 = pneg %p196
      %p284 = pneg %p193
      %p285 = scmp.lt.s32.totalorder %s18, 1
      %s286 = scalar_select %p285, %s18, 1
      %s287 = smul.addr %s286, 8
      %s288 = scalar_lea.vmem %s7, %s287
      %s289 = smul.u32 8, %s18
      %p290 = scmp.lt.s32.totalorder %s289, 15
      %s291 = scalar_select %p290, %s289, 15
      %s292 = smul.addr %s291, 3
      %s293 = smul.addr %s292, 4
      %s294 = scalar_lea.vmem %s0, %s293
      %s295 = smul.u32 8, %s18
      %s296 = smul.u32 8, %s18
      %p297 = scmp.lt.s32.totalorder %s296, 15
      %s298 = scalar_select %p297, %s296, 15
      %s299 = smul.addr %s298, 3
      %s300 = smul.addr %s299, 4
      %s301 = scalar_lea.vmem %s1, %s300
      %s302 = smul.u32 8, %s18
      %p303 = scmp.lt.s32.totalorder %s18, 1
      %s304 = scalar_select %p303, %s18, 1
      %s305 = smul.addr %s304, 8
      %s306 = scalar_lea.vmem %s7, %s305
      %v308 = vlaneseq
      %v309 = vshrl.u32 %v308, 7
      %v310 = vadd.s32 %v309, 8
      %v311 = vld [vmem:[%s4] sm:$0x1]
      %v312 = vlaneseq
      %v313 = vshrl.u32 %v312, 7
      %v314 = vsub.s32 0, %v313
      %v315 = vrot.slane %v311, %v314
      %vm316 = vcmp.lt.s32.totalorder %v309, %v315
      %vm317 = vcmp.lt.s32.totalorder %v310, %v315
      %v318 = vld [vmem:[%s294] sm:$0xf]
      %v319 = vld [vmem:[%s294 + $0x4] sm:$0xf]
      %v320 = vld [vmem:[%s294 + $0x8] sm:$0x3]
      %v321 = vld [vmem:[%s294 + $0xc] sm:$0xf]
      %v322 = vld [vmem:[%s294 + $0x10] sm:$0xf]
      %v323 = vld [vmem:[%s294 + $0x14] sm:$0x3]
      %v324 = vld [vmem:[%s294 + $0x18] sm:$0xf]
      %v325 = vld [vmem:[%s294 + $0x1c] sm:$0xf]
      %v326 = vld [vmem:[%s294 + $0x20] sm:$0x3]
      %v327 = vld [vmem:[%s294 + $0x24] sm:$0xf]
      %v328 = vld [vmem:[%s294 + $0x28] sm:$0xf]
      %v329 = vld [vmem:[%s294 + $0x2c] sm:$0x3]
      %v330 = vld [vmem:[%s294 + $0x30] sm:$0xf]
      %v331 = vld [vmem:[%s294 + $0x34] sm:$0xf]
      %v332 = vld [vmem:[%s294 + $0x38] sm:$0x3]
      %v333 = vld [vmem:[%s294 + $0x3c] sm:$0xf]
      %v334 = vld [vmem:[%s294 + $0x40] sm:$0xf]
      %v335 = vld [vmem:[%s294 + $0x44] sm:$0x3]
      %v336 = vld [vmem:[%s294 + $0x48] sm:$0xf]
      %v337 = vld [vmem:[%s294 + $0x4c] sm:$0xf]
      %v338 = vld [vmem:[%s294 + $0x50] sm:$0x3]
      %v339 = vld [vmem:[%s294 + $0x54] sm:$0xf]
      %v340 = vld [vmem:[%s294 + $0x58] sm:$0xf]
      %v341 = vld [vmem:[%s294 + $0x5c] sm:$0x3]
      %v342 = vld [vmem:[%s2] sm:$0xf]
      %v343 = vld [vmem:[%s2 + $0x4] sm:$0xf]
      %v344 = vld [vmem:[%s2 + $0x8] sm:$0xf]
      %v345 = vld [vmem:[%s2 + $0xc] sm:$0xf]
      %v346 = vld [vmem:[%s2 + $0x10] sm:$0xf]
      %v347 = vld [vmem:[%s2 + $0x14] sm:$0xf]
      %v348 = vld [vmem:[%s2 + $0x18] sm:$0xf]
      %v349 = vld [vmem:[%s2 + $0x1c] sm:$0xf]
      %v350 = vld [vmem:[%s2 + $0x20] sm:$0xf]
      %v351 = vld [vmem:[%s2 + $0x24] sm:$0xf]
      %v352 = vld [vmem:[%s2 + $0x28] sm:$0xf]
      %v353 = vld [vmem:[%s2 + $0x2c] sm:$0xf]
      %v354 = vld [vmem:[%s2 + $0x30] sm:$0xf]
      %v355 = vld [vmem:[%s2 + $0x34] sm:$0xf]
      %v356 = vld [vmem:[%s2 + $0x38] sm:$0xf]
      %v357 = vld [vmem:[%s2 + $0x3c] sm:$0xf]
      %vm358 = vsmask.f32 3328
      %vm359 = vsmask.f32 7440
      %vm360 = vmor %vm358, %vm359
      %v362 = vshrl.u32 %v318, 16
      %v364 = vrot.slane %v362, 4
      %v365 = vshll.u32 %v318, 16
      %v367 = vrot.slane %v365, 5
      %v368 = vor.u32 %v364, %v367
      %v369 = vrot.slane %v368, 4
      %v371 = vshll.u32 %v319, 16
      %v373 = vrot.slane %v371, 5
      %v374 = vsel %vm360, %v369, %v373
      %v375 = vshrl.u32 %v319, 16
      %v377 = vrot.slane %v375, 4
      %v378 = vor.u32 %v377, %v373
      %v379 = vrot.slane %v378, 4
      %v381 = vshll.u32 %v320, 16
      %v383 = vrot.slane %v381, 5
      %v384 = vsel %vm360, %v379, %v383
      %v386 = vshrl.u32 %v321, 16
      %v388 = vrot.slane %v386, 4
      %v389 = vshll.u32 %v321, 16
      %v391 = vrot.slane %v389, 5
      %v392 = vor.u32 %v388, %v391
      %v393 = vrot.slane %v392, 4
      %v395 = vshll.u32 %v322, 16
      %v397 = vrot.slane %v395, 5
      %v398 = vsel %vm360, %v393, %v397
      %v399 = vshrl.u32 %v322, 16
      %v401 = vrot.slane %v399, 4
      %v402 = vor.u32 %v401, %v397
      %v403 = vrot.slane %v402, 4
      %v405 = vshll.u32 %v323, 16
      %v407 = vrot.slane %v405, 5
      %v408 = vsel %vm360, %v403, %v407
      %v410 = vshrl.u32 %v324, 16
      %v412 = vrot.slane %v410, 4
      %v413 = vshll.u32 %v324, 16
      %v415 = vrot.slane %v413, 5
      %v416 = vor.u32 %v412, %v415
      %v417 = vrot.slane %v416, 4
      %v419 = vshll.u32 %v325, 16
      %v421 = vrot.slane %v419, 5
      %v422 = vsel %vm360, %v417, %v421
      %v423 = vshrl.u32 %v325, 16
      %v425 = vrot.slane %v423, 4
      %v426 = vor.u32 %v425, %v421
      %v427 = vrot.slane %v426, 4
      %v429 = vshll.u32 %v326, 16
      %v431 = vrot.slane %v429, 5
      %v432 = vsel %vm360, %v427, %v431
      %v434 = vshrl.u32 %v327, 16
      %v436 = vrot.slane %v434, 4
      %v437 = vshll.u32 %v327, 16
      %v439 = vrot.slane %v437, 5
      %v440 = vor.u32 %v436, %v439
      %v441 = vrot.slane %v440, 4
      %v443 = vshll.u32 %v328, 16
      %v445 = vrot.slane %v443, 5
      %v446 = vsel %vm360, %v441, %v445
      %v447 = vshrl.u32 %v328, 16
      %v449 = vrot.slane %v447, 4
      %v450 = vor.u32 %v449, %v445
      %v451 = vrot.slane %v450, 4
      %v453 = vshll.u32 %v329, 16
      %v455 = vrot.slane %v453, 5
      %v456 = vsel %vm360, %v451, %v455
      %v458 = vshrl.u32 %v330, 16
      %v460 = vrot.slane %v458, 4
      %v461 = vshll.u32 %v330, 16
      %v463 = vrot.slane %v461, 5
      %v464 = vor.u32 %v460, %v463
      %v465 = vrot.slane %v464, 4
      %v467 = vshll.u32 %v331, 16
      %v469 = vrot.slane %v467, 5
      %v470 = vsel %vm360, %v465, %v469
      %v471 = vshrl.u32 %v331, 16
      %v473 = vrot.slane %v471, 4
      %v474 = vor.u32 %v473, %v469
      %v475 = vrot.slane %v474, 4
      %v477 = vshll.u32 %v332, 16
      %v479 = vrot.slane %v477, 5
      %v480 = vsel %vm360, %v475, %v479
      %v482 = vshrl.u32 %v333, 16
      %v484 = vrot.slane %v482, 4
      %v485 = vshll.u32 %v333, 16
      %v487 = vrot.slane %v485, 5
      %v488 = vor.u32 %v484, %v487
      %v489 = vrot.slane %v488, 4
      %v491 = vshll.u32 %v334, 16
      %v493 = vrot.slane %v491, 5
      %v494 = vsel %vm360, %v489, %v493
      %v495 = vshrl.u32 %v334, 16
      %v497 = vrot.slane %v495, 4
      %v498 = vor.u32 %v497, %v493
      %v499 = vrot.slane %v498, 4
      %v501 = vshll.u32 %v335, 16
      %v503 = vrot.slane %v501, 5
      %v504 = vsel %vm360, %v499, %v503
      %v506 = vshrl.u32 %v336, 16
      %v508 = vrot.slane %v506, 4
      %v509 = vshll.u32 %v336, 16
      %v511 = vrot.slane %v509, 5
      %v512 = vor.u32 %v508, %v511
      %v513 = vrot.slane %v512, 4
      %v515 = vshll.u32 %v337, 16
      %v517 = vrot.slane %v515, 5
      %v518 = vsel %vm360, %v513, %v517
      %v519 = vshrl.u32 %v337, 16
      %v521 = vrot.slane %v519, 4
      %v522 = vor.u32 %v521, %v517
      %v523 = vrot.slane %v522, 4
      %v525 = vshll.u32 %v338, 16
      %v527 = vrot.slane %v525, 5
      %v528 = vsel %vm360, %v523, %v527
      %v530 = vshrl.u32 %v339, 16
      %v532 = vrot.slane %v530, 4
      %v533 = vshll.u32 %v339, 16
      %v535 = vrot.slane %v533, 5
      %v536 = vor.u32 %v532, %v535
      %v537 = vrot.slane %v536, 4
      %v539 = vshll.u32 %v340, 16
      %v541 = vrot.slane %v539, 5
      %v542 = vsel %vm360, %v537, %v541
      %v543 = vshrl.u32 %v340, 16
      %v545 = vrot.slane %v543, 4
      %v546 = vor.u32 %v545, %v541
      %v547 = vrot.slane %v546, 4
      %v549 = vshll.u32 %v341, 16
      %v551 = vrot.slane %v549, 5
      %v552 = vsel %vm360, %v547, %v551
      %s553 = scalar_lea.vmem %s2, 64
      %v554 = vld [vmem:[%s553] sm:$0xf]
      %v555 = vld [vmem:[%s553 + $0x4] sm:$0xf]
      %v556 = vld [vmem:[%s553 + $0x8] sm:$0xf]
      %v557 = vld [vmem:[%s553 + $0xc] sm:$0xf]
      %v558 = vld [vmem:[%s553 + $0x10] sm:$0xf]
      %v559 = vld [vmem:[%s553 + $0x14] sm:$0xf]
      %v560 = vld [vmem:[%s553 + $0x18] sm:$0xf]
      %v561 = vld [vmem:[%s553 + $0x1c] sm:$0xf]
      %v562 = vld [vmem:[%s553 + $0x20] sm:$0xf]
      %v563 = vld [vmem:[%s553 + $0x24] sm:$0xf]
      %v564 = vld [vmem:[%s553 + $0x28] sm:$0xf]
      %v565 = vld [vmem:[%s553 + $0x2c] sm:$0xf]
      %v566 = vld [vmem:[%s553 + $0x30] sm:$0xf]
      %v567 = vld [vmem:[%s553 + $0x34] sm:$0xf]
      %v568 = vld [vmem:[%s553 + $0x38] sm:$0xf]
      %v569 = vld [vmem:[%s553 + $0x3c] sm:$0xf]
      %v570 = vunpack.c.l.b16 %v374
      %v571 = vunpack.c.l.b16 %v384
      %v572 = vunpack.c.l.b16 %v398
      %v573 = vunpack.c.l.b16 %v408
      %v574 = vunpack.c.l.b16 %v422
      %v575 = vunpack.c.l.b16 %v432
      %v576 = vunpack.c.l.b16 %v446
      %v577 = vunpack.c.l.b16 %v456
      %v578 = vunpack.c.l.b16 %v470
      %v579 = vunpack.c.l.b16 %v480
      %v580 = vunpack.c.l.b16 %v494
      %v581 = vunpack.c.l.b16 %v504
      %v582 = vunpack.c.l.b16 %v518
      %v583 = vunpack.c.l.b16 %v528
      %v584 = vunpack.c.l.b16 %v542
      %v585 = vunpack.c.l.b16 %v552
      %v586 = vpack.c.b16 %v571, %v570
      %v587 = vpack.c.b16 %v573, %v572
      %v588 = vpack.c.b16 %v575, %v574
      %v589 = vpack.c.b16 %v577, %v576
      %v590 = vpack.c.b16 %v579, %v578
      %v591 = vpack.c.b16 %v581, %v580
      %v592 = vpack.c.b16 %v583, %v582
      %v593 = vpack.c.b16 %v585, %v584
      %v618 = vunpack.c.l.b16 %v554
      %v619 = vunpack.c.l.b16 %v555
      %v620 = vunpack.c.l.b16 %v556
      %v621 = vunpack.c.l.b16 %v557
      %v622 = vunpack.c.l.b16 %v558
      %v623 = vunpack.c.l.b16 %v559
      %v624 = vunpack.c.l.b16 %v560
      %v625 = vunpack.c.l.b16 %v561
      %v626 = vunpack.c.l.b16 %v562
      %v627 = vunpack.c.l.b16 %v563
      %v628 = vunpack.c.l.b16 %v564
      %v629 = vunpack.c.l.b16 %v565
      %v630 = vunpack.c.l.b16 %v566
      %v631 = vunpack.c.l.b16 %v567
      %v632 = vunpack.c.l.b16 %v568
      %v633 = vunpack.c.l.b16 %v569
      %v634 = vpack.c.b16 %v619, %v618
      %v635 = vpack.c.b16 %v621, %v620
      %v636 = vpack.c.b16 %v623, %v622
      %v637 = vpack.c.b16 %v625, %v624
      %v638 = vpack.c.b16 %v627, %v626
      %v639 = vpack.c.b16 %v629, %v628
      %v640 = vpack.c.b16 %v631, %v630
      %v641 = vpack.c.b16 %v633, %v632
      %650 = vmatprep.subr.bf16.mxu0 0
      %651 = vmatpush1.bf16.msra.mxu0 %v641
      %652 = vmatprep.subr.bf16.mxu0 0
      %653 = vmatpush1.bf16.msra.mxu0 %v640
      %654 = vmatprep.subr.bf16.mxu0 0
      %655 = vmatpush1.bf16.msra.mxu0 %v639
      %656 = vmatprep.subr.bf16.mxu0 0
      %657 = vmatpush1.bf16.msra.mxu0 %v638
      %658 = vmatprep.subr.bf16.mxu0 0
      %659 = vmatpush1.bf16.msra.mxu0 %v637
      %660 = vmatprep.subr.bf16.mxu0 0
      %661 = vmatpush1.bf16.msra.mxu0 %v636
      %662 = vmatprep.subr.bf16.mxu0 0
      %663 = vmatpush1.bf16.msra.mxu0 %v635
      %664 = vmatprep.subr.bf16.mxu0 0
      %665 = vmatpush1.bf16.msra.mxu0 %v634
      %666 = vmatprep.subr.bf16.mxu0 0
      %667 = vmatpush2.bf16.msra.mxu0 0
      %668 = vmatprep.subr.bf16.mxu0 0
      %669 = vmatpush2.bf16.msra.mxu0 0
      %670 = vmatprep.subr.bf16.mxu0 0
      %671 = vmatpush2.bf16.msra.mxu0 0
      %672 = vmatprep.subr.bf16.mxu0 0
      %673 = vmatpush2.bf16.msra.mxu0 0
      %674 = vmatprep.subr.bf16.mxu0 0
      %675 = vmatpush2.bf16.msra.mxu0 0
      %676 = vmatprep.subr.bf16.mxu0 0
      %677 = vmatpush2.bf16.msra.mxu0 0
      %678 = vmatprep.subr.bf16.mxu0 0
      %679 = vmatpush2.bf16.msra.mxu0 0
      %680 = vmatprep.subr.bf16.mxu0 0
      %681 = vmatpush2.bf16.msra.mxu0 0
      %682 = vmatprep.mubr.bf16.mxu0 0
      %683 = vmatmul.mubr.bf16.gmra.mxu0 %v586
      %v684 = vpop.f32.mrf.mxu0
      %v685 = vadd.f32 0.0, %v684
      %v686 = vpop.f32.mrf.mxu0
      %v687 = vpop.f32.mrf.mxu0
      %v688 = vadd.f32 0.0, %v687
      %v689 = vpop.f32.mrf.mxu0
      %690 = vmatprep.mubr.bf16.mxu0 0
      %691 = vmatmul.mubr.bf16.gmra.mxu0 %v587
      %v692 = vpop.f32.mrf.mxu0
      %v693 = vadd.f32 0.0, %v692
      %v694 = vpop.f32.mrf.mxu0
      %v695 = vpop.f32.mrf.mxu0
      %v696 = vadd.f32 0.0, %v695
      %v697 = vpop.f32.mrf.mxu0
      %698 = vmatprep.mubr.bf16.mxu0 0
      %699 = vmatmul.mubr.bf16.gmra.mxu0 %v588
      %v700 = vpop.f32.mrf.mxu0
      %v701 = vadd.f32 0.0, %v700
      %v702 = vpop.f32.mrf.mxu0
      %v703 = vpop.f32.mrf.mxu0
      %v704 = vadd.f32 0.0, %v703
      %v705 = vpop.f32.mrf.mxu0
      %706 = vmatprep.mubr.bf16.mxu0 0
      %707 = vmatmul.mubr.bf16.gmra.mxu0 %v589
      %v708 = vpop.f32.mrf.mxu0
      %v709 = vadd.f32 0.0, %v708
      %v710 = vpop.f32.mrf.mxu0
      %v711 = vpop.f32.mrf.mxu0
      %v712 = vadd.f32 0.0, %v711
      %v713 = vpop.f32.mrf.mxu0
      %714 = vmatprep.mubr.bf16.mxu0 0
      %715 = vmatmul.mubr.bf16.gmra.mxu0 %v590
      %v716 = vpop.f32.mrf.mxu0
      %v717 = vadd.f32 0.0, %v716
      %v718 = vpop.f32.mrf.mxu0
      %v719 = vpop.f32.mrf.mxu0
      %v720 = vadd.f32 0.0, %v719
      %v721 = vpop.f32.mrf.mxu0
      %722 = vmatprep.mubr.bf16.mxu0 0
      %723 = vmatmul.mubr.bf16.gmra.mxu0 %v591
      %v724 = vpop.f32.mrf.mxu0
      %v725 = vadd.f32 0.0, %v724
      %v726 = vpop.f32.mrf.mxu0
      %v727 = vpop.f32.mrf.mxu0
      %v728 = vadd.f32 0.0, %v727
      %v729 = vpop.f32.mrf.mxu0
      %730 = vmatprep.mubr.bf16.mxu0 0
      %731 = vmatmul.mubr.bf16.gmra.mxu0 %v592
      %v732 = vpop.f32.mrf.mxu0
      %v733 = vadd.f32 0.0, %v732
      %v734 = vpop.f32.mrf.mxu0
      %v735 = vpop.f32.mrf.mxu0
      %v736 = vadd.f32 0.0, %v735
      %v737 = vpop.f32.mrf.mxu0
      %738 = vmatprep.mubr.bf16.mxu0 0
      %739 = vmatmul.mubr.bf16.gmra.mxu0 %v593
      %v740 = vpop.f32.mrf.mxu0
      %v741 = vadd.f32 0.0, %v740
      %v742 = vpop.f32.mrf.mxu0
      %v743 = vpop.f32.mrf.mxu0
      %v744 = vadd.f32 0.0, %v743
      %v745 = vpop.f32.mrf.mxu0
      %746 = vdwg.mxu0
      %v763 = vunpack.c.l.b16 %v318
      %v764 = vunpack.c.l.b16 %v319
      %v765 = vunpack.c.l.b16 %v321
      %v766 = vunpack.c.l.b16 %v322
      %v767 = vunpack.c.l.b16 %v324
      %v768 = vunpack.c.l.b16 %v325
      %v769 = vunpack.c.l.b16 %v327
      %v770 = vunpack.c.l.b16 %v328
      %v771 = vunpack.c.l.b16 %v330
      %v772 = vunpack.c.l.b16 %v331
      %v773 = vunpack.c.l.b16 %v333
      %v774 = vunpack.c.l.b16 %v334
      %v775 = vunpack.c.l.b16 %v336
      %v776 = vunpack.c.l.b16 %v337
      %v777 = vunpack.c.l.b16 %v339
      %v778 = vunpack.c.l.b16 %v340
      %v779 = vpack.c.b16 %v764, %v763
      %v780 = vpack.c.b16 %v766, %v765
      %v781 = vpack.c.b16 %v768, %v767
      %v782 = vpack.c.b16 %v770, %v769
      %v783 = vpack.c.b16 %v772, %v771
      %v784 = vpack.c.b16 %v774, %v773
      %v785 = vpack.c.b16 %v776, %v775
      %v786 = vpack.c.b16 %v778, %v777
      %v811 = vunpack.c.l.b16 %v342
      %v812 = vunpack.c.l.b16 %v343
      %v813 = vunpack.c.l.b16 %v344
      %v814 = vunpack.c.l.b16 %v345
      %v815 = vunpack.c.l.b16 %v346
      %v816 = vunpack.c.l.b16 %v347
      %v817 = vunpack.c.l.b16 %v348
      %v818 = vunpack.c.l.b16 %v349
      %v819 = vunpack.c.l.b16 %v350
      %v820 = vunpack.c.l.b16 %v351
      %v821 = vunpack.c.l.b16 %v352
      %v822 = vunpack.c.l.b16 %v353
      %v823 = vunpack.c.l.b16 %v354
      %v824 = vunpack.c.l.b16 %v355
      %v825 = vunpack.c.l.b16 %v356
      %v826 = vunpack.c.l.b16 %v357
      %v827 = vpack.c.b16 %v812, %v811
      %v828 = vpack.c.b16 %v814, %v813
      %v829 = vpack.c.b16 %v816, %v815
      %v830 = vpack.c.b16 %v818, %v817
      %v831 = vpack.c.b16 %v820, %v819
      %v832 = vpack.c.b16 %v822, %v821
      %v833 = vpack.c.b16 %v824, %v823
      %v834 = vpack.c.b16 %v826, %v825
      %843 = vmatprep.subr.bf16.mxu0 0
      %844 = vmatpush1.bf16.msra.mxu0 %v834
      %845 = vmatprep.subr.bf16.mxu0 0
      %846 = vmatpush1.bf16.msra.mxu0 %v833
      %847 = vmatprep.subr.bf16.mxu0 0
      %848 = vmatpush1.bf16.msra.mxu0 %v832
      %849 = vmatprep.subr.bf16.mxu0 0
      %850 = vmatpush1.bf16.msra.mxu0 %v831
      %851 = vmatprep.subr.bf16.mxu0 0
      %852 = vmatpush1.bf16.msra.mxu0 %v830
      %853 = vmatprep.subr.bf16.mxu0 0
      %854 = vmatpush1.bf16.msra.mxu0 %v829
      %855 = vmatprep.subr.bf16.mxu0 0
      %856 = vmatpush1.bf16.msra.mxu0 %v828
      %857 = vmatprep.subr.bf16.mxu0 0
      %858 = vmatpush1.bf16.msra.mxu0 %v827
      %859 = vmatprep.subr.bf16.mxu0 0
      %860 = vmatpush2.bf16.msra.mxu0 0
      %861 = vmatprep.subr.bf16.mxu0 0
      %862 = vmatpush2.bf16.msra.mxu0 0
      %863 = vmatprep.subr.bf16.mxu0 0
      %864 = vmatpush2.bf16.msra.mxu0 0
      %865 = vmatprep.subr.bf16.mxu0 0
      %866 = vmatpush2.bf16.msra.mxu0 0
      %867 = vmatprep.subr.bf16.mxu0 0
      %868 = vmatpush2.bf16.msra.mxu0 0
      %869 = vmatprep.subr.bf16.mxu0 0
      %870 = vmatpush2.bf16.msra.mxu0 0
      %871 = vmatprep.subr.bf16.mxu0 0
      %872 = vmatpush2.bf16.msra.mxu0 0
      %873 = vmatprep.subr.bf16.mxu0 0
      %874 = vmatpush2.bf16.msra.mxu0 0
      %875 = vmatprep.mubr.bf16.mxu0 0
      %876 = vmatmul.mubr.bf16.gmra.mxu0 %v779
      %v877 = vpop.f32.mrf.mxu0
      %v878 = vadd.f32 %v685, %v877
      %v879 = vpop.f32.mrf.mxu0
      %v880 = vpop.f32.mrf.mxu0
      %v881 = vadd.f32 %v688, %v880
      %v882 = vpop.f32.mrf.mxu0
      %883 = vmatprep.mubr.bf16.mxu0 0
      %884 = vmatmul.mubr.bf16.gmra.mxu0 %v780
      %v885 = vpop.f32.mrf.mxu0
      %v886 = vadd.f32 %v693, %v885
      %v887 = vpop.f32.mrf.mxu0
      %v888 = vpop.f32.mrf.mxu0
      %v889 = vadd.f32 %v696, %v888
      %v890 = vpop.f32.mrf.mxu0
      %891 = vmatprep.mubr.bf16.mxu0 0
      %892 = vmatmul.mubr.bf16.gmra.mxu0 %v781
      %v893 = vpop.f32.mrf.mxu0
      %v894 = vadd.f32 %v701, %v893
      %v895 = vpop.f32.mrf.mxu0
      %v896 = vpop.f32.mrf.mxu0
      %v897 = vadd.f32 %v704, %v896
      %v898 = vpop.f32.mrf.mxu0
      %899 = vmatprep.mubr.bf16.mxu0 0
      %900 = vmatmul.mubr.bf16.gmra.mxu0 %v782
      %v901 = vpop.f32.mrf.mxu0
      %v902 = vadd.f32 %v709, %v901
      %v903 = vpop.f32.mrf.mxu0
      %v904 = vpop.f32.mrf.mxu0
      %v905 = vadd.f32 %v712, %v904
      %v906 = vpop.f32.mrf.mxu0
      %907 = vmatprep.mubr.bf16.mxu0 0
      %908 = vmatmul.mubr.bf16.gmra.mxu0 %v783
      %v909 = vpop.f32.mrf.mxu0
      %v910 = vadd.f32 %v717, %v909
      %v911 = vpop.f32.mrf.mxu0
      %v912 = vpop.f32.mrf.mxu0
      %v913 = vadd.f32 %v720, %v912
      %v914 = vpop.f32.mrf.mxu0
      %915 = vmatprep.mubr.bf16.mxu0 0
      %916 = vmatmul.mubr.bf16.gmra.mxu0 %v784
      %v917 = vpop.f32.mrf.mxu0
      %v918 = vadd.f32 %v725, %v917
      %v919 = vpop.f32.mrf.mxu0
      %v920 = vpop.f32.mrf.mxu0
      %v921 = vadd.f32 %v728, %v920
      %v922 = vpop.f32.mrf.mxu0
      %923 = vmatprep.mubr.bf16.mxu0 0
      %924 = vmatmul.mubr.bf16.gmra.mxu0 %v785
      %v925 = vpop.f32.mrf.mxu0
      %v926 = vadd.f32 %v733, %v925
      %v927 = vpop.f32.mrf.mxu0
      %v928 = vpop.f32.mrf.mxu0
      %v929 = vadd.f32 %v736, %v928
      %v930 = vpop.f32.mrf.mxu0
      %931 = vmatprep.mubr.bf16.mxu0 0
      %932 = vmatmul.mubr.bf16.gmra.mxu0 %v786
      %v933 = vpop.f32.mrf.mxu0
      %v934 = vadd.f32 %v741, %v933
      %v935 = vpop.f32.mrf.mxu0
      %v936 = vpop.f32.mrf.mxu0
      %v937 = vadd.f32 %v744, %v936
      %v938 = vpop.f32.mrf.mxu0
      %939 = vdwg.mxu0
      %vm948 = vcmask 1042432
      %vm949 = vcmask 1046532
      %vm950 = vmor %vm948, %vm949
      %v951 = vrot.slane %v318, 5
      %v952 = vrot.slane %v951, 4
      %v953 = vrot.slane %v319, 5
      %v954 = vsel %vm950, %v952, %v953
      %v955 = vrot.slane %v953, 4
      %v956 = vrot.slane %v320, 5
      %v957 = vsel %vm950, %v955, %v956
      %v958 = vrot.slane %v321, 5
      %v959 = vrot.slane %v958, 4
      %v960 = vrot.slane %v322, 5
      %v961 = vsel %vm950, %v959, %v960
      %v962 = vrot.slane %v960, 4
      %v963 = vrot.slane %v323, 5
      %v964 = vsel %vm950, %v962, %v963
      %v965 = vrot.slane %v324, 5
      %v966 = vrot.slane %v965, 4
      %v967 = vrot.slane %v325, 5
      %v968 = vsel %vm950, %v966, %v967
      %v969 = vrot.slane %v967, 4
      %v970 = vrot.slane %v326, 5
      %v971 = vsel %vm950, %v969, %v970
      %v972 = vrot.slane %v327, 5
      %v973 = vrot.slane %v972, 4
      %v974 = vrot.slane %v328, 5
      %v975 = vsel %vm950, %v973, %v974
      %v976 = vrot.slane %v974, 4
      %v977 = vrot.slane %v329, 5
      %v978 = vsel %vm950, %v976, %v977
      %v979 = vrot.slane %v330, 5
      %v980 = vrot.slane %v979, 4
      %v981 = vrot.slane %v331, 5
      %v982 = vsel %vm950, %v980, %v981
      %v983 = vrot.slane %v981, 4
      %v984 = vrot.slane %v332, 5
      %v985 = vsel %vm950, %v983, %v984
      %v986 = vrot.slane %v333, 5
      %v987 = vrot.slane %v986, 4
      %v988 = vrot.slane %v334, 5
      %v989 = vsel %vm950, %v987, %v988
      %v990 = vrot.slane %v988, 4
      %v991 = vrot.slane %v335, 5
      %v992 = vsel %vm950, %v990, %v991
      %v993 = vrot.slane %v336, 5
      %v994 = vrot.slane %v993, 4
      %v995 = vrot.slane %v337, 5
      %v996 = vsel %vm950, %v994, %v995
      %v997 = vrot.slane %v995, 4
      %v998 = vrot.slane %v338, 5
      %v999 = vsel %vm950, %v997, %v998
      %v1000 = vrot.slane %v339, 5
      %v1001 = vrot.slane %v1000, 4
      %v1002 = vrot.slane %v340, 5
      %v1003 = vsel %vm950, %v1001, %v1002
      %v1004 = vrot.slane %v1002, 4
      %v1005 = vrot.slane %v341, 5
      %v1006 = vsel %vm950, %v1004, %v1005
      %s1007 = scalar_lea.vmem %s2, 128
      %v1008 = vld [vmem:[%s1007] sm:$0xf]
      %v1009 = vld [vmem:[%s1007 + $0x4] sm:$0xf]
      %v1010 = vld [vmem:[%s1007 + $0x8] sm:$0xf]
      %v1011 = vld [vmem:[%s1007 + $0xc] sm:$0xf]
      %v1012 = vld [vmem:[%s1007 + $0x10] sm:$0xf]
      %v1013 = vld [vmem:[%s1007 + $0x14] sm:$0xf]
      %v1014 = vld [vmem:[%s1007 + $0x18] sm:$0xf]
      %v1015 = vld [vmem:[%s1007 + $0x1c] sm:$0xf]
      %v1016 = vld [vmem:[%s1007 + $0x20] sm:$0xf]
      %v1017 = vld [vmem:[%s1007 + $0x24] sm:$0xf]
      %v1018 = vld [vmem:[%s1007 + $0x28] sm:$0xf]
      %v1019 = vld [vmem:[%s1007 + $0x2c] sm:$0xf]
      %v1020 = vld [vmem:[%s1007 + $0x30] sm:$0xf]
      %v1021 = vld [vmem:[%s1007 + $0x34] sm:$0xf]
      %v1022 = vld [vmem:[%s1007 + $0x38] sm:$0xf]
      %v1023 = vld [vmem:[%s1007 + $0x3c] sm:$0xf]
      %v1024 = vunpack.c.l.b16 %v954
      %v1025 = vunpack.c.l.b16 %v957
      %v1026 = vunpack.c.l.b16 %v961
      %v1027 = vunpack.c.l.b16 %v964
      %v1028 = vunpack.c.l.b16 %v968
      %v1029 = vunpack.c.l.b16 %v971
      %v1030 = vunpack.c.l.b16 %v975
      %v1031 = vunpack.c.l.b16 %v978
      %v1032 = vunpack.c.l.b16 %v982
      %v1033 = vunpack.c.l.b16 %v985
      %v1034 = vunpack.c.l.b16 %v989
      %v1035 = vunpack.c.l.b16 %v992
      %v1036 = vunpack.c.l.b16 %v996
      %v1037 = vunpack.c.l.b16 %v999
      %v1038 = vunpack.c.l.b16 %v1003
      %v1039 = vunpack.c.l.b16 %v1006
      %v1040 = vpack.c.b16 %v1025, %v1024
      %v1041 = vpack.c.b16 %v1027, %v1026
      %v1042 = vpack.c.b16 %v1029, %v1028
      %v1043 = vpack.c.b16 %v1031, %v1030
      %v1044 = vpack.c.b16 %v1033, %v1032
      %v1045 = vpack.c.b16 %v1035, %v1034
      %v1046 = vpack.c.b16 %v1037, %v1036
      %v1047 = vpack.c.b16 %v1039, %v1038
      %v1072 = vunpack.c.l.b16 %v1008
      %v1073 = vunpack.c.l.b16 %v1009
      %v1074 = vunpack.c.l.b16 %v1010
      %v1075 = vunpack.c.l.b16 %v1011
      %v1076 = vunpack.c.l.b16 %v1012
      %v1077 = vunpack.c.l.b16 %v1013
      %v1078 = vunpack.c.l.b16 %v1014
      %v1079 = vunpack.c.l.b16 %v1015
      %v1080 = vunpack.c.l.b16 %v1016
      %v1081 = vunpack.c.l.b16 %v1017
      %v1082 = vunpack.c.l.b16 %v1018
      %v1083 = vunpack.c.l.b16 %v1019
      %v1084 = vunpack.c.l.b16 %v1020
      %v1085 = vunpack.c.l.b16 %v1021
      %v1086 = vunpack.c.l.b16 %v1022
      %v1087 = vunpack.c.l.b16 %v1023
      %v1088 = vpack.c.b16 %v1073, %v1072
      %v1089 = vpack.c.b16 %v1075, %v1074
      %v1090 = vpack.c.b16 %v1077, %v1076
      %v1091 = vpack.c.b16 %v1079, %v1078
      %v1092 = vpack.c.b16 %v1081, %v1080
      %v1093 = vpack.c.b16 %v1083, %v1082
      %v1094 = vpack.c.b16 %v1085, %v1084
      %v1095 = vpack.c.b16 %v1087, %v1086
      %1104 = vmatprep.subr.bf16.mxu0 0
      %1105 = vmatpush1.bf16.msra.mxu0 %v1095
      %1106 = vmatprep.subr.bf16.mxu0 0
      %1107 = vmatpush1.bf16.msra.mxu0 %v1094
      %1108 = vmatprep.subr.bf16.mxu0 0
      %1109 = vmatpush1.bf16.msra.mxu0 %v1093
      %1110 = vmatprep.subr.bf16.mxu0 0
      %1111 = vmatpush1.bf16.msra.mxu0 %v1092
      %1112 = vmatprep.subr.bf16.mxu0 0
      %1113 = vmatpush1.bf16.msra.mxu0 %v1091
      %1114 = vmatprep.subr.bf16.mxu0 0
      %1115 = vmatpush1.bf16.msra.mxu0 %v1090
      %1116 = vmatprep.subr.bf16.mxu0 0
      %1117 = vmatpush1.bf16.msra.mxu0 %v1089
      %1118 = vmatprep.subr.bf16.mxu0 0
      %1119 = vmatpush1.bf16.msra.mxu0 %v1088
      %1120 = vmatprep.subr.bf16.mxu0 0
      %1121 = vmatpush2.bf16.msra.mxu0 0
      %1122 = vmatprep.subr.bf16.mxu0 0
      %1123 = vmatpush2.bf16.msra.mxu0 0
      %1124 = vmatprep.subr.bf16.mxu0 0
      %1125 = vmatpush2.bf16.msra.mxu0 0
      %1126 = vmatprep.subr.bf16.mxu0 0
      %1127 = vmatpush2.bf16.msra.mxu0 0
      %1128 = vmatprep.subr.bf16.mxu0 0
      %1129 = vmatpush2.bf16.msra.mxu0 0
      %1130 = vmatprep.subr.bf16.mxu0 0
      %1131 = vmatpush2.bf16.msra.mxu0 0
      %1132 = vmatprep.subr.bf16.mxu0 0
      %1133 = vmatpush2.bf16.msra.mxu0 0
      %1134 = vmatprep.subr.bf16.mxu0 0
      %1135 = vmatpush2.bf16.msra.mxu0 0
      %1136 = vmatprep.mubr.bf16.mxu0 0
      %1137 = vmatmul.mubr.bf16.gmra.mxu0 %v1040
      %v1138 = vpop.f32.mrf.mxu0
      %v1139 = vadd.f32 0.0, %v1138
      %v1140 = vpop.f32.mrf.mxu0
      %v1141 = vpop.f32.mrf.mxu0
      %v1142 = vadd.f32 0.0, %v1141
      %v1143 = vpop.f32.mrf.mxu0
      %1144 = vmatprep.mubr.bf16.mxu0 0
      %1145 = vmatmul.mubr.bf16.gmra.mxu0 %v1041
      %v1146 = vpop.f32.mrf.mxu0
      %v1147 = vadd.f32 0.0, %v1146
      %v1148 = vpop.f32.mrf.mxu0
      %v1149 = vpop.f32.mrf.mxu0
      %v1150 = vadd.f32 0.0, %v1149
      %v1151 = vpop.f32.mrf.mxu0
      %1152 = vmatprep.mubr.bf16.mxu0 0
      %1153 = vmatmul.mubr.bf16.gmra.mxu0 %v1042
      %v1154 = vpop.f32.mrf.mxu0
      %v1155 = vadd.f32 0.0, %v1154
      %v1156 = vpop.f32.mrf.mxu0
      %v1157 = vpop.f32.mrf.mxu0
      %v1158 = vadd.f32 0.0, %v1157
      %v1159 = vpop.f32.mrf.mxu0
      %1160 = vmatprep.mubr.bf16.mxu0 0
      %1161 = vmatmul.mubr.bf16.gmra.mxu0 %v1043
      %v1162 = vpop.f32.mrf.mxu0
      %v1163 = vadd.f32 0.0, %v1162
      %v1164 = vpop.f32.mrf.mxu0
      %v1165 = vpop.f32.mrf.mxu0
      %v1166 = vadd.f32 0.0, %v1165
      %v1167 = vpop.f32.mrf.mxu0
      %1168 = vmatprep.mubr.bf16.mxu0 0
      %1169 = vmatmul.mubr.bf16.gmra.mxu0 %v1044
      %v1170 = vpop.f32.mrf.mxu0
      %v1171 = vadd.f32 0.0, %v1170
      %v1172 = vpop.f32.mrf.mxu0
      %v1173 = vpop.f32.mrf.mxu0
      %v1174 = vadd.f32 0.0, %v1173
      %v1175 = vpop.f32.mrf.mxu0
      %1176 = vmatprep.mubr.bf16.mxu0 0
      %1177 = vmatmul.mubr.bf16.gmra.mxu0 %v1045
      %v1178 = vpop.f32.mrf.mxu0
      %v1179 = vadd.f32 0.0, %v1178
      %v1180 = vpop.f32.mrf.mxu0
      %v1181 = vpop.f32.mrf.mxu0
      %v1182 = vadd.f32 0.0, %v1181
      %v1183 = vpop.f32.mrf.mxu0
      %1184 = vmatprep.mubr.bf16.mxu0 0
      %1185 = vmatmul.mubr.bf16.gmra.mxu0 %v1046
      %v1186 = vpop.f32.mrf.mxu0
      %v1187 = vadd.f32 0.0, %v1186
      %v1188 = vpop.f32.mrf.mxu0
      %v1189 = vpop.f32.mrf.mxu0
      %v1190 = vadd.f32 0.0, %v1189
      %v1191 = vpop.f32.mrf.mxu0
      %1192 = vmatprep.mubr.bf16.mxu0 0
      %1193 = vmatmul.mubr.bf16.gmra.mxu0 %v1047
      %v1194 = vpop.f32.mrf.mxu0
      %v1195 = vadd.f32 0.0, %v1194
      %v1196 = vpop.f32.mrf.mxu0
      %v1197 = vpop.f32.mrf.mxu0
      %v1198 = vadd.f32 0.0, %v1197
      %v1199 = vpop.f32.mrf.mxu0
      %1200 = vdwg.mxu0
      %v1201 = vadd.f32 %v878, %v1139
      %v1202 = vadd.f32 %v881, %v1142
      %v1203 = vadd.f32 %v886, %v1147
      %v1204 = vadd.f32 %v889, %v1150
      %v1205 = vadd.f32 %v894, %v1155
      %v1206 = vadd.f32 %v897, %v1158
      %v1207 = vadd.f32 %v902, %v1163
      %v1208 = vadd.f32 %v905, %v1166
      %v1209 = vadd.f32 %v910, %v1171
      %v1210 = vadd.f32 %v913, %v1174
      %v1211 = vadd.f32 %v918, %v1179
      %v1212 = vadd.f32 %v921, %v1182
      %v1213 = vadd.f32 %v926, %v1187
      %v1214 = vadd.f32 %v929, %v1190
      %v1215 = vadd.f32 %v934, %v1195
      %v1216 = vadd.f32 %v937, %v1198
      %vm1217 = vsmask.f32 2304
      %vm1218 = vsmask.f32 6416
      %vm1219 = vmor %vm1217, %vm1218
      %v1220 = vrot.slane %v362, 5
      %v1221 = vrot.slane %v365, 6
      %v1222 = vor.u32 %v1220, %v1221
      %v1223 = vrot.slane %v1222, 4
      %v1224 = vrot.slane %v375, 5
      %v1225 = vrot.slane %v371, 6
      %v1226 = vor.u32 %v1224, %v1225
      %v1227 = vsel %vm1219, %v1223, %v1226
      %v1228 = vrot.slane %v1226, 4
      %v1229 = vshrl.u32 %v320, 16
      %v1231 = vrot.slane %v1229, 5
      %v1232 = vrot.slane %v381, 6
      %v1233 = vor.u32 %v1231, %v1232
      %v1234 = vsel %vm1219, %v1228, %v1233
      %v1235 = vrot.slane %v386, 5
      %v1236 = vrot.slane %v389, 6
      %v1237 = vor.u32 %v1235, %v1236
      %v1238 = vrot.slane %v1237, 4
      %v1239 = vrot.slane %v399, 5
      %v1240 = vrot.slane %v395, 6
      %v1241 = vor.u32 %v1239, %v1240
      %v1242 = vsel %vm1219, %v1238, %v1241
      %v1243 = vrot.slane %v1241, 4
      %v1244 = vshrl.u32 %v323, 16
      %v1246 = vrot.slane %v1244, 5
      %v1247 = vrot.slane %v405, 6
      %v1248 = vor.u32 %v1246, %v1247
      %v1249 = vsel %vm1219, %v1243, %v1248
      %v1250 = vrot.slane %v410, 5
      %v1251 = vrot.slane %v413, 6
      %v1252 = vor.u32 %v1250, %v1251
      %v1253 = vrot.slane %v1252, 4
      %v1254 = vrot.slane %v423, 5
      %v1255 = vrot.slane %v419, 6
      %v1256 = vor.u32 %v1254, %v1255
      %v1257 = vsel %vm1219, %v1253, %v1256
      %v1258 = vrot.slane %v1256, 4
      %v1259 = vshrl.u32 %v326, 16
      %v1261 = vrot.slane %v1259, 5
      %v1262 = vrot.slane %v429, 6
      %v1263 = vor.u32 %v1261, %v1262
      %v1264 = vsel %vm1219, %v1258, %v1263
      %v1265 = vrot.slane %v434, 5
      %v1266 = vrot.slane %v437, 6
      %v1267 = vor.u32 %v1265, %v1266
      %v1268 = vrot.slane %v1267, 4
      %v1269 = vrot.slane %v447, 5
      %v1270 = vrot.slane %v443, 6
      %v1271 = vor.u32 %v1269, %v1270
      %v1272 = vsel %vm1219, %v1268, %v1271
      %v1273 = vrot.slane %v1271, 4
      %v1274 = vshrl.u32 %v329, 16
      %v1276 = vrot.slane %v1274, 5
      %v1277 = vrot.slane %v453, 6
      %v1278 = vor.u32 %v1276, %v1277
      %v1279 = vsel %vm1219, %v1273, %v1278
      %v1280 = vrot.slane %v458, 5
      %v1281 = vrot.slane %v461, 6
      %v1282 = vor.u32 %v1280, %v1281
      %v1283 = vrot.slane %v1282, 4
      %v1284 = vrot.slane %v471, 5
      %v1285 = vrot.slane %v467, 6
      %v1286 = vor.u32 %v1284, %v1285
      %v1287 = vsel %vm1219, %v1283, %v1286
      %v1288 = vrot.slane %v1286, 4
      %v1289 = vshrl.u32 %v332, 16
      %v1291 = vrot.slane %v1289, 5
      %v1292 = vrot.slane %v477, 6
      %v1293 = vor.u32 %v1291, %v1292
      %v1294 = vsel %vm1219, %v1288, %v1293
      %v1295 = vrot.slane %v482, 5
      %v1296 = vrot.slane %v485, 6
      %v1297 = vor.u32 %v1295, %v1296
      %v1298 = vrot.slane %v1297, 4
      %v1299 = vrot.slane %v495, 5
      %v1300 = vrot.slane %v491, 6
      %v1301 = vor.u32 %v1299, %v1300
      %v1302 = vsel %vm1219, %v1298, %v1301
      %v1303 = vrot.slane %v1301, 4
      %v1304 = vshrl.u32 %v335, 16
      %v1306 = vrot.slane %v1304, 5
      %v1307 = vrot.slane %v501, 6
      %v1308 = vor.u32 %v1306, %v1307
      %v1309 = vsel %vm1219, %v1303, %v1308
      %v1310 = vrot.slane %v506, 5
      %v1311 = vrot.slane %v509, 6
      %v1312 = vor.u32 %v1310, %v1311
      %v1313 = vrot.slane %v1312, 4
      %v1314 = vrot.slane %v519, 5
      %v1315 = vrot.slane %v515, 6
      %v1316 = vor.u32 %v1314, %v1315
      %v1317 = vsel %vm1219, %v1313, %v1316
      %v1318 = vrot.slane %v1316, 4
      %v1319 = vshrl.u32 %v338, 16
      %v1321 = vrot.slane %v1319, 5
      %v1322 = vrot.slane %v525, 6
      %v1323 = vor.u32 %v1321, %v1322
      %v1324 = vsel %vm1219, %v1318, %v1323
      %v1325 = vrot.slane %v530, 5
      %v1326 = vrot.slane %v533, 6
      %v1327 = vor.u32 %v1325, %v1326
      %v1328 = vrot.slane %v1327, 4
      %v1329 = vrot.slane %v543, 5
      %v1330 = vrot.slane %v539, 6
      %v1331 = vor.u32 %v1329, %v1330
      %v1332 = vsel %vm1219, %v1328, %v1331
      %v1333 = vrot.slane %v1331, 4
      %v1334 = vshrl.u32 %v341, 16
      %v1336 = vrot.slane %v1334, 5
      %v1337 = vrot.slane %v549, 6
      %v1338 = vor.u32 %v1336, %v1337
      %v1339 = vsel %vm1219, %v1333, %v1338
      %s1340 = scalar_lea.vmem %s2, 192
      %v1341 = vld [vmem:[%s1340] sm:$0xf]
      %v1342 = vld [vmem:[%s1340 + $0x4] sm:$0xf]
      %v1343 = vld [vmem:[%s1340 + $0x8] sm:$0xf]
      %v1344 = vld [vmem:[%s1340 + $0xc] sm:$0xf]
      %v1345 = vld [vmem:[%s1340 + $0x10] sm:$0xf]
      %v1346 = vld [vmem:[%s1340 + $0x14] sm:$0xf]
      %v1347 = vld [vmem:[%s1340 + $0x18] sm:$0xf]
      %v1348 = vld [vmem:[%s1340 + $0x1c] sm:$0xf]
      %v1349 = vld [vmem:[%s1340 + $0x20] sm:$0xf]
      %v1350 = vld [vmem:[%s1340 + $0x24] sm:$0xf]
      %v1351 = vld [vmem:[%s1340 + $0x28] sm:$0xf]
      %v1352 = vld [vmem:[%s1340 + $0x2c] sm:$0xf]
      %v1353 = vld [vmem:[%s1340 + $0x30] sm:$0xf]
      %v1354 = vld [vmem:[%s1340 + $0x34] sm:$0xf]
      %v1355 = vld [vmem:[%s1340 + $0x38] sm:$0xf]
      %v1356 = vld [vmem:[%s1340 + $0x3c] sm:$0xf]
      %v1357 = vunpack.c.l.b16 %v1227
      %v1358 = vunpack.c.l.b16 %v1234
      %v1359 = vunpack.c.l.b16 %v1242
      %v1360 = vunpack.c.l.b16 %v1249
      %v1361 = vunpack.c.l.b16 %v1257
      %v1362 = vunpack.c.l.b16 %v1264
      %v1363 = vunpack.c.l.b16 %v1272
      %v1364 = vunpack.c.l.b16 %v1279
      %v1365 = vunpack.c.l.b16 %v1287
      %v1366 = vunpack.c.l.b16 %v1294
      %v1367 = vunpack.c.l.b16 %v1302
      %v1368 = vunpack.c.l.b16 %v1309
      %v1369 = vunpack.c.l.b16 %v1317
      %v1370 = vunpack.c.l.b16 %v1324
      %v1371 = vunpack.c.l.b16 %v1332
      %v1372 = vunpack.c.l.b16 %v1339
      %v1373 = vpack.c.b16 %v1358, %v1357
      %v1374 = vpack.c.b16 %v1360, %v1359
      %v1375 = vpack.c.b16 %v1362, %v1361
      %v1376 = vpack.c.b16 %v1364, %v1363
      %v1377 = vpack.c.b16 %v1366, %v1365
      %v1378 = vpack.c.b16 %v1368, %v1367
      %v1379 = vpack.c.b16 %v1370, %v1369
      %v1380 = vpack.c.b16 %v1372, %v1371
      %v1405 = vunpack.c.l.b16 %v1341
      %v1406 = vunpack.c.l.b16 %v1342
      %v1407 = vunpack.c.l.b16 %v1343
      %v1408 = vunpack.c.l.b16 %v1344
      %v1409 = vunpack.c.l.b16 %v1345
      %v1410 = vunpack.c.l.b16 %v1346
      %v1411 = vunpack.c.l.b16 %v1347
      %v1412 = vunpack.c.l.b16 %v1348
      %v1413 = vunpack.c.l.b16 %v1349
      %v1414 = vunpack.c.l.b16 %v1350
      %v1415 = vunpack.c.l.b16 %v1351
      %v1416 = vunpack.c.l.b16 %v1352
      %v1417 = vunpack.c.l.b16 %v1353
      %v1418 = vunpack.c.l.b16 %v1354
      %v1419 = vunpack.c.l.b16 %v1355
      %v1420 = vunpack.c.l.b16 %v1356
      %v1421 = vpack.c.b16 %v1406, %v1405
      %v1422 = vpack.c.b16 %v1408, %v1407
      %v1423 = vpack.c.b16 %v1410, %v1409
      %v1424 = vpack.c.b16 %v1412, %v1411
      %v1425 = vpack.c.b16 %v1414, %v1413
      %v1426 = vpack.c.b16 %v1416, %v1415
      %v1427 = vpack.c.b16 %v1418, %v1417
      %v1428 = vpack.c.b16 %v1420, %v1419
      %1437 = vmatprep.subr.bf16.mxu0 0
      %1438 = vmatpush1.bf16.msra.mxu0 %v1428
      %1439 = vmatprep.subr.bf16.mxu0 0
      %1440 = vmatpush1.bf16.msra.mxu0 %v1427
      %1441 = vmatprep.subr.bf16.mxu0 0
      %1442 = vmatpush1.bf16.msra.mxu0 %v1426
      %1443 = vmatprep.subr.bf16.mxu0 0
      %1444 = vmatpush1.bf16.msra.mxu0 %v1425
      %1445 = vmatprep.subr.bf16.mxu0 0
      %1446 = vmatpush1.bf16.msra.mxu0 %v1424
      %1447 = vmatprep.subr.bf16.mxu0 0
      %1448 = vmatpush1.bf16.msra.mxu0 %v1423
      %1449 = vmatprep.subr.bf16.mxu0 0
      %1450 = vmatpush1.bf16.msra.mxu0 %v1422
      %1451 = vmatprep.subr.bf16.mxu0 0
      %1452 = vmatpush1.bf16.msra.mxu0 %v1421
      %1453 = vmatprep.subr.bf16.mxu0 0
      %1454 = vmatpush2.bf16.msra.mxu0 0
      %1455 = vmatprep.subr.bf16.mxu0 0
      %1456 = vmatpush2.bf16.msra.mxu0 0
      %1457 = vmatprep.subr.bf16.mxu0 0
      %1458 = vmatpush2.bf16.msra.mxu0 0
      %1459 = vmatprep.subr.bf16.mxu0 0
      %1460 = vmatpush2.bf16.msra.mxu0 0
      %1461 = vmatprep.subr.bf16.mxu0 0
      %1462 = vmatpush2.bf16.msra.mxu0 0
      %1463 = vmatprep.subr.bf16.mxu0 0
      %1464 = vmatpush2.bf16.msra.mxu0 0
      %1465 = vmatprep.subr.bf16.mxu0 0
      %1466 = vmatpush2.bf16.msra.mxu0 0
      %1467 = vmatprep.subr.bf16.mxu0 0
      %1468 = vmatpush2.bf16.msra.mxu0 0
      %1469 = vmatprep.mubr.bf16.mxu0 0
      %1470 = vmatmul.mubr.bf16.gmra.mxu0 %v1373
      %v1471 = vpop.f32.mrf.mxu0
      %v1472 = vadd.f32 0.0, %v1471
      %v1473 = vpop.f32.mrf.mxu0
      %v1474 = vpop.f32.mrf.mxu0
      %v1475 = vadd.f32 0.0, %v1474
      %v1476 = vpop.f32.mrf.mxu0
      %1477 = vmatprep.mubr.bf16.mxu0 0
      %1478 = vmatmul.mubr.bf16.gmra.mxu0 %v1374
      %v1479 = vpop.f32.mrf.mxu0
      %v1480 = vadd.f32 0.0, %v1479
      %v1481 = vpop.f32.mrf.mxu0
      %v1482 = vpop.f32.mrf.mxu0
      %v1483 = vadd.f32 0.0, %v1482
      %v1484 = vpop.f32.mrf.mxu0
      %1485 = vmatprep.mubr.bf16.mxu0 0
      %1486 = vmatmul.mubr.bf16.gmra.mxu0 %v1375
      %v1487 = vpop.f32.mrf.mxu0
      %v1488 = vadd.f32 0.0, %v1487
      %v1489 = vpop.f32.mrf.mxu0
      %v1490 = vpop.f32.mrf.mxu0
      %v1491 = vadd.f32 0.0, %v1490
      %v1492 = vpop.f32.mrf.mxu0
      %1493 = vmatprep.mubr.bf16.mxu0 0
      %1494 = vmatmul.mubr.bf16.gmra.mxu0 %v1376
      %v1495 = vpop.f32.mrf.mxu0
      %v1496 = vadd.f32 0.0, %v1495
      %v1497 = vpop.f32.mrf.mxu0
      %v1498 = vpop.f32.mrf.mxu0
      %v1499 = vadd.f32 0.0, %v1498
      %v1500 = vpop.f32.mrf.mxu0
      %1501 = vmatprep.mubr.bf16.mxu0 0
      %1502 = vmatmul.mubr.bf16.gmra.mxu0 %v1377
      %v1503 = vpop.f32.mrf.mxu0
      %v1504 = vadd.f32 0.0, %v1503
      %v1505 = vpop.f32.mrf.mxu0
      %v1506 = vpop.f32.mrf.mxu0
      %v1507 = vadd.f32 0.0, %v1506
      %v1508 = vpop.f32.mrf.mxu0
      %1509 = vmatprep.mubr.bf16.mxu0 0
      %1510 = vmatmul.mubr.bf16.gmra.mxu0 %v1378
      %v1511 = vpop.f32.mrf.mxu0
      %v1512 = vadd.f32 0.0, %v1511
      %v1513 = vpop.f32.mrf.mxu0
      %v1514 = vpop.f32.mrf.mxu0
      %v1515 = vadd.f32 0.0, %v1514
      %v1516 = vpop.f32.mrf.mxu0
      %1517 = vmatprep.mubr.bf16.mxu0 0
      %1518 = vmatmul.mubr.bf16.gmra.mxu0 %v1379
      %v1519 = vpop.f32.mrf.mxu0
      %v1520 = vadd.f32 0.0, %v1519
      %v1521 = vpop.f32.mrf.mxu0
      %v1522 = vpop.f32.mrf.mxu0
      %v1523 = vadd.f32 0.0, %v1522
      %v1524 = vpop.f32.mrf.mxu0
      %1525 = vmatprep.mubr.bf16.mxu0 0
      %1526 = vmatmul.mubr.bf16.gmra.mxu0 %v1380
      %v1527 = vpop.f32.mrf.mxu0
      %v1528 = vadd.f32 0.0, %v1527
      %v1529 = vpop.f32.mrf.mxu0
      %v1530 = vpop.f32.mrf.mxu0
      %v1531 = vadd.f32 0.0, %v1530
      %v1532 = vpop.f32.mrf.mxu0
      %1533 = vdwg.mxu0
      %v1534 = vadd.f32 %v1201, %v1472
      %v1535 = vadd.f32 %v1202, %v1475
      %v1536 = vadd.f32 %v1203, %v1480
      %v1537 = vadd.f32 %v1204, %v1483
      %v1538 = vadd.f32 %v1205, %v1488
      %v1539 = vadd.f32 %v1206, %v1491
      %v1540 = vadd.f32 %v1207, %v1496
      %v1541 = vadd.f32 %v1208, %v1499
      %v1542 = vadd.f32 %v1209, %v1504
      %v1543 = vadd.f32 %v1210, %v1507
      %v1544 = vadd.f32 %v1211, %v1512
      %v1545 = vadd.f32 %v1212, %v1515
      %v1546 = vadd.f32 %v1213, %v1520
      %v1547 = vadd.f32 %v1214, %v1523
      %v1548 = vadd.f32 %v1215, %v1528
      %v1549 = vadd.f32 %v1216, %v1531
      %vm1550 = vcmask 1041408
      %vm1551 = vcmask 1045508
      %vm1552 = vmor %vm1550, %vm1551
      %v1553 = vrot.slane %v318, 6
      %v1554 = vrot.slane %v1553, 4
      %v1555 = vrot.slane %v319, 6
      %v1556 = vsel %vm1552, %v1554, %v1555
      %v1557 = vrot.slane %v1555, 4
      %v1558 = vrot.slane %v320, 6
      %v1559 = vsel %vm1552, %v1557, %v1558
      %v1560 = vrot.slane %v321, 6
      %v1561 = vrot.slane %v1560, 4
      %v1562 = vrot.slane %v322, 6
      %v1563 = vsel %vm1552, %v1561, %v1562
      %v1564 = vrot.slane %v1562, 4
      %v1565 = vrot.slane %v323, 6
      %v1566 = vsel %vm1552, %v1564, %v1565
      %v1567 = vrot.slane %v324, 6
      %v1568 = vrot.slane %v1567, 4
      %v1569 = vrot.slane %v325, 6
      %v1570 = vsel %vm1552, %v1568, %v1569
      %v1571 = vrot.slane %v1569, 4
      %v1572 = vrot.slane %v326, 6
      %v1573 = vsel %vm1552, %v1571, %v1572
      %v1574 = vrot.slane %v327, 6
      %v1575 = vrot.slane %v1574, 4
      %v1576 = vrot.slane %v328, 6
      %v1577 = vsel %vm1552, %v1575, %v1576
      %v1578 = vrot.slane %v1576, 4
      %v1579 = vrot.slane %v329, 6
      %v1580 = vsel %vm1552, %v1578, %v1579
      %v1581 = vrot.slane %v330, 6
      %v1582 = vrot.slane %v1581, 4
      %v1583 = vrot.slane %v331, 6
      %v1584 = vsel %vm1552, %v1582, %v1583
      %v1585 = vrot.slane %v1583, 4
      %v1586 = vrot.slane %v332, 6
      %v1587 = vsel %vm1552, %v1585, %v1586
      %v1588 = vrot.slane %v333, 6
      %v1589 = vrot.slane %v1588, 4
      %v1590 = vrot.slane %v334, 6
      %v1591 = vsel %vm1552, %v1589, %v1590
      %v1592 = vrot.slane %v1590, 4
      %v1593 = vrot.slane %v335, 6
      %v1594 = vsel %vm1552, %v1592, %v1593
      %v1595 = vrot.slane %v336, 6
      %v1596 = vrot.slane %v1595, 4
      %v1597 = vrot.slane %v337, 6
      %v1598 = vsel %vm1552, %v1596, %v1597
      %v1599 = vrot.slane %v1597, 4
      %v1600 = vrot.slane %v338, 6
      %v1601 = vsel %vm1552, %v1599, %v1600
      %v1602 = vrot.slane %v339, 6
      %v1603 = vrot.slane %v1602, 4
      %v1604 = vrot.slane %v340, 6
      %v1605 = vsel %vm1552, %v1603, %v1604
      %v1606 = vrot.slane %v1604, 4
      %v1607 = vrot.slane %v341, 6
      %v1608 = vsel %vm1552, %v1606, %v1607
      %s1609 = scalar_lea.vmem %s2, 256
      %v1610 = vld [vmem:[%s1609] sm:$0xf]
      %v1611 = vld [vmem:[%s1609 + $0x4] sm:$0xf]
      %v1612 = vld [vmem:[%s1609 + $0x8] sm:$0xf]
      %v1613 = vld [vmem:[%s1609 + $0xc] sm:$0xf]
      %v1614 = vld [vmem:[%s1609 + $0x10] sm:$0xf]
      %v1615 = vld [vmem:[%s1609 + $0x14] sm:$0xf]
      %v1616 = vld [vmem:[%s1609 + $0x18] sm:$0xf]
      %v1617 = vld [vmem:[%s1609 + $0x1c] sm:$0xf]
      %v1618 = vld [vmem:[%s1609 + $0x20] sm:$0xf]
      %v1619 = vld [vmem:[%s1609 + $0x24] sm:$0xf]
      %v1620 = vld [vmem:[%s1609 + $0x28] sm:$0xf]
      %v1621 = vld [vmem:[%s1609 + $0x2c] sm:$0xf]
      %v1622 = vld [vmem:[%s1609 + $0x30] sm:$0xf]
      %v1623 = vld [vmem:[%s1609 + $0x34] sm:$0xf]
      %v1624 = vld [vmem:[%s1609 + $0x38] sm:$0xf]
      %v1625 = vld [vmem:[%s1609 + $0x3c] sm:$0xf]
      %v1626 = vunpack.c.l.b16 %v1556
      %v1627 = vunpack.c.l.b16 %v1559
      %v1628 = vunpack.c.l.b16 %v1563
      %v1629 = vunpack.c.l.b16 %v1566
      %v1630 = vunpack.c.l.b16 %v1570
      %v1631 = vunpack.c.l.b16 %v1573
      %v1632 = vunpack.c.l.b16 %v1577
      %v1633 = vunpack.c.l.b16 %v1580
      %v1634 = vunpack.c.l.b16 %v1584
      %v1635 = vunpack.c.l.b16 %v1587
      %v1636 = vunpack.c.l.b16 %v1591
      %v1637 = vunpack.c.l.b16 %v1594
      %v1638 = vunpack.c.l.b16 %v1598
      %v1639 = vunpack.c.l.b16 %v1601
      %v1640 = vunpack.c.l.b16 %v1605
      %v1641 = vunpack.c.l.b16 %v1608
      %v1642 = vpack.c.b16 %v1627, %v1626
      %v1643 = vpack.c.b16 %v1629, %v1628
      %v1644 = vpack.c.b16 %v1631, %v1630
      %v1645 = vpack.c.b16 %v1633, %v1632
      %v1646 = vpack.c.b16 %v1635, %v1634
      %v1647 = vpack.c.b16 %v1637, %v1636
      %v1648 = vpack.c.b16 %v1639, %v1638
      %v1649 = vpack.c.b16 %v1641, %v1640
      %v1674 = vunpack.c.l.b16 %v1610
      %v1675 = vunpack.c.l.b16 %v1611
      %v1676 = vunpack.c.l.b16 %v1612
      %v1677 = vunpack.c.l.b16 %v1613
      %v1678 = vunpack.c.l.b16 %v1614
      %v1679 = vunpack.c.l.b16 %v1615
      %v1680 = vunpack.c.l.b16 %v1616
      %v1681 = vunpack.c.l.b16 %v1617
      %v1682 = vunpack.c.l.b16 %v1618
      %v1683 = vunpack.c.l.b16 %v1619
      %v1684 = vunpack.c.l.b16 %v1620
      %v1685 = vunpack.c.l.b16 %v1621
      %v1686 = vunpack.c.l.b16 %v1622
      %v1687 = vunpack.c.l.b16 %v1623
      %v1688 = vunpack.c.l.b16 %v1624
      %v1689 = vunpack.c.l.b16 %v1625
      %v1690 = vpack.c.b16 %v1675, %v1674
      %v1691 = vpack.c.b16 %v1677, %v1676
      %v1692 = vpack.c.b16 %v1679, %v1678
      %v1693 = vpack.c.b16 %v1681, %v1680
      %v1694 = vpack.c.b16 %v1683, %v1682
      %v1695 = vpack.c.b16 %v1685, %v1684
      %v1696 = vpack.c.b16 %v1687, %v1686
      %v1697 = vpack.c.b16 %v1689, %v1688
      %1706 = vmatprep.subr.bf16.mxu0 0
      %1707 = vmatpush1.bf16.msra.mxu0 %v1697
      %1708 = vmatprep.subr.bf16.mxu0 0
      %1709 = vmatpush1.bf16.msra.mxu0 %v1696
      %1710 = vmatprep.subr.bf16.mxu0 0
      %1711 = vmatpush1.bf16.msra.mxu0 %v1695
      %1712 = vmatprep.subr.bf16.mxu0 0
      %1713 = vmatpush1.bf16.msra.mxu0 %v1694
      %1714 = vmatprep.subr.bf16.mxu0 0
      %1715 = vmatpush1.bf16.msra.mxu0 %v1693
      %1716 = vmatprep.subr.bf16.mxu0 0
      %1717 = vmatpush1.bf16.msra.mxu0 %v1692
      %1718 = vmatprep.subr.bf16.mxu0 0
      %1719 = vmatpush1.bf16.msra.mxu0 %v1691
      %1720 = vmatprep.subr.bf16.mxu0 0
      %1721 = vmatpush1.bf16.msra.mxu0 %v1690
      %1722 = vmatprep.subr.bf16.mxu0 0
      %1723 = vmatpush2.bf16.msra.mxu0 0
      %1724 = vmatprep.subr.bf16.mxu0 0
      %1725 = vmatpush2.bf16.msra.mxu0 0
      %1726 = vmatprep.subr.bf16.mxu0 0
      %1727 = vmatpush2.bf16.msra.mxu0 0
      %1728 = vmatprep.subr.bf16.mxu0 0
      %1729 = vmatpush2.bf16.msra.mxu0 0
      %1730 = vmatprep.subr.bf16.mxu0 0
      %1731 = vmatpush2.bf16.msra.mxu0 0
      %1732 = vmatprep.subr.bf16.mxu0 0
      %1733 = vmatpush2.bf16.msra.mxu0 0
      %1734 = vmatprep.subr.bf16.mxu0 0
      %1735 = vmatpush2.bf16.msra.mxu0 0
      %1736 = vmatprep.subr.bf16.mxu0 0
      %1737 = vmatpush2.bf16.msra.mxu0 0
      %1738 = vmatprep.mubr.bf16.mxu0 0
      %1739 = vmatmul.mubr.bf16.gmra.mxu0 %v1642
      %v1740 = vpop.f32.mrf.mxu0
      %v1741 = vadd.f32 0.0, %v1740
      %v1742 = vpop.f32.mrf.mxu0
      %v1743 = vpop.f32.mrf.mxu0
      %v1744 = vadd.f32 0.0, %v1743
      %v1745 = vpop.f32.mrf.mxu0
      %1746 = vmatprep.mubr.bf16.mxu0 0
      %1747 = vmatmul.mubr.bf16.gmra.mxu0 %v1643
      %v1748 = vpop.f32.mrf.mxu0
      %v1749 = vadd.f32 0.0, %v1748
      %v1750 = vpop.f32.mrf.mxu0
      %v1751 = vpop.f32.mrf.mxu0
      %v1752 = vadd.f32 0.0, %v1751
      %v1753 = vpop.f32.mrf.mxu0
      %1754 = vmatprep.mubr.bf16.mxu0 0
      %1755 = vmatmul.mubr.bf16.gmra.mxu0 %v1644
      %v1756 = vpop.f32.mrf.mxu0
      %v1757 = vadd.f32 0.0, %v1756
      %v1758 = vpop.f32.mrf.mxu0
      %v1759 = vpop.f32.mrf.mxu0
      %v1760 = vadd.f32 0.0, %v1759
      %v1761 = vpop.f32.mrf.mxu0
      %1762 = vmatprep.mubr.bf16.mxu0 0
      %1763 = vmatmul.mubr.bf16.gmra.mxu0 %v1645
      %v1764 = vpop.f32.mrf.mxu0
      %v1765 = vadd.f32 0.0, %v1764
      %v1766 = vpop.f32.mrf.mxu0
      %v1767 = vpop.f32.mrf.mxu0
      %v1768 = vadd.f32 0.0, %v1767
      %v1769 = vpop.f32.mrf.mxu0
      %1770 = vmatprep.mubr.bf16.mxu0 0
      %1771 = vmatmul.mubr.bf16.gmra.mxu0 %v1646
      %v1772 = vpop.f32.mrf.mxu0
      %v1773 = vadd.f32 0.0, %v1772
      %v1774 = vpop.f32.mrf.mxu0
      %v1775 = vpop.f32.mrf.mxu0
      %v1776 = vadd.f32 0.0, %v1775
      %v1777 = vpop.f32.mrf.mxu0
      %1778 = vmatprep.mubr.bf16.mxu0 0
      %1779 = vmatmul.mubr.bf16.gmra.mxu0 %v1647
      %v1780 = vpop.f32.mrf.mxu0
      %v1781 = vadd.f32 0.0, %v1780
      %v1782 = vpop.f32.mrf.mxu0
      %v1783 = vpop.f32.mrf.mxu0
      %v1784 = vadd.f32 0.0, %v1783
      %v1785 = vpop.f32.mrf.mxu0
      %1786 = vmatprep.mubr.bf16.mxu0 0
      %1787 = vmatmul.mubr.bf16.gmra.mxu0 %v1648
      %v1788 = vpop.f32.mrf.mxu0
      %v1789 = vadd.f32 0.0, %v1788
      %v1790 = vpop.f32.mrf.mxu0
      %v1791 = vpop.f32.mrf.mxu0
      %v1792 = vadd.f32 0.0, %v1791
      %v1793 = vpop.f32.mrf.mxu0
      %1794 = vmatprep.mubr.bf16.mxu0 0
      %1795 = vmatmul.mubr.bf16.gmra.mxu0 %v1649
      %v1796 = vpop.f32.mrf.mxu0
      %v1797 = vadd.f32 0.0, %v1796
      %v1798 = vpop.f32.mrf.mxu0
      %v1799 = vpop.f32.mrf.mxu0
      %v1800 = vadd.f32 0.0, %v1799
      %v1801 = vpop.f32.mrf.mxu0
      %1802 = vdwg.mxu0
      %v1803 = vadd.f32 %v1534, %v1741
      %v1804 = vadd.f32 %v1535, %v1744
      %v1805 = vadd.f32 %v1536, %v1749
      %v1806 = vadd.f32 %v1537, %v1752
      %v1807 = vadd.f32 %v1538, %v1757
      %v1808 = vadd.f32 %v1539, %v1760
      %v1809 = vadd.f32 %v1540, %v1765
      %v1810 = vadd.f32 %v1541, %v1768
      %v1811 = vadd.f32 %v1542, %v1773
      %v1812 = vadd.f32 %v1543, %v1776
      %v1813 = vadd.f32 %v1544, %v1781
      %v1814 = vadd.f32 %v1545, %v1784
      %v1815 = vadd.f32 %v1546, %v1789
      %v1816 = vadd.f32 %v1547, %v1792
      %v1817 = vadd.f32 %v1548, %v1797
      %v1818 = vadd.f32 %v1549, %v1800
      %v1819 = vmax.f32 %v1803, 0.0
      %v1820 = vmax.f32 %v1804, 0.0
      %v1821 = vmax.f32 %v1805, 0.0
      %v1822 = vmax.f32 %v1806, 0.0
      %v1823 = vmax.f32 %v1807, 0.0
      %v1824 = vmax.f32 %v1808, 0.0
      %v1825 = vmax.f32 %v1809, 0.0
      %v1826 = vmax.f32 %v1810, 0.0
      %v1827 = vmax.f32 %v1811, 0.0
      %v1828 = vmax.f32 %v1812, 0.0
      %v1829 = vmax.f32 %v1813, 0.0
      %v1830 = vmax.f32 %v1814, 0.0
      %v1831 = vmax.f32 %v1815, 0.0
      %v1832 = vmax.f32 %v1816, 0.0
      %v1833 = vmax.f32 %v1817, 0.0
      %v1834 = vmax.f32 %v1818, 0.0
      %v1835 = vsel %vm316, 1, 0
      %v1836 = vsel %vm317, 1, 0
      %vm1837 = vcmp.eq.s32.totalorder %v1835, 1
      %vm1838 = vcmp.eq.s32.totalorder %v1836, 1
      %v1839 = vsel %vm1837, %v1819, 0.0
      %v1840 = vsel %vm1838, %v1820, 0.0
      %v1841 = vsel %vm1837, %v1821, 0.0
      %v1842 = vsel %vm1838, %v1822, 0.0
      %v1843 = vsel %vm1837, %v1823, 0.0
      %v1844 = vsel %vm1838, %v1824, 0.0
      %v1845 = vsel %vm1837, %v1825, 0.0
      %v1846 = vsel %vm1838, %v1826, 0.0
      %v1847 = vsel %vm1837, %v1827, 0.0
      %v1848 = vsel %vm1838, %v1828, 0.0
      %v1849 = vsel %vm1837, %v1829, 0.0
      %v1850 = vsel %vm1838, %v1830, 0.0
      %v1851 = vsel %vm1837, %v1831, 0.0
      %v1852 = vsel %vm1838, %v1832, 0.0
      %v1853 = vsel %vm1837, %v1833, 0.0
      %v1854 = vsel %vm1838, %v1834, 0.0
      %v1855 = vmax.f32 %v1839, %v1840
      %v1856 = vrot.slane %v1855, 4
      %v1857 = vmax.f32 %v1855, %v1856
      %v1858 = vrot.slane %v1857, 2
      %v1859 = vmax.f32 %v1857, %v1858
      %v1860 = vrot.slane %v1859, 1
      %v1861 = vmax.f32 %v1859, %v1860
      %v1862 = vmax.f32 %v1841, %v1842
      %v1863 = vrot.slane %v1862, 4
      %v1864 = vmax.f32 %v1862, %v1863
      %v1865 = vrot.slane %v1864, 2
      %v1866 = vmax.f32 %v1864, %v1865
      %v1867 = vrot.slane %v1866, 1
      %v1868 = vmax.f32 %v1866, %v1867
      %v1869 = vmax.f32 %v1843, %v1844
      %v1870 = vrot.slane %v1869, 4
      %v1871 = vmax.f32 %v1869, %v1870
      %v1872 = vrot.slane %v1871, 2
      %v1873 = vmax.f32 %v1871, %v1872
      %v1874 = vrot.slane %v1873, 1
      %v1875 = vmax.f32 %v1873, %v1874
      %v1876 = vmax.f32 %v1845, %v1846
      %v1877 = vrot.slane %v1876, 4
      %v1878 = vmax.f32 %v1876, %v1877
      %v1879 = vrot.slane %v1878, 2
      %v1880 = vmax.f32 %v1878, %v1879
      %v1881 = vrot.slane %v1880, 1
      %v1882 = vmax.f32 %v1880, %v1881
      %v1883 = vmax.f32 %v1847, %v1848
      %v1884 = vrot.slane %v1883, 4
      %v1885 = vmax.f32 %v1883, %v1884
      %v1886 = vrot.slane %v1885, 2
      %v1887 = vmax.f32 %v1885, %v1886
      %v1888 = vrot.slane %v1887, 1
      %v1889 = vmax.f32 %v1887, %v1888
      %v1890 = vmax.f32 %v1849, %v1850
      %v1891 = vrot.slane %v1890, 4
      %v1892 = vmax.f32 %v1890, %v1891
      %v1893 = vrot.slane %v1892, 2
      %v1894 = vmax.f32 %v1892, %v1893
      %v1895 = vrot.slane %v1894, 1
      %v1896 = vmax.f32 %v1894, %v1895
      %v1897 = vmax.f32 %v1851, %v1852
      %v1898 = vrot.slane %v1897, 4
      %v1899 = vmax.f32 %v1897, %v1898
      %v1900 = vrot.slane %v1899, 2
      %v1901 = vmax.f32 %v1899, %v1900
      %v1902 = vrot.slane %v1901, 1
      %v1903 = vmax.f32 %v1901, %v1902
      %v1904 = vmax.f32 %v1853, %v1854
      %v1905 = vrot.slane %v1904, 4
      %v1906 = vmax.f32 %v1904, %v1905
      %v1907 = vrot.slane %v1906, 2
      %v1908 = vmax.f32 %v1906, %v1907
      %v1909 = vrot.slane %v1908, 1
      %v1910 = vmax.f32 %v1908, %v1909
      %v1911 = vld [vmem:[%s301] sm:$0xf]
      %v1912 = vld [vmem:[%s301 + $0x4] sm:$0xf]
      %v1913 = vld [vmem:[%s301 + $0x8] sm:$0x3]
      %v1914 = vld [vmem:[%s301 + $0xc] sm:$0xf]
      %v1915 = vld [vmem:[%s301 + $0x10] sm:$0xf]
      %v1916 = vld [vmem:[%s301 + $0x14] sm:$0x3]
      %v1917 = vld [vmem:[%s301 + $0x18] sm:$0xf]
      %v1918 = vld [vmem:[%s301 + $0x1c] sm:$0xf]
      %v1919 = vld [vmem:[%s301 + $0x20] sm:$0x3]
      %v1920 = vld [vmem:[%s301 + $0x24] sm:$0xf]
      %v1921 = vld [vmem:[%s301 + $0x28] sm:$0xf]
      %v1922 = vld [vmem:[%s301 + $0x2c] sm:$0x3]
      %v1923 = vld [vmem:[%s301 + $0x30] sm:$0xf]
      %v1924 = vld [vmem:[%s301 + $0x34] sm:$0xf]
      %v1925 = vld [vmem:[%s301 + $0x38] sm:$0x3]
      %v1926 = vld [vmem:[%s301 + $0x3c] sm:$0xf]
      %v1927 = vld [vmem:[%s301 + $0x40] sm:$0xf]
      %v1928 = vld [vmem:[%s301 + $0x44] sm:$0x3]
      %v1929 = vld [vmem:[%s301 + $0x48] sm:$0xf]
      %v1930 = vld [vmem:[%s301 + $0x4c] sm:$0xf]
      %v1931 = vld [vmem:[%s301 + $0x50] sm:$0x3]
      %v1932 = vld [vmem:[%s301 + $0x54] sm:$0xf]
      %v1933 = vld [vmem:[%s301 + $0x58] sm:$0xf]
      %v1934 = vld [vmem:[%s301 + $0x5c] sm:$0x3]
      %v1935 = vld [vmem:[%s3] sm:$0xf]
      %v1936 = vld [vmem:[%s3 + $0x4] sm:$0xf]
      %v1937 = vld [vmem:[%s3 + $0x8] sm:$0xf]
      %v1938 = vld [vmem:[%s3 + $0xc] sm:$0xf]
      %v1939 = vld [vmem:[%s3 + $0x10] sm:$0xf]
      %v1940 = vld [vmem:[%s3 + $0x14] sm:$0xf]
      %v1941 = vld [vmem:[%s3 + $0x18] sm:$0xf]
      %v1942 = vld [vmem:[%s3 + $0x1c] sm:$0xf]
      %v1943 = vld [vmem:[%s3 + $0x20] sm:$0xf]
      %v1944 = vld [vmem:[%s3 + $0x24] sm:$0xf]
      %v1945 = vld [vmem:[%s3 + $0x28] sm:$0xf]
      %v1946 = vld [vmem:[%s3 + $0x2c] sm:$0xf]
      %v1947 = vld [vmem:[%s3 + $0x30] sm:$0xf]
      %v1948 = vld [vmem:[%s3 + $0x34] sm:$0xf]
      %v1949 = vld [vmem:[%s3 + $0x38] sm:$0xf]
      %v1950 = vld [vmem:[%s3 + $0x3c] sm:$0xf]
      %v1952 = vshrl.u32 %v1911, 16
      %v1954 = vrot.slane %v1952, 4
      %v1955 = vshll.u32 %v1911, 16
      %v1957 = vrot.slane %v1955, 5
      %v1958 = vor.u32 %v1954, %v1957
      %v1959 = vrot.slane %v1958, 4
      %v1961 = vshll.u32 %v1912, 16
      %v1963 = vrot.slane %v1961, 5
      %v1964 = vsel %vm360, %v1959, %v1963
      %v1965 = vshrl.u32 %v1912, 16
      %v1967 = vrot.slane %v1965, 4
      %v1968 = vor.u32 %v1967, %v1963
      %v1969 = vrot.slane %v1968, 4
      %v1971 = vshll.u32 %v1913, 16
      %v1973 = vrot.slane %v1971, 5
      %v1974 = vsel %vm360, %v1969, %v1973
      %v1976 = vshrl.u32 %v1914, 16
      %v1978 = vrot.slane %v1976, 4
      %v1979 = vshll.u32 %v1914, 16
      %v1981 = vrot.slane %v1979, 5
      %v1982 = vor.u32 %v1978, %v1981
      %v1983 = vrot.slane %v1982, 4
      %v1985 = vshll.u32 %v1915, 16
      %v1987 = vrot.slane %v1985, 5
      %v1988 = vsel %vm360, %v1983, %v1987
      %v1989 = vshrl.u32 %v1915, 16
      %v1991 = vrot.slane %v1989, 4
      %v1992 = vor.u32 %v1991, %v1987
      %v1993 = vrot.slane %v1992, 4
      %v1995 = vshll.u32 %v1916, 16
      %v1997 = vrot.slane %v1995, 5
      %v1998 = vsel %vm360, %v1993, %v1997
      %v2000 = vshrl.u32 %v1917, 16
      %v2002 = vrot.slane %v2000, 4
      %v2003 = vshll.u32 %v1917, 16
      %v2005 = vrot.slane %v2003, 5
      %v2006 = vor.u32 %v2002, %v2005
      %v2007 = vrot.slane %v2006, 4
      %v2009 = vshll.u32 %v1918, 16
      %v2011 = vrot.slane %v2009, 5
      %v2012 = vsel %vm360, %v2007, %v2011
      %v2013 = vshrl.u32 %v1918, 16
      %v2015 = vrot.slane %v2013, 4
      %v2016 = vor.u32 %v2015, %v2011
      %v2017 = vrot.slane %v2016, 4
      %v2019 = vshll.u32 %v1919, 16
      %v2021 = vrot.slane %v2019, 5
      %v2022 = vsel %vm360, %v2017, %v2021
      %v2024 = vshrl.u32 %v1920, 16
      %v2026 = vrot.slane %v2024, 4
      %v2027 = vshll.u32 %v1920, 16
      %v2029 = vrot.slane %v2027, 5
      %v2030 = vor.u32 %v2026, %v2029
      %v2031 = vrot.slane %v2030, 4
      %v2033 = vshll.u32 %v1921, 16
      %v2035 = vrot.slane %v2033, 5
      %v2036 = vsel %vm360, %v2031, %v2035
      %v2037 = vshrl.u32 %v1921, 16
      %v2039 = vrot.slane %v2037, 4
      %v2040 = vor.u32 %v2039, %v2035
      %v2041 = vrot.slane %v2040, 4
      %v2043 = vshll.u32 %v1922, 16
      %v2045 = vrot.slane %v2043, 5
      %v2046 = vsel %vm360, %v2041, %v2045
      %v2048 = vshrl.u32 %v1923, 16
      %v2050 = vrot.slane %v2048, 4
      %v2051 = vshll.u32 %v1923, 16
      %v2053 = vrot.slane %v2051, 5
      %v2054 = vor.u32 %v2050, %v2053
      %v2055 = vrot.slane %v2054, 4
      %v2057 = vshll.u32 %v1924, 16
      %v2059 = vrot.slane %v2057, 5
      %v2060 = vsel %vm360, %v2055, %v2059
      %v2061 = vshrl.u32 %v1924, 16
      %v2063 = vrot.slane %v2061, 4
      %v2064 = vor.u32 %v2063, %v2059
      %v2065 = vrot.slane %v2064, 4
      %v2067 = vshll.u32 %v1925, 16
      %v2069 = vrot.slane %v2067, 5
      %v2070 = vsel %vm360, %v2065, %v2069
      %v2072 = vshrl.u32 %v1926, 16
      %v2074 = vrot.slane %v2072, 4
      %v2075 = vshll.u32 %v1926, 16
      %v2077 = vrot.slane %v2075, 5
      %v2078 = vor.u32 %v2074, %v2077
      %v2079 = vrot.slane %v2078, 4
      %v2081 = vshll.u32 %v1927, 16
      %v2083 = vrot.slane %v2081, 5
      %v2084 = vsel %vm360, %v2079, %v2083
      %v2085 = vshrl.u32 %v1927, 16
      %v2087 = vrot.slane %v2085, 4
      %v2088 = vor.u32 %v2087, %v2083
      %v2089 = vrot.slane %v2088, 4
      %v2091 = vshll.u32 %v1928, 16
      %v2093 = vrot.slane %v2091, 5
      %v2094 = vsel %vm360, %v2089, %v2093
      %v2096 = vshrl.u32 %v1929, 16
      %v2098 = vrot.slane %v2096, 4
      %v2099 = vshll.u32 %v1929, 16
      %v2101 = vrot.slane %v2099, 5
      %v2102 = vor.u32 %v2098, %v2101
      %v2103 = vrot.slane %v2102, 4
      %v2105 = vshll.u32 %v1930, 16
      %v2107 = vrot.slane %v2105, 5
      %v2108 = vsel %vm360, %v2103, %v2107
      %v2109 = vshrl.u32 %v1930, 16
      %v2111 = vrot.slane %v2109, 4
      %v2112 = vor.u32 %v2111, %v2107
      %v2113 = vrot.slane %v2112, 4
      %v2115 = vshll.u32 %v1931, 16
      %v2117 = vrot.slane %v2115, 5
      %v2118 = vsel %vm360, %v2113, %v2117
      %v2120 = vshrl.u32 %v1932, 16
      %v2122 = vrot.slane %v2120, 4
      %v2123 = vshll.u32 %v1932, 16
      %v2125 = vrot.slane %v2123, 5
      %v2126 = vor.u32 %v2122, %v2125
      %v2127 = vrot.slane %v2126, 4
      %v2129 = vshll.u32 %v1933, 16
      %v2131 = vrot.slane %v2129, 5
      %v2132 = vsel %vm360, %v2127, %v2131
      %v2133 = vshrl.u32 %v1933, 16
      %v2135 = vrot.slane %v2133, 4
      %v2136 = vor.u32 %v2135, %v2131
      %v2137 = vrot.slane %v2136, 4
      %v2139 = vshll.u32 %v1934, 16
      %v2141 = vrot.slane %v2139, 5
      %v2142 = vsel %vm360, %v2137, %v2141
      %s2143 = scalar_lea.vmem %s3, 64
      %v2144 = vld [vmem:[%s2143] sm:$0xf]
      %v2145 = vld [vmem:[%s2143 + $0x4] sm:$0xf]
      %v2146 = vld [vmem:[%s2143 + $0x8] sm:$0xf]
      %v2147 = vld [vmem:[%s2143 + $0xc] sm:$0xf]
      %v2148 = vld [vmem:[%s2143 + $0x10] sm:$0xf]
      %v2149 = vld [vmem:[%s2143 + $0x14] sm:$0xf]
      %v2150 = vld [vmem:[%s2143 + $0x18] sm:$0xf]
      %v2151 = vld [vmem:[%s2143 + $0x1c] sm:$0xf]
      %v2152 = vld [vmem:[%s2143 + $0x20] sm:$0xf]
      %v2153 = vld [vmem:[%s2143 + $0x24] sm:$0xf]
      %v2154 = vld [vmem:[%s2143 + $0x28] sm:$0xf]
      %v2155 = vld [vmem:[%s2143 + $0x2c] sm:$0xf]
      %v2156 = vld [vmem:[%s2143 + $0x30] sm:$0xf]
      %v2157 = vld [vmem:[%s2143 + $0x34] sm:$0xf]
      %v2158 = vld [vmem:[%s2143 + $0x38] sm:$0xf]
      %v2159 = vld [vmem:[%s2143 + $0x3c] sm:$0xf]
      %v2160 = vunpack.c.l.b16 %v1964
      %v2161 = vunpack.c.l.b16 %v1974
      %v2162 = vunpack.c.l.b16 %v1988
      %v2163 = vunpack.c.l.b16 %v1998
      %v2164 = vunpack.c.l.b16 %v2012
      %v2165 = vunpack.c.l.b16 %v2022
      %v2166 = vunpack.c.l.b16 %v2036
      %v2167 = vunpack.c.l.b16 %v2046
      %v2168 = vunpack.c.l.b16 %v2060
      %v2169 = vunpack.c.l.b16 %v2070
      %v2170 = vunpack.c.l.b16 %v2084
      %v2171 = vunpack.c.l.b16 %v2094
      %v2172 = vunpack.c.l.b16 %v2108
      %v2173 = vunpack.c.l.b16 %v2118
      %v2174 = vunpack.c.l.b16 %v2132
      %v2175 = vunpack.c.l.b16 %v2142
      %v2176 = vpack.c.b16 %v2161, %v2160
      %v2177 = vpack.c.b16 %v2163, %v2162
      %v2178 = vpack.c.b16 %v2165, %v2164
      %v2179 = vpack.c.b16 %v2167, %v2166
      %v2180 = vpack.c.b16 %v2169, %v2168
      %v2181 = vpack.c.b16 %v2171, %v2170
      %v2182 = vpack.c.b16 %v2173, %v2172
      %v2183 = vpack.c.b16 %v2175, %v2174
      %v2208 = vunpack.c.l.b16 %v2144
      %v2209 = vunpack.c.l.b16 %v2145
      %v2210 = vunpack.c.l.b16 %v2146
      %v2211 = vunpack.c.l.b16 %v2147
      %v2212 = vunpack.c.l.b16 %v2148
      %v2213 = vunpack.c.l.b16 %v2149
      %v2214 = vunpack.c.l.b16 %v2150
      %v2215 = vunpack.c.l.b16 %v2151
      %v2216 = vunpack.c.l.b16 %v2152
      %v2217 = vunpack.c.l.b16 %v2153
      %v2218 = vunpack.c.l.b16 %v2154
      %v2219 = vunpack.c.l.b16 %v2155
      %v2220 = vunpack.c.l.b16 %v2156
      %v2221 = vunpack.c.l.b16 %v2157
      %v2222 = vunpack.c.l.b16 %v2158
      %v2223 = vunpack.c.l.b16 %v2159
      %v2224 = vpack.c.b16 %v2209, %v2208
      %v2225 = vpack.c.b16 %v2211, %v2210
      %v2226 = vpack.c.b16 %v2213, %v2212
      %v2227 = vpack.c.b16 %v2215, %v2214
      %v2228 = vpack.c.b16 %v2217, %v2216
      %v2229 = vpack.c.b16 %v2219, %v2218
      %v2230 = vpack.c.b16 %v2221, %v2220
      %v2231 = vpack.c.b16 %v2223, %v2222
      %2240 = vmatprep.subr.bf16.mxu0 0
      %2241 = vmatpush1.bf16.msra.mxu0 %v2231
      %2242 = vmatprep.subr.bf16.mxu0 0
      %2243 = vmatpush1.bf16.msra.mxu0 %v2230
      %2244 = vmatprep.subr.bf16.mxu0 0
      %2245 = vmatpush1.bf16.msra.mxu0 %v2229
      %2246 = vmatprep.subr.bf16.mxu0 0
      %2247 = vmatpush1.bf16.msra.mxu0 %v2228
      %2248 = vmatprep.subr.bf16.mxu0 0
      %2249 = vmatpush1.bf16.msra.mxu0 %v2227
      %2250 = vmatprep.subr.bf16.mxu0 0
      %2251 = vmatpush1.bf16.msra.mxu0 %v2226
      %2252 = vmatprep.subr.bf16.mxu0 0
      %2253 = vmatpush1.bf16.msra.mxu0 %v2225
      %2254 = vmatprep.subr.bf16.mxu0 0
      %2255 = vmatpush1.bf16.msra.mxu0 %v2224
      %2256 = vmatprep.subr.bf16.mxu0 0
      %2257 = vmatpush2.bf16.msra.mxu0 0
      %2258 = vmatprep.subr.bf16.mxu0 0
      %2259 = vmatpush2.bf16.msra.mxu0 0
      %2260 = vmatprep.subr.bf16.mxu0 0
      %2261 = vmatpush2.bf16.msra.mxu0 0
      %2262 = vmatprep.subr.bf16.mxu0 0
      %2263 = vmatpush2.bf16.msra.mxu0 0
      %2264 = vmatprep.subr.bf16.mxu0 0
      %2265 = vmatpush2.bf16.msra.mxu0 0
      %2266 = vmatprep.subr.bf16.mxu0 0
      %2267 = vmatpush2.bf16.msra.mxu0 0
      %2268 = vmatprep.subr.bf16.mxu0 0
      %2269 = vmatpush2.bf16.msra.mxu0 0
      %2270 = vmatprep.subr.bf16.mxu0 0
      %2271 = vmatpush2.bf16.msra.mxu0 0
      %2272 = vmatprep.mubr.bf16.mxu0 0
      %2273 = vmatmul.mubr.bf16.gmra.mxu0 %v2176
      %v2274 = vpop.f32.mrf.mxu0
      %v2275 = vadd.f32 0.0, %v2274
      %v2276 = vpop.f32.mrf.mxu0
      %v2277 = vpop.f32.mrf.mxu0
      %v2278 = vadd.f32 0.0, %v2277
      %v2279 = vpop.f32.mrf.mxu0
      %2280 = vmatprep.mubr.bf16.mxu0 0
      %2281 = vmatmul.mubr.bf16.gmra.mxu0 %v2177
      %v2282 = vpop.f32.mrf.mxu0
      %v2283 = vadd.f32 0.0, %v2282
      %v2284 = vpop.f32.mrf.mxu0
      %v2285 = vpop.f32.mrf.mxu0
      %v2286 = vadd.f32 0.0, %v2285
      %v2287 = vpop.f32.mrf.mxu0
      %2288 = vmatprep.mubr.bf16.mxu0 0
      %2289 = vmatmul.mubr.bf16.gmra.mxu0 %v2178
      %v2290 = vpop.f32.mrf.mxu0
      %v2291 = vadd.f32 0.0, %v2290
      %v2292 = vpop.f32.mrf.mxu0
      %v2293 = vpop.f32.mrf.mxu0
      %v2294 = vadd.f32 0.0, %v2293
      %v2295 = vpop.f32.mrf.mxu0
      %2296 = vmatprep.mubr.bf16.mxu0 0
      %2297 = vmatmul.mubr.bf16.gmra.mxu0 %v2179
      %v2298 = vpop.f32.mrf.mxu0
      %v2299 = vadd.f32 0.0, %v2298
      %v2300 = vpop.f32.mrf.mxu0
      %v2301 = vpop.f32.mrf.mxu0
      %v2302 = vadd.f32 0.0, %v2301
      %v2303 = vpop.f32.mrf.mxu0
      %2304 = vmatprep.mubr.bf16.mxu0 0
      %2305 = vmatmul.mubr.bf16.gmra.mxu0 %v2180
      %v2306 = vpop.f32.mrf.mxu0
      %v2307 = vadd.f32 0.0, %v2306
      %v2308 = vpop.f32.mrf.mxu0
      %v2309 = vpop.f32.mrf.mxu0
      %v2310 = vadd.f32 0.0, %v2309
      %v2311 = vpop.f32.mrf.mxu0
      %2312 = vmatprep.mubr.bf16.mxu0 0
      %2313 = vmatmul.mubr.bf16.gmra.mxu0 %v2181
      %v2314 = vpop.f32.mrf.mxu0
      %v2315 = vadd.f32 0.0, %v2314
      %v2316 = vpop.f32.mrf.mxu0
      %v2317 = vpop.f32.mrf.mxu0
      %v2318 = vadd.f32 0.0, %v2317
      %v2319 = vpop.f32.mrf.mxu0
      %2320 = vmatprep.mubr.bf16.mxu0 0
      %2321 = vmatmul.mubr.bf16.gmra.mxu0 %v2182
      %v2322 = vpop.f32.mrf.mxu0
      %v2323 = vadd.f32 0.0, %v2322
      %v2324 = vpop.f32.mrf.mxu0
      %v2325 = vpop.f32.mrf.mxu0
      %v2326 = vadd.f32 0.0, %v2325
      %v2327 = vpop.f32.mrf.mxu0
      %2328 = vmatprep.mubr.bf16.mxu0 0
      %2329 = vmatmul.mubr.bf16.gmra.mxu0 %v2183
      %v2330 = vpop.f32.mrf.mxu0
      %v2331 = vadd.f32 0.0, %v2330
      %v2332 = vpop.f32.mrf.mxu0
      %v2333 = vpop.f32.mrf.mxu0
      %v2334 = vadd.f32 0.0, %v2333
      %v2335 = vpop.f32.mrf.mxu0
      %2336 = vdwg.mxu0
      %v2353 = vunpack.c.l.b16 %v1911
      %v2354 = vunpack.c.l.b16 %v1912
      %v2355 = vunpack.c.l.b16 %v1914
      %v2356 = vunpack.c.l.b16 %v1915
      %v2357 = vunpack.c.l.b16 %v1917
      %v2358 = vunpack.c.l.b16 %v1918
      %v2359 = vunpack.c.l.b16 %v1920
      %v2360 = vunpack.c.l.b16 %v1921
      %v2361 = vunpack.c.l.b16 %v1923
      %v2362 = vunpack.c.l.b16 %v1924
      %v2363 = vunpack.c.l.b16 %v1926
      %v2364 = vunpack.c.l.b16 %v1927
      %v2365 = vunpack.c.l.b16 %v1929
      %v2366 = vunpack.c.l.b16 %v1930
      %v2367 = vunpack.c.l.b16 %v1932
      %v2368 = vunpack.c.l.b16 %v1933
      %v2369 = vpack.c.b16 %v2354, %v2353
      %v2370 = vpack.c.b16 %v2356, %v2355
      %v2371 = vpack.c.b16 %v2358, %v2357
      %v2372 = vpack.c.b16 %v2360, %v2359
      %v2373 = vpack.c.b16 %v2362, %v2361
      %v2374 = vpack.c.b16 %v2364, %v2363
      %v2375 = vpack.c.b16 %v2366, %v2365
      %v2376 = vpack.c.b16 %v2368, %v2367
      %v2401 = vunpack.c.l.b16 %v1935
      %v2402 = vunpack.c.l.b16 %v1936
      %v2403 = vunpack.c.l.b16 %v1937
      %v2404 = vunpack.c.l.b16 %v1938
      %v2405 = vunpack.c.l.b16 %v1939
      %v2406 = vunpack.c.l.b16 %v1940
      %v2407 = vunpack.c.l.b16 %v1941
      %v2408 = vunpack.c.l.b16 %v1942
      %v2409 = vunpack.c.l.b16 %v1943
      %v2410 = vunpack.c.l.b16 %v1944
      %v2411 = vunpack.c.l.b16 %v1945
      %v2412 = vunpack.c.l.b16 %v1946
      %v2413 = vunpack.c.l.b16 %v1947
      %v2414 = vunpack.c.l.b16 %v1948
      %v2415 = vunpack.c.l.b16 %v1949
      %v2416 = vunpack.c.l.b16 %v1950
      %v2417 = vpack.c.b16 %v2402, %v2401
      %v2418 = vpack.c.b16 %v2404, %v2403
      %v2419 = vpack.c.b16 %v2406, %v2405
      %v2420 = vpack.c.b16 %v2408, %v2407
      %v2421 = vpack.c.b16 %v2410, %v2409
      %v2422 = vpack.c.b16 %v2412, %v2411
      %v2423 = vpack.c.b16 %v2414, %v2413
      %v2424 = vpack.c.b16 %v2416, %v2415
      %2433 = vmatprep.subr.bf16.mxu0 0
      %2434 = vmatpush1.bf16.msra.mxu0 %v2424
      %2435 = vmatprep.subr.bf16.mxu0 0
      %2436 = vmatpush1.bf16.msra.mxu0 %v2423
      %2437 = vmatprep.subr.bf16.mxu0 0
      %2438 = vmatpush1.bf16.msra.mxu0 %v2422
      %2439 = vmatprep.subr.bf16.mxu0 0
      %2440 = vmatpush1.bf16.msra.mxu0 %v2421
      %2441 = vmatprep.subr.bf16.mxu0 0
      %2442 = vmatpush1.bf16.msra.mxu0 %v2420
      %2443 = vmatprep.subr.bf16.mxu0 0
      %2444 = vmatpush1.bf16.msra.mxu0 %v2419
      %2445 = vmatprep.subr.bf16.mxu0 0
      %2446 = vmatpush1.bf16.msra.mxu0 %v2418
      %2447 = vmatprep.subr.bf16.mxu0 0
      %2448 = vmatpush1.bf16.msra.mxu0 %v2417
      %2449 = vmatprep.subr.bf16.mxu0 0
      %2450 = vmatpush2.bf16.msra.mxu0 0
      %2451 = vmatprep.subr.bf16.mxu0 0
      %2452 = vmatpush2.bf16.msra.mxu0 0
      %2453 = vmatprep.subr.bf16.mxu0 0
      %2454 = vmatpush2.bf16.msra.mxu0 0
      %2455 = vmatprep.subr.bf16.mxu0 0
      %2456 = vmatpush2.bf16.msra.mxu0 0
      %2457 = vmatprep.subr.bf16.mxu0 0
      %2458 = vmatpush2.bf16.msra.mxu0 0
      %2459 = vmatprep.subr.bf16.mxu0 0
      %2460 = vmatpush2.bf16.msra.mxu0 0
      %2461 = vmatprep.subr.bf16.mxu0 0
      %2462 = vmatpush2.bf16.msra.mxu0 0
      %2463 = vmatprep.subr.bf16.mxu0 0
      %2464 = vmatpush2.bf16.msra.mxu0 0
      %2465 = vmatprep.mubr.bf16.mxu0 0
      %2466 = vmatmul.mubr.bf16.gmra.mxu0 %v2369
      %v2467 = vpop.f32.mrf.mxu0
      %v2468 = vadd.f32 %v2275, %v2467
      %v2469 = vpop.f32.mrf.mxu0
      %v2470 = vpop.f32.mrf.mxu0
      %v2471 = vadd.f32 %v2278, %v2470
      %v2472 = vpop.f32.mrf.mxu0
      %2473 = vmatprep.mubr.bf16.mxu0 0
      %2474 = vmatmul.mubr.bf16.gmra.mxu0 %v2370
      %v2475 = vpop.f32.mrf.mxu0
      %v2476 = vadd.f32 %v2283, %v2475
      %v2477 = vpop.f32.mrf.mxu0
      %v2478 = vpop.f32.mrf.mxu0
      %v2479 = vadd.f32 %v2286, %v2478
      %v2480 = vpop.f32.mrf.mxu0
      %2481 = vmatprep.mubr.bf16.mxu0 0
      %2482 = vmatmul.mubr.bf16.gmra.mxu0 %v2371
      %v2483 = vpop.f32.mrf.mxu0
      %v2484 = vadd.f32 %v2291, %v2483
      %v2485 = vpop.f32.mrf.mxu0
      %v2486 = vpop.f32.mrf.mxu0
      %v2487 = vadd.f32 %v2294, %v2486
      %v2488 = vpop.f32.mrf.mxu0
      %2489 = vmatprep.mubr.bf16.mxu0 0
      %2490 = vmatmul.mubr.bf16.gmra.mxu0 %v2372
      %v2491 = vpop.f32.mrf.mxu0
      %v2492 = vadd.f32 %v2299, %v2491
      %v2493 = vpop.f32.mrf.mxu0
      %v2494 = vpop.f32.mrf.mxu0
      %v2495 = vadd.f32 %v2302, %v2494
      %v2496 = vpop.f32.mrf.mxu0
      %2497 = vmatprep.mubr.bf16.mxu0 0
      %2498 = vmatmul.mubr.bf16.gmra.mxu0 %v2373
      %v2499 = vpop.f32.mrf.mxu0
      %v2500 = vadd.f32 %v2307, %v2499
      %v2501 = vpop.f32.mrf.mxu0
      %v2502 = vpop.f32.mrf.mxu0
      %v2503 = vadd.f32 %v2310, %v2502
      %v2504 = vpop.f32.mrf.mxu0
      %2505 = vmatprep.mubr.bf16.mxu0 0
      %2506 = vmatmul.mubr.bf16.gmra.mxu0 %v2374
      %v2507 = vpop.f32.mrf.mxu0
      %v2508 = vadd.f32 %v2315, %v2507
      %v2509 = vpop.f32.mrf.mxu0
      %v2510 = vpop.f32.mrf.mxu0
      %v2511 = vadd.f32 %v2318, %v2510
      %v2512 = vpop.f32.mrf.mxu0
      %2513 = vmatprep.mubr.bf16.mxu0 0
      %2514 = vmatmul.mubr.bf16.gmra.mxu0 %v2375
      %v2515 = vpop.f32.mrf.mxu0
      %v2516 = vadd.f32 %v2323, %v2515
      %v2517 = vpop.f32.mrf.mxu0
      %v2518 = vpop.f32.mrf.mxu0
      %v2519 = vadd.f32 %v2326, %v2518
      %v2520 = vpop.f32.mrf.mxu0
      %2521 = vmatprep.mubr.bf16.mxu0 0
      %2522 = vmatmul.mubr.bf16.gmra.mxu0 %v2376
      %v2523 = vpop.f32.mrf.mxu0
      %v2524 = vadd.f32 %v2331, %v2523
      %v2525 = vpop.f32.mrf.mxu0
      %v2526 = vpop.f32.mrf.mxu0
      %v2527 = vadd.f32 %v2334, %v2526
      %v2528 = vpop.f32.mrf.mxu0
      %2529 = vdwg.mxu0
      %v2538 = vrot.slane %v1911, 5
      %v2539 = vrot.slane %v2538, 4
      %v2540 = vrot.slane %v1912, 5
      %v2541 = vsel %vm950, %v2539, %v2540
      %v2542 = vrot.slane %v2540, 4
      %v2543 = vrot.slane %v1913, 5
      %v2544 = vsel %vm950, %v2542, %v2543
      %v2545 = vrot.slane %v1914, 5
      %v2546 = vrot.slane %v2545, 4
      %v2547 = vrot.slane %v1915, 5
      %v2548 = vsel %vm950, %v2546, %v2547
      %v2549 = vrot.slane %v2547, 4
      %v2550 = vrot.slane %v1916, 5
      %v2551 = vsel %vm950, %v2549, %v2550
      %v2552 = vrot.slane %v1917, 5
      %v2553 = vrot.slane %v2552, 4
      %v2554 = vrot.slane %v1918, 5
      %v2555 = vsel %vm950, %v2553, %v2554
      %v2556 = vrot.slane %v2554, 4
      %v2557 = vrot.slane %v1919, 5
      %v2558 = vsel %vm950, %v2556, %v2557
      %v2559 = vrot.slane %v1920, 5
      %v2560 = vrot.slane %v2559, 4
      %v2561 = vrot.slane %v1921, 5
      %v2562 = vsel %vm950, %v2560, %v2561
      %v2563 = vrot.slane %v2561, 4
      %v2564 = vrot.slane %v1922, 5
      %v2565 = vsel %vm950, %v2563, %v2564
      %v2566 = vrot.slane %v1923, 5
      %v2567 = vrot.slane %v2566, 4
      %v2568 = vrot.slane %v1924, 5
      %v2569 = vsel %vm950, %v2567, %v2568
      %v2570 = vrot.slane %v2568, 4
      %v2571 = vrot.slane %v1925, 5
      %v2572 = vsel %vm950, %v2570, %v2571
      %v2573 = vrot.slane %v1926, 5
      %v2574 = vrot.slane %v2573, 4
      %v2575 = vrot.slane %v1927, 5
      %v2576 = vsel %vm950, %v2574, %v2575
      %v2577 = vrot.slane %v2575, 4
      %v2578 = vrot.slane %v1928, 5
      %v2579 = vsel %vm950, %v2577, %v2578
      %v2580 = vrot.slane %v1929, 5
      %v2581 = vrot.slane %v2580, 4
      %v2582 = vrot.slane %v1930, 5
      %v2583 = vsel %vm950, %v2581, %v2582
      %v2584 = vrot.slane %v2582, 4
      %v2585 = vrot.slane %v1931, 5
      %v2586 = vsel %vm950, %v2584, %v2585
      %v2587 = vrot.slane %v1932, 5
      %v2588 = vrot.slane %v2587, 4
      %v2589 = vrot.slane %v1933, 5
      %v2590 = vsel %vm950, %v2588, %v2589
      %v2591 = vrot.slane %v2589, 4
      %v2592 = vrot.slane %v1934, 5
      %v2593 = vsel %vm950, %v2591, %v2592
      %s2594 = scalar_lea.vmem %s3, 128
      %v2595 = vld [vmem:[%s2594] sm:$0xf]
      %v2596 = vld [vmem:[%s2594 + $0x4] sm:$0xf]
      %v2597 = vld [vmem:[%s2594 + $0x8] sm:$0xf]
      %v2598 = vld [vmem:[%s2594 + $0xc] sm:$0xf]
      %v2599 = vld [vmem:[%s2594 + $0x10] sm:$0xf]
      %v2600 = vld [vmem:[%s2594 + $0x14] sm:$0xf]
      %v2601 = vld [vmem:[%s2594 + $0x18] sm:$0xf]
      %v2602 = vld [vmem:[%s2594 + $0x1c] sm:$0xf]
      %v2603 = vld [vmem:[%s2594 + $0x20] sm:$0xf]
      %v2604 = vld [vmem:[%s2594 + $0x24] sm:$0xf]
      %v2605 = vld [vmem:[%s2594 + $0x28] sm:$0xf]
      %v2606 = vld [vmem:[%s2594 + $0x2c] sm:$0xf]
      %v2607 = vld [vmem:[%s2594 + $0x30] sm:$0xf]
      %v2608 = vld [vmem:[%s2594 + $0x34] sm:$0xf]
      %v2609 = vld [vmem:[%s2594 + $0x38] sm:$0xf]
      %v2610 = vld [vmem:[%s2594 + $0x3c] sm:$0xf]
      %v2611 = vunpack.c.l.b16 %v2541
      %v2612 = vunpack.c.l.b16 %v2544
      %v2613 = vunpack.c.l.b16 %v2548
      %v2614 = vunpack.c.l.b16 %v2551
      %v2615 = vunpack.c.l.b16 %v2555
      %v2616 = vunpack.c.l.b16 %v2558
      %v2617 = vunpack.c.l.b16 %v2562
      %v2618 = vunpack.c.l.b16 %v2565
      %v2619 = vunpack.c.l.b16 %v2569
      %v2620 = vunpack.c.l.b16 %v2572
      %v2621 = vunpack.c.l.b16 %v2576
      %v2622 = vunpack.c.l.b16 %v2579
      %v2623 = vunpack.c.l.b16 %v2583
      %v2624 = vunpack.c.l.b16 %v2586
      %v2625 = vunpack.c.l.b16 %v2590
      %v2626 = vunpack.c.l.b16 %v2593
      %v2627 = vpack.c.b16 %v2612, %v2611
      %v2628 = vpack.c.b16 %v2614, %v2613
      %v2629 = vpack.c.b16 %v2616, %v2615
      %v2630 = vpack.c.b16 %v2618, %v2617
      %v2631 = vpack.c.b16 %v2620, %v2619
      %v2632 = vpack.c.b16 %v2622, %v2621
      %v2633 = vpack.c.b16 %v2624, %v2623
      %v2634 = vpack.c.b16 %v2626, %v2625
      %v2659 = vunpack.c.l.b16 %v2595
      %v2660 = vunpack.c.l.b16 %v2596
      %v2661 = vunpack.c.l.b16 %v2597
      %v2662 = vunpack.c.l.b16 %v2598
      %v2663 = vunpack.c.l.b16 %v2599
      %v2664 = vunpack.c.l.b16 %v2600
      %v2665 = vunpack.c.l.b16 %v2601
      %v2666 = vunpack.c.l.b16 %v2602
      %v2667 = vunpack.c.l.b16 %v2603
      %v2668 = vunpack.c.l.b16 %v2604
      %v2669 = vunpack.c.l.b16 %v2605
      %v2670 = vunpack.c.l.b16 %v2606
      %v2671 = vunpack.c.l.b16 %v2607
      %v2672 = vunpack.c.l.b16 %v2608
      %v2673 = vunpack.c.l.b16 %v2609
      %v2674 = vunpack.c.l.b16 %v2610
      %v2675 = vpack.c.b16 %v2660, %v2659
      %v2676 = vpack.c.b16 %v2662, %v2661
      %v2677 = vpack.c.b16 %v2664, %v2663
      %v2678 = vpack.c.b16 %v2666, %v2665
      %v2679 = vpack.c.b16 %v2668, %v2667
      %v2680 = vpack.c.b16 %v2670, %v2669
      %v2681 = vpack.c.b16 %v2672, %v2671
      %v2682 = vpack.c.b16 %v2674, %v2673
      %2691 = vmatprep.subr.bf16.mxu0 0
      %2692 = vmatpush1.bf16.msra.mxu0 %v2682
      %2693 = vmatprep.subr.bf16.mxu0 0
      %2694 = vmatpush1.bf16.msra.mxu0 %v2681
      %2695 = vmatprep.subr.bf16.mxu0 0
      %2696 = vmatpush1.bf16.msra.mxu0 %v2680
      %2697 = vmatprep.subr.bf16.mxu0 0
      %2698 = vmatpush1.bf16.msra.mxu0 %v2679
      %2699 = vmatprep.subr.bf16.mxu0 0
      %2700 = vmatpush1.bf16.msra.mxu0 %v2678
      %2701 = vmatprep.subr.bf16.mxu0 0
      %2702 = vmatpush1.bf16.msra.mxu0 %v2677
      %2703 = vmatprep.subr.bf16.mxu0 0
      %2704 = vmatpush1.bf16.msra.mxu0 %v2676
      %2705 = vmatprep.subr.bf16.mxu0 0
      %2706 = vmatpush1.bf16.msra.mxu0 %v2675
      %2707 = vmatprep.subr.bf16.mxu0 0
      %2708 = vmatpush2.bf16.msra.mxu0 0
      %2709 = vmatprep.subr.bf16.mxu0 0
      %2710 = vmatpush2.bf16.msra.mxu0 0
      %2711 = vmatprep.subr.bf16.mxu0 0
      %2712 = vmatpush2.bf16.msra.mxu0 0
      %2713 = vmatprep.subr.bf16.mxu0 0
      %2714 = vmatpush2.bf16.msra.mxu0 0
      %2715 = vmatprep.subr.bf16.mxu0 0
      %2716 = vmatpush2.bf16.msra.mxu0 0
      %2717 = vmatprep.subr.bf16.mxu0 0
      %2718 = vmatpush2.bf16.msra.mxu0 0
      %2719 = vmatprep.subr.bf16.mxu0 0
      %2720 = vmatpush2.bf16.msra.mxu0 0
      %2721 = vmatprep.subr.bf16.mxu0 0
      %2722 = vmatpush2.bf16.msra.mxu0 0
      %2723 = vmatprep.mubr.bf16.mxu0 0
      %2724 = vmatmul.mubr.bf16.gmra.mxu0 %v2627
      %v2725 = vpop.f32.mrf.mxu0
      %v2726 = vadd.f32 0.0, %v2725
      %v2727 = vpop.f32.mrf.mxu0
      %v2728 = vpop.f32.mrf.mxu0
      %v2729 = vadd.f32 0.0, %v2728
      %v2730 = vpop.f32.mrf.mxu0
      %2731 = vmatprep.mubr.bf16.mxu0 0
      %2732 = vmatmul.mubr.bf16.gmra.mxu0 %v2628
      %v2733 = vpop.f32.mrf.mxu0
      %v2734 = vadd.f32 0.0, %v2733
      %v2735 = vpop.f32.mrf.mxu0
      %v2736 = vpop.f32.mrf.mxu0
      %v2737 = vadd.f32 0.0, %v2736
      %v2738 = vpop.f32.mrf.mxu0
      %2739 = vmatprep.mubr.bf16.mxu0 0
      %2740 = vmatmul.mubr.bf16.gmra.mxu0 %v2629
      %v2741 = vpop.f32.mrf.mxu0
      %v2742 = vadd.f32 0.0, %v2741
      %v2743 = vpop.f32.mrf.mxu0
      %v2744 = vpop.f32.mrf.mxu0
      %v2745 = vadd.f32 0.0, %v2744
      %v2746 = vpop.f32.mrf.mxu0
      %2747 = vmatprep.mubr.bf16.mxu0 0
      %2748 = vmatmul.mubr.bf16.gmra.mxu0 %v2630
      %v2749 = vpop.f32.mrf.mxu0
      %v2750 = vadd.f32 0.0, %v2749
      %v2751 = vpop.f32.mrf.mxu0
      %v2752 = vpop.f32.mrf.mxu0
      %v2753 = vadd.f32 0.0, %v2752
      %v2754 = vpop.f32.mrf.mxu0
      %2755 = vmatprep.mubr.bf16.mxu0 0
      %2756 = vmatmul.mubr.bf16.gmra.mxu0 %v2631
      %v2757 = vpop.f32.mrf.mxu0
      %v2758 = vadd.f32 0.0, %v2757
      %v2759 = vpop.f32.mrf.mxu0
      %v2760 = vpop.f32.mrf.mxu0
      %v2761 = vadd.f32 0.0, %v2760
      %v2762 = vpop.f32.mrf.mxu0
      %2763 = vmatprep.mubr.bf16.mxu0 0
      %2764 = vmatmul.mubr.bf16.gmra.mxu0 %v2632
      %v2765 = vpop.f32.mrf.mxu0
      %v2766 = vadd.f32 0.0, %v2765
      %v2767 = vpop.f32.mrf.mxu0
      %v2768 = vpop.f32.mrf.mxu0
      %v2769 = vadd.f32 0.0, %v2768
      %v2770 = vpop.f32.mrf.mxu0
      %2771 = vmatprep.mubr.bf16.mxu0 0
      %2772 = vmatmul.mubr.bf16.gmra.mxu0 %v2633
      %v2773 = vpop.f32.mrf.mxu0
      %v2774 = vadd.f32 0.0, %v2773
      %v2775 = vpop.f32.mrf.mxu0
      %v2776 = vpop.f32.mrf.mxu0
      %v2777 = vadd.f32 0.0, %v2776
      %v2778 = vpop.f32.mrf.mxu0
      %2779 = vmatprep.mubr.bf16.mxu0 0
      %2780 = vmatmul.mubr.bf16.gmra.mxu0 %v2634
      %v2781 = vpop.f32.mrf.mxu0
      %v2782 = vadd.f32 0.0, %v2781
      %v2783 = vpop.f32.mrf.mxu0
      %v2784 = vpop.f32.mrf.mxu0
      %v2785 = vadd.f32 0.0, %v2784
      %v2786 = vpop.f32.mrf.mxu0
      %2787 = vdwg.mxu0
      %v2788 = vadd.f32 %v2468, %v2726
      %v2789 = vadd.f32 %v2471, %v2729
      %v2790 = vadd.f32 %v2476, %v2734
      %v2791 = vadd.f32 %v2479, %v2737
      %v2792 = vadd.f32 %v2484, %v2742
      %v2793 = vadd.f32 %v2487, %v2745
      %v2794 = vadd.f32 %v2492, %v2750
      %v2795 = vadd.f32 %v2495, %v2753
      %v2796 = vadd.f32 %v2500, %v2758
      %v2797 = vadd.f32 %v2503, %v2761
      %v2798 = vadd.f32 %v2508, %v2766
      %v2799 = vadd.f32 %v2511, %v2769
      %v2800 = vadd.f32 %v2516, %v2774
      %v2801 = vadd.f32 %v2519, %v2777
      %v2802 = vadd.f32 %v2524, %v2782
      %v2803 = vadd.f32 %v2527, %v2785
      %v2804 = vrot.slane %v1952, 5
      %v2805 = vrot.slane %v1955, 6
      %v2806 = vor.u32 %v2804, %v2805
      %v2807 = vrot.slane %v2806, 4
      %v2808 = vrot.slane %v1965, 5
      %v2809 = vrot.slane %v1961, 6
      %v2810 = vor.u32 %v2808, %v2809
      %v2811 = vsel %vm1219, %v2807, %v2810
      %v2812 = vrot.slane %v2810, 4
      %v2813 = vshrl.u32 %v1913, 16
      %v2815 = vrot.slane %v2813, 5
      %v2816 = vrot.slane %v1971, 6
      %v2817 = vor.u32 %v2815, %v2816
      %v2818 = vsel %vm1219, %v2812, %v2817
      %v2819 = vrot.slane %v1976, 5
      %v2820 = vrot.slane %v1979, 6
      %v2821 = vor.u32 %v2819, %v2820
      %v2822 = vrot.slane %v2821, 4
      %v2823 = vrot.slane %v1989, 5
      %v2824 = vrot.slane %v1985, 6
      %v2825 = vor.u32 %v2823, %v2824
      %v2826 = vsel %vm1219, %v2822, %v2825
      %v2827 = vrot.slane %v2825, 4
      %v2828 = vshrl.u32 %v1916, 16
      %v2830 = vrot.slane %v2828, 5
      %v2831 = vrot.slane %v1995, 6
      %v2832 = vor.u32 %v2830, %v2831
      %v2833 = vsel %vm1219, %v2827, %v2832
      %v2834 = vrot.slane %v2000, 5
      %v2835 = vrot.slane %v2003, 6
      %v2836 = vor.u32 %v2834, %v2835
      %v2837 = vrot.slane %v2836, 4
      %v2838 = vrot.slane %v2013, 5
      %v2839 = vrot.slane %v2009, 6
      %v2840 = vor.u32 %v2838, %v2839
      %v2841 = vsel %vm1219, %v2837, %v2840
      %v2842 = vrot.slane %v2840, 4
      %v2843 = vshrl.u32 %v1919, 16
      %v2845 = vrot.slane %v2843, 5
      %v2846 = vrot.slane %v2019, 6
      %v2847 = vor.u32 %v2845, %v2846
      %v2848 = vsel %vm1219, %v2842, %v2847
      %v2849 = vrot.slane %v2024, 5
      %v2850 = vrot.slane %v2027, 6
      %v2851 = vor.u32 %v2849, %v2850
      %v2852 = vrot.slane %v2851, 4
      %v2853 = vrot.slane %v2037, 5
      %v2854 = vrot.slane %v2033, 6
      %v2855 = vor.u32 %v2853, %v2854
      %v2856 = vsel %vm1219, %v2852, %v2855
      %v2857 = vrot.slane %v2855, 4
      %v2858 = vshrl.u32 %v1922, 16
      %v2860 = vrot.slane %v2858, 5
      %v2861 = vrot.slane %v2043, 6
      %v2862 = vor.u32 %v2860, %v2861
      %v2863 = vsel %vm1219, %v2857, %v2862
      %v2864 = vrot.slane %v2048, 5
      %v2865 = vrot.slane %v2051, 6
      %v2866 = vor.u32 %v2864, %v2865
      %v2867 = vrot.slane %v2866, 4
      %v2868 = vrot.slane %v2061, 5
      %v2869 = vrot.slane %v2057, 6
      %v2870 = vor.u32 %v2868, %v2869
      %v2871 = vsel %vm1219, %v2867, %v2870
      %v2872 = vrot.slane %v2870, 4
      %v2873 = vshrl.u32 %v1925, 16
      %v2875 = vrot.slane %v2873, 5
      %v2876 = vrot.slane %v2067, 6
      %v2877 = vor.u32 %v2875, %v2876
      %v2878 = vsel %vm1219, %v2872, %v2877
      %v2879 = vrot.slane %v2072, 5
      %v2880 = vrot.slane %v2075, 6
      %v2881 = vor.u32 %v2879, %v2880
      %v2882 = vrot.slane %v2881, 4
      %v2883 = vrot.slane %v2085, 5
      %v2884 = vrot.slane %v2081, 6
      %v2885 = vor.u32 %v2883, %v2884
      %v2886 = vsel %vm1219, %v2882, %v2885
      %v2887 = vrot.slane %v2885, 4
      %v2888 = vshrl.u32 %v1928, 16
      %v2890 = vrot.slane %v2888, 5
      %v2891 = vrot.slane %v2091, 6
      %v2892 = vor.u32 %v2890, %v2891
      %v2893 = vsel %vm1219, %v2887, %v2892
      %v2894 = vrot.slane %v2096, 5
      %v2895 = vrot.slane %v2099, 6
      %v2896 = vor.u32 %v2894, %v2895
      %v2897 = vrot.slane %v2896, 4
      %v2898 = vrot.slane %v2109, 5
      %v2899 = vrot.slane %v2105, 6
      %v2900 = vor.u32 %v2898, %v2899
      %v2901 = vsel %vm1219, %v2897, %v2900
      %v2902 = vrot.slane %v2900, 4
      %v2903 = vshrl.u32 %v1931, 16
      %v2905 = vrot.slane %v2903, 5
      %v2906 = vrot.slane %v2115, 6
      %v2907 = vor.u32 %v2905, %v2906
      %v2908 = vsel %vm1219, %v2902, %v2907
      %v2909 = vrot.slane %v2120, 5
      %v2910 = vrot.slane %v2123, 6
      %v2911 = vor.u32 %v2909, %v2910
      %v2912 = vrot.slane %v2911, 4
      %v2913 = vrot.slane %v2133, 5
      %v2914 = vrot.slane %v2129, 6
      %v2915 = vor.u32 %v2913, %v2914
      %v2916 = vsel %vm1219, %v2912, %v2915
      %v2917 = vrot.slane %v2915, 4
      %v2918 = vshrl.u32 %v1934, 16
      %v2920 = vrot.slane %v2918, 5
      %v2921 = vrot.slane %v2139, 6
      %v2922 = vor.u32 %v2920, %v2921
      %v2923 = vsel %vm1219, %v2917, %v2922
      %s2924 = scalar_lea.vmem %s3, 192
      %v2925 = vld [vmem:[%s2924] sm:$0xf]
      %v2926 = vld [vmem:[%s2924 + $0x4] sm:$0xf]
      %v2927 = vld [vmem:[%s2924 + $0x8] sm:$0xf]
      %v2928 = vld [vmem:[%s2924 + $0xc] sm:$0xf]
      %v2929 = vld [vmem:[%s2924 + $0x10] sm:$0xf]
      %v2930 = vld [vmem:[%s2924 + $0x14] sm:$0xf]
      %v2931 = vld [vmem:[%s2924 + $0x18] sm:$0xf]
      %v2932 = vld [vmem:[%s2924 + $0x1c] sm:$0xf]
      %v2933 = vld [vmem:[%s2924 + $0x20] sm:$0xf]
      %v2934 = vld [vmem:[%s2924 + $0x24] sm:$0xf]
      %v2935 = vld [vmem:[%s2924 + $0x28] sm:$0xf]
      %v2936 = vld [vmem:[%s2924 + $0x2c] sm:$0xf]
      %v2937 = vld [vmem:[%s2924 + $0x30] sm:$0xf]
      %v2938 = vld [vmem:[%s2924 + $0x34] sm:$0xf]
      %v2939 = vld [vmem:[%s2924 + $0x38] sm:$0xf]
      %v2940 = vld [vmem:[%s2924 + $0x3c] sm:$0xf]
      %v2941 = vunpack.c.l.b16 %v2811
      %v2942 = vunpack.c.l.b16 %v2818
      %v2943 = vunpack.c.l.b16 %v2826
      %v2944 = vunpack.c.l.b16 %v2833
      %v2945 = vunpack.c.l.b16 %v2841
      %v2946 = vunpack.c.l.b16 %v2848
      %v2947 = vunpack.c.l.b16 %v2856
      %v2948 = vunpack.c.l.b16 %v2863
      %v2949 = vunpack.c.l.b16 %v2871
      %v2950 = vunpack.c.l.b16 %v2878
      %v2951 = vunpack.c.l.b16 %v2886
      %v2952 = vunpack.c.l.b16 %v2893
      %v2953 = vunpack.c.l.b16 %v2901
      %v2954 = vunpack.c.l.b16 %v2908
      %v2955 = vunpack.c.l.b16 %v2916
      %v2956 = vunpack.c.l.b16 %v2923
      %v2957 = vpack.c.b16 %v2942, %v2941
      %v2958 = vpack.c.b16 %v2944, %v2943
      %v2959 = vpack.c.b16 %v2946, %v2945
      %v2960 = vpack.c.b16 %v2948, %v2947
      %v2961 = vpack.c.b16 %v2950, %v2949
      %v2962 = vpack.c.b16 %v2952, %v2951
      %v2963 = vpack.c.b16 %v2954, %v2953
      %v2964 = vpack.c.b16 %v2956, %v2955
      %v2989 = vunpack.c.l.b16 %v2925
      %v2990 = vunpack.c.l.b16 %v2926
      %v2991 = vunpack.c.l.b16 %v2927
      %v2992 = vunpack.c.l.b16 %v2928
      %v2993 = vunpack.c.l.b16 %v2929
      %v2994 = vunpack.c.l.b16 %v2930
      %v2995 = vunpack.c.l.b16 %v2931
      %v2996 = vunpack.c.l.b16 %v2932
      %v2997 = vunpack.c.l.b16 %v2933
      %v2998 = vunpack.c.l.b16 %v2934
      %v2999 = vunpack.c.l.b16 %v2935
      %v3000 = vunpack.c.l.b16 %v2936
      %v3001 = vunpack.c.l.b16 %v2937
      %v3002 = vunpack.c.l.b16 %v2938
      %v3003 = vunpack.c.l.b16 %v2939
      %v3004 = vunpack.c.l.b16 %v2940
      %v3005 = vpack.c.b16 %v2990, %v2989
      %v3006 = vpack.c.b16 %v2992, %v2991
      %v3007 = vpack.c.b16 %v2994, %v2993
      %v3008 = vpack.c.b16 %v2996, %v2995
      %v3009 = vpack.c.b16 %v2998, %v2997
      %v3010 = vpack.c.b16 %v3000, %v2999
      %v3011 = vpack.c.b16 %v3002, %v3001
      %v3012 = vpack.c.b16 %v3004, %v3003
      %3021 = vmatprep.subr.bf16.mxu0 0
      %3022 = vmatpush1.bf16.msra.mxu0 %v3012
      %3023 = vmatprep.subr.bf16.mxu0 0
      %3024 = vmatpush1.bf16.msra.mxu0 %v3011
      %3025 = vmatprep.subr.bf16.mxu0 0
      %3026 = vmatpush1.bf16.msra.mxu0 %v3010
      %3027 = vmatprep.subr.bf16.mxu0 0
      %3028 = vmatpush1.bf16.msra.mxu0 %v3009
      %3029 = vmatprep.subr.bf16.mxu0 0
      %3030 = vmatpush1.bf16.msra.mxu0 %v3008
      %3031 = vmatprep.subr.bf16.mxu0 0
      %3032 = vmatpush1.bf16.msra.mxu0 %v3007
      %3033 = vmatprep.subr.bf16.mxu0 0
      %3034 = vmatpush1.bf16.msra.mxu0 %v3006
      %3035 = vmatprep.subr.bf16.mxu0 0
      %3036 = vmatpush1.bf16.msra.mxu0 %v3005
      %3037 = vmatprep.subr.bf16.mxu0 0
      %3038 = vmatpush2.bf16.msra.mxu0 0
      %3039 = vmatprep.subr.bf16.mxu0 0
      %3040 = vmatpush2.bf16.msra.mxu0 0
      %3041 = vmatprep.subr.bf16.mxu0 0
      %3042 = vmatpush2.bf16.msra.mxu0 0
      %3043 = vmatprep.subr.bf16.mxu0 0
      %3044 = vmatpush2.bf16.msra.mxu0 0
      %3045 = vmatprep.subr.bf16.mxu0 0
      %3046 = vmatpush2.bf16.msra.mxu0 0
      %3047 = vmatprep.subr.bf16.mxu0 0
      %3048 = vmatpush2.bf16.msra.mxu0 0
      %3049 = vmatprep.subr.bf16.mxu0 0
      %3050 = vmatpush2.bf16.msra.mxu0 0
      %3051 = vmatprep.subr.bf16.mxu0 0
      %3052 = vmatpush2.bf16.msra.mxu0 0
      %3053 = vmatprep.mubr.bf16.mxu0 0
      %3054 = vmatmul.mubr.bf16.gmra.mxu0 %v2957
      %v3055 = vpop.f32.mrf.mxu0
      %v3056 = vadd.f32 0.0, %v3055
      %v3057 = vpop.f32.mrf.mxu0
      %v3058 = vpop.f32.mrf.mxu0
      %v3059 = vadd.f32 0.0, %v3058
      %v3060 = vpop.f32.mrf.mxu0
      %3061 = vmatprep.mubr.bf16.mxu0 0
      %3062 = vmatmul.mubr.bf16.gmra.mxu0 %v2958
      %v3063 = vpop.f32.mrf.mxu0
      %v3064 = vadd.f32 0.0, %v3063
      %v3065 = vpop.f32.mrf.mxu0
      %v3066 = vpop.f32.mrf.mxu0
      %v3067 = vadd.f32 0.0, %v3066
      %v3068 = vpop.f32.mrf.mxu0
      %3069 = vmatprep.mubr.bf16.mxu0 0
      %3070 = vmatmul.mubr.bf16.gmra.mxu0 %v2959
      %v3071 = vpop.f32.mrf.mxu0
      %v3072 = vadd.f32 0.0, %v3071
      %v3073 = vpop.f32.mrf.mxu0
      %v3074 = vpop.f32.mrf.mxu0
      %v3075 = vadd.f32 0.0, %v3074
      %v3076 = vpop.f32.mrf.mxu0
      %3077 = vmatprep.mubr.bf16.mxu0 0
      %3078 = vmatmul.mubr.bf16.gmra.mxu0 %v2960
      %v3079 = vpop.f32.mrf.mxu0
      %v3080 = vadd.f32 0.0, %v3079
      %v3081 = vpop.f32.mrf.mxu0
      %v3082 = vpop.f32.mrf.mxu0
      %v3083 = vadd.f32 0.0, %v3082
      %v3084 = vpop.f32.mrf.mxu0
      %3085 = vmatprep.mubr.bf16.mxu0 0
      %3086 = vmatmul.mubr.bf16.gmra.mxu0 %v2961
      %v3087 = vpop.f32.mrf.mxu0
      %v3088 = vadd.f32 0.0, %v3087
      %v3089 = vpop.f32.mrf.mxu0
      %v3090 = vpop.f32.mrf.mxu0
      %v3091 = vadd.f32 0.0, %v3090
      %v3092 = vpop.f32.mrf.mxu0
      %3093 = vmatprep.mubr.bf16.mxu0 0
      %3094 = vmatmul.mubr.bf16.gmra.mxu0 %v2962
      %v3095 = vpop.f32.mrf.mxu0
      %v3096 = vadd.f32 0.0, %v3095
      %v3097 = vpop.f32.mrf.mxu0
      %v3098 = vpop.f32.mrf.mxu0
      %v3099 = vadd.f32 0.0, %v3098
      %v3100 = vpop.f32.mrf.mxu0
      %3101 = vmatprep.mubr.bf16.mxu0 0
      %3102 = vmatmul.mubr.bf16.gmra.mxu0 %v2963
      %v3103 = vpop.f32.mrf.mxu0
      %v3104 = vadd.f32 0.0, %v3103
      %v3105 = vpop.f32.mrf.mxu0
      %v3106 = vpop.f32.mrf.mxu0
      %v3107 = vadd.f32 0.0, %v3106
      %v3108 = vpop.f32.mrf.mxu0
      %3109 = vmatprep.mubr.bf16.mxu0 0
      %3110 = vmatmul.mubr.bf16.gmra.mxu0 %v2964
      %v3111 = vpop.f32.mrf.mxu0
      %v3112 = vadd.f32 0.0, %v3111
      %v3113 = vpop.f32.mrf.mxu0
      %v3114 = vpop.f32.mrf.mxu0
      %v3115 = vadd.f32 0.0, %v3114
      %v3116 = vpop.f32.mrf.mxu0
      %3117 = vdwg.mxu0
      %v3118 = vadd.f32 %v2788, %v3056
      %v3119 = vadd.f32 %v2789, %v3059
      %v3120 = vadd.f32 %v2790, %v3064
      %v3121 = vadd.f32 %v2791, %v3067
      %v3122 = vadd.f32 %v2792, %v3072
      %v3123 = vadd.f32 %v2793, %v3075
      %v3124 = vadd.f32 %v2794, %v3080
      %v3125 = vadd.f32 %v2795, %v3083
      %v3126 = vadd.f32 %v2796, %v3088
      %v3127 = vadd.f32 %v2797, %v3091
      %v3128 = vadd.f32 %v2798, %v3096
      %v3129 = vadd.f32 %v2799, %v3099
      %v3130 = vadd.f32 %v2800, %v3104
      %v3131 = vadd.f32 %v2801, %v3107
      %v3132 = vadd.f32 %v2802, %v3112
      %v3133 = vadd.f32 %v2803, %v3115
      %v3134 = vrot.slane %v1911, 6
      %v3135 = vrot.slane %v3134, 4
      %v3136 = vrot.slane %v1912, 6
      %v3137 = vsel %vm1552, %v3135, %v3136
      %v3138 = vrot.slane %v3136, 4
      %v3139 = vrot.slane %v1913, 6
      %v3140 = vsel %vm1552, %v3138, %v3139
      %v3141 = vrot.slane %v1914, 6
      %v3142 = vrot.slane %v3141, 4
      %v3143 = vrot.slane %v1915, 6
      %v3144 = vsel %vm1552, %v3142, %v3143
      %v3145 = vrot.slane %v3143, 4
      %v3146 = vrot.slane %v1916, 6
      %v3147 = vsel %vm1552, %v3145, %v3146
      %v3148 = vrot.slane %v1917, 6
      %v3149 = vrot.slane %v3148, 4
      %v3150 = vrot.slane %v1918, 6
      %v3151 = vsel %vm1552, %v3149, %v3150
      %v3152 = vrot.slane %v3150, 4
      %v3153 = vrot.slane %v1919, 6
      %v3154 = vsel %vm1552, %v3152, %v3153
      %v3155 = vrot.slane %v1920, 6
      %v3156 = vrot.slane %v3155, 4
      %v3157 = vrot.slane %v1921, 6
      %v3158 = vsel %vm1552, %v3156, %v3157
      %v3159 = vrot.slane %v3157, 4
      %v3160 = vrot.slane %v1922, 6
      %v3161 = vsel %vm1552, %v3159, %v3160
      %v3162 = vrot.slane %v1923, 6
      %v3163 = vrot.slane %v3162, 4
      %v3164 = vrot.slane %v1924, 6
      %v3165 = vsel %vm1552, %v3163, %v3164
      %v3166 = vrot.slane %v3164, 4
      %v3167 = vrot.slane %v1925, 6
      %v3168 = vsel %vm1552, %v3166, %v3167
      %v3169 = vrot.slane %v1926, 6
      %v3170 = vrot.slane %v3169, 4
      %v3171 = vrot.slane %v1927, 6
      %v3172 = vsel %vm1552, %v3170, %v3171
      %v3173 = vrot.slane %v3171, 4
      %v3174 = vrot.slane %v1928, 6
      %v3175 = vsel %vm1552, %v3173, %v3174
      %v3176 = vrot.slane %v1929, 6
      %v3177 = vrot.slane %v3176, 4
      %v3178 = vrot.slane %v1930, 6
      %v3179 = vsel %vm1552, %v3177, %v3178
      %v3180 = vrot.slane %v3178, 4
      %v3181 = vrot.slane %v1931, 6
      %v3182 = vsel %vm1552, %v3180, %v3181
      %v3183 = vrot.slane %v1932, 6
      %v3184 = vrot.slane %v3183, 4
      %v3185 = vrot.slane %v1933, 6
      %v3186 = vsel %vm1552, %v3184, %v3185
      %v3187 = vrot.slane %v3185, 4
      %v3188 = vrot.slane %v1934, 6
      %v3189 = vsel %vm1552, %v3187, %v3188
      %s3190 = scalar_lea.vmem %s3, 256
      %v3191 = vld [vmem:[%s3190] sm:$0xf]
      %v3192 = vld [vmem:[%s3190 + $0x4] sm:$0xf]
      %v3193 = vld [vmem:[%s3190 + $0x8] sm:$0xf]
      %v3194 = vld [vmem:[%s3190 + $0xc] sm:$0xf]
      %v3195 = vld [vmem:[%s3190 + $0x10] sm:$0xf]
      %v3196 = vld [vmem:[%s3190 + $0x14] sm:$0xf]
      %v3197 = vld [vmem:[%s3190 + $0x18] sm:$0xf]
      %v3198 = vld [vmem:[%s3190 + $0x1c] sm:$0xf]
      %v3199 = vld [vmem:[%s3190 + $0x20] sm:$0xf]
      %v3200 = vld [vmem:[%s3190 + $0x24] sm:$0xf]
      %v3201 = vld [vmem:[%s3190 + $0x28] sm:$0xf]
      %v3202 = vld [vmem:[%s3190 + $0x2c] sm:$0xf]
      %v3203 = vld [vmem:[%s3190 + $0x30] sm:$0xf]
      %v3204 = vld [vmem:[%s3190 + $0x34] sm:$0xf]
      %v3205 = vld [vmem:[%s3190 + $0x38] sm:$0xf]
      %v3206 = vld [vmem:[%s3190 + $0x3c] sm:$0xf]
      %v3207 = vunpack.c.l.b16 %v3137
      %v3208 = vunpack.c.l.b16 %v3140
      %v3209 = vunpack.c.l.b16 %v3144
      %v3210 = vunpack.c.l.b16 %v3147
      %v3211 = vunpack.c.l.b16 %v3151
      %v3212 = vunpack.c.l.b16 %v3154
      %v3213 = vunpack.c.l.b16 %v3158
      %v3214 = vunpack.c.l.b16 %v3161
      %v3215 = vunpack.c.l.b16 %v3165
      %v3216 = vunpack.c.l.b16 %v3168
      %v3217 = vunpack.c.l.b16 %v3172
      %v3218 = vunpack.c.l.b16 %v3175
      %v3219 = vunpack.c.l.b16 %v3179
      %v3220 = vunpack.c.l.b16 %v3182
      %v3221 = vunpack.c.l.b16 %v3186
      %v3222 = vunpack.c.l.b16 %v3189
      %v3223 = vpack.c.b16 %v3208, %v3207
      %v3224 = vpack.c.b16 %v3210, %v3209
      %v3225 = vpack.c.b16 %v3212, %v3211
      %v3226 = vpack.c.b16 %v3214, %v3213
      %v3227 = vpack.c.b16 %v3216, %v3215
      %v3228 = vpack.c.b16 %v3218, %v3217
      %v3229 = vpack.c.b16 %v3220, %v3219
      %v3230 = vpack.c.b16 %v3222, %v3221
      %v3255 = vunpack.c.l.b16 %v3191
      %v3256 = vunpack.c.l.b16 %v3192
      %v3257 = vunpack.c.l.b16 %v3193
      %v3258 = vunpack.c.l.b16 %v3194
      %v3259 = vunpack.c.l.b16 %v3195
      %v3260 = vunpack.c.l.b16 %v3196
      %v3261 = vunpack.c.l.b16 %v3197
      %v3262 = vunpack.c.l.b16 %v3198
      %v3263 = vunpack.c.l.b16 %v3199
      %v3264 = vunpack.c.l.b16 %v3200
      %v3265 = vunpack.c.l.b16 %v3201
      %v3266 = vunpack.c.l.b16 %v3202
      %v3267 = vunpack.c.l.b16 %v3203
      %v3268 = vunpack.c.l.b16 %v3204
      %v3269 = vunpack.c.l.b16 %v3205
      %v3270 = vunpack.c.l.b16 %v3206
      %v3271 = vpack.c.b16 %v3256, %v3255
      %v3272 = vpack.c.b16 %v3258, %v3257
      %v3273 = vpack.c.b16 %v3260, %v3259
      %v3274 = vpack.c.b16 %v3262, %v3261
      %v3275 = vpack.c.b16 %v3264, %v3263
      %v3276 = vpack.c.b16 %v3266, %v3265
      %v3277 = vpack.c.b16 %v3268, %v3267
      %v3278 = vpack.c.b16 %v3270, %v3269
      %3287 = vmatprep.subr.bf16.mxu0 0
      %3288 = vmatpush1.bf16.msra.mxu0 %v3278
      %3289 = vmatprep.subr.bf16.mxu0 0
      %3290 = vmatpush1.bf16.msra.mxu0 %v3277
      %3291 = vmatprep.subr.bf16.mxu0 0
      %3292 = vmatpush1.bf16.msra.mxu0 %v3276
      %3293 = vmatprep.subr.bf16.mxu0 0
      %3294 = vmatpush1.bf16.msra.mxu0 %v3275
      %3295 = vmatprep.subr.bf16.mxu0 0
      %3296 = vmatpush1.bf16.msra.mxu0 %v3274
      %3297 = vmatprep.subr.bf16.mxu0 0
      %3298 = vmatpush1.bf16.msra.mxu0 %v3273
      %3299 = vmatprep.subr.bf16.mxu0 0
      %3300 = vmatpush1.bf16.msra.mxu0 %v3272
      %3301 = vmatprep.subr.bf16.mxu0 0
      %3302 = vmatpush1.bf16.msra.mxu0 %v3271
      %3303 = vmatprep.subr.bf16.mxu0 0
      %3304 = vmatpush2.bf16.msra.mxu0 0
      %3305 = vmatprep.subr.bf16.mxu0 0
      %3306 = vmatpush2.bf16.msra.mxu0 0
      %3307 = vmatprep.subr.bf16.mxu0 0
      %3308 = vmatpush2.bf16.msra.mxu0 0
      %3309 = vmatprep.subr.bf16.mxu0 0
      %3310 = vmatpush2.bf16.msra.mxu0 0
      %3311 = vmatprep.subr.bf16.mxu0 0
      %3312 = vmatpush2.bf16.msra.mxu0 0
      %3313 = vmatprep.subr.bf16.mxu0 0
      %3314 = vmatpush2.bf16.msra.mxu0 0
      %3315 = vmatprep.subr.bf16.mxu0 0
      %3316 = vmatpush2.bf16.msra.mxu0 0
      %3317 = vmatprep.subr.bf16.mxu0 0
      %3318 = vmatpush2.bf16.msra.mxu0 0
      %3319 = vmatprep.mubr.bf16.mxu0 0
      %3320 = vmatmul.mubr.bf16.gmra.mxu0 %v3223
      %v3321 = vpop.f32.mrf.mxu0
      %v3322 = vadd.f32 0.0, %v3321
      %v3323 = vpop.f32.mrf.mxu0
      %v3324 = vpop.f32.mrf.mxu0
      %v3325 = vadd.f32 0.0, %v3324
      %v3326 = vpop.f32.mrf.mxu0
      %3327 = vmatprep.mubr.bf16.mxu0 0
      %3328 = vmatmul.mubr.bf16.gmra.mxu0 %v3224
      %v3329 = vpop.f32.mrf.mxu0
      %v3330 = vadd.f32 0.0, %v3329
      %v3331 = vpop.f32.mrf.mxu0
      %v3332 = vpop.f32.mrf.mxu0
      %v3333 = vadd.f32 0.0, %v3332
      %v3334 = vpop.f32.mrf.mxu0
      %3335 = vmatprep.mubr.bf16.mxu0 0
      %3336 = vmatmul.mubr.bf16.gmra.mxu0 %v3225
      %v3337 = vpop.f32.mrf.mxu0
      %v3338 = vadd.f32 0.0, %v3337
      %v3339 = vpop.f32.mrf.mxu0
      %v3340 = vpop.f32.mrf.mxu0
      %v3341 = vadd.f32 0.0, %v3340
      %v3342 = vpop.f32.mrf.mxu0
      %3343 = vmatprep.mubr.bf16.mxu0 0
      %3344 = vmatmul.mubr.bf16.gmra.mxu0 %v3226
      %v3345 = vpop.f32.mrf.mxu0
      %v3346 = vadd.f32 0.0, %v3345
      %v3347 = vpop.f32.mrf.mxu0
      %v3348 = vpop.f32.mrf.mxu0
      %v3349 = vadd.f32 0.0, %v3348
      %v3350 = vpop.f32.mrf.mxu0
      %3351 = vmatprep.mubr.bf16.mxu0 0
      %3352 = vmatmul.mubr.bf16.gmra.mxu0 %v3227
      %v3353 = vpop.f32.mrf.mxu0
      %v3354 = vadd.f32 0.0, %v3353
      %v3355 = vpop.f32.mrf.mxu0
      %v3356 = vpop.f32.mrf.mxu0
      %v3357 = vadd.f32 0.0, %v3356
      %v3358 = vpop.f32.mrf.mxu0
      %3359 = vmatprep.mubr.bf16.mxu0 0
      %3360 = vmatmul.mubr.bf16.gmra.mxu0 %v3228
      %v3361 = vpop.f32.mrf.mxu0
      %v3362 = vadd.f32 0.0, %v3361
      %v3363 = vpop.f32.mrf.mxu0
      %v3364 = vpop.f32.mrf.mxu0
      %v3365 = vadd.f32 0.0, %v3364
      %v3366 = vpop.f32.mrf.mxu0
      %3367 = vmatprep.mubr.bf16.mxu0 0
      %3368 = vmatmul.mubr.bf16.gmra.mxu0 %v3229
      %v3369 = vpop.f32.mrf.mxu0
      %v3370 = vadd.f32 0.0, %v3369
      %v3371 = vpop.f32.mrf.mxu0
      %v3372 = vpop.f32.mrf.mxu0
      %v3373 = vadd.f32 0.0, %v3372
      %v3374 = vpop.f32.mrf.mxu0
      %3375 = vmatprep.mubr.bf16.mxu0 0
      %3376 = vmatmul.mubr.bf16.gmra.mxu0 %v3230
      %v3377 = vpop.f32.mrf.mxu0
      %v3378 = vadd.f32 0.0, %v3377
      %v3379 = vpop.f32.mrf.mxu0
      %v3380 = vpop.f32.mrf.mxu0
      %v3381 = vadd.f32 0.0, %v3380
      %v3382 = vpop.f32.mrf.mxu0
      %3383 = vdwg.mxu0
      %v3384 = vadd.f32 %v3118, %v3322
      %v3385 = vadd.f32 %v3119, %v3325
      %v3386 = vadd.f32 %v3120, %v3330
      %v3387 = vadd.f32 %v3121, %v3333
      %v3388 = vadd.f32 %v3122, %v3338
      %v3389 = vadd.f32 %v3123, %v3341
      %v3390 = vadd.f32 %v3124, %v3346
      %v3391 = vadd.f32 %v3125, %v3349
      %v3392 = vadd.f32 %v3126, %v3354
      %v3393 = vadd.f32 %v3127, %v3357
      %v3394 = vadd.f32 %v3128, %v3362
      %v3395 = vadd.f32 %v3129, %v3365
      %v3396 = vadd.f32 %v3130, %v3370
      %v3397 = vadd.f32 %v3131, %v3373
      %v3398 = vadd.f32 %v3132, %v3378
      %v3399 = vadd.f32 %v3133, %v3381
      %v3400 = vmax.f32 %v3384, 0.0
      %v3401 = vmax.f32 %v3385, 0.0
      %v3402 = vmax.f32 %v3386, 0.0
      %v3403 = vmax.f32 %v3387, 0.0
      %v3404 = vmax.f32 %v3388, 0.0
      %v3405 = vmax.f32 %v3389, 0.0
      %v3406 = vmax.f32 %v3390, 0.0
      %v3407 = vmax.f32 %v3391, 0.0
      %v3408 = vmax.f32 %v3392, 0.0
      %v3409 = vmax.f32 %v3393, 0.0
      %v3410 = vmax.f32 %v3394, 0.0
      %v3411 = vmax.f32 %v3395, 0.0
      %v3412 = vmax.f32 %v3396, 0.0
      %v3413 = vmax.f32 %v3397, 0.0
      %v3414 = vmax.f32 %v3398, 0.0
      %v3415 = vmax.f32 %v3399, 0.0
      %v3416 = vsel %vm1837, %v3400, 0.0
      %v3417 = vsel %vm1838, %v3401, 0.0
      %v3418 = vsel %vm1837, %v3402, 0.0
      %v3419 = vsel %vm1838, %v3403, 0.0
      %v3420 = vsel %vm1837, %v3404, 0.0
      %v3421 = vsel %vm1838, %v3405, 0.0
      %v3422 = vsel %vm1837, %v3406, 0.0
      %v3423 = vsel %vm1838, %v3407, 0.0
      %v3424 = vsel %vm1837, %v3408, 0.0
      %v3425 = vsel %vm1838, %v3409, 0.0
      %v3426 = vsel %vm1837, %v3410, 0.0
      %v3427 = vsel %vm1838, %v3411, 0.0
      %v3428 = vsel %vm1837, %v3412, 0.0
      %v3429 = vsel %vm1838, %v3413, 0.0
      %v3430 = vsel %vm1837, %v3414, 0.0
      %v3431 = vsel %vm1838, %v3415, 0.0
      %v3432 = vmax.f32 %v3416, %v3417
      %v3433 = vrot.slane %v3432, 4
      %v3434 = vmax.f32 %v3432, %v3433
      %v3435 = vrot.slane %v3434, 2
      %v3436 = vmax.f32 %v3434, %v3435
      %v3437 = vrot.slane %v3436, 1
      %v3438 = vmax.f32 %v3436, %v3437
      %v3439 = vmax.f32 %v3418, %v3419
      %v3440 = vrot.slane %v3439, 4
      %v3441 = vmax.f32 %v3439, %v3440
      %v3442 = vrot.slane %v3441, 2
      %v3443 = vmax.f32 %v3441, %v3442
      %v3444 = vrot.slane %v3443, 1
      %v3445 = vmax.f32 %v3443, %v3444
      %v3446 = vmax.f32 %v3420, %v3421
      %v3447 = vrot.slane %v3446, 4
      %v3448 = vmax.f32 %v3446, %v3447
      %v3449 = vrot.slane %v3448, 2
      %v3450 = vmax.f32 %v3448, %v3449
      %v3451 = vrot.slane %v3450, 1
      %v3452 = vmax.f32 %v3450, %v3451
      %v3453 = vmax.f32 %v3422, %v3423
      %v3454 = vrot.slane %v3453, 4
      %v3455 = vmax.f32 %v3453, %v3454
      %v3456 = vrot.slane %v3455, 2
      %v3457 = vmax.f32 %v3455, %v3456
      %v3458 = vrot.slane %v3457, 1
      %v3459 = vmax.f32 %v3457, %v3458
      %v3460 = vmax.f32 %v3424, %v3425
      %v3461 = vrot.slane %v3460, 4
      %v3462 = vmax.f32 %v3460, %v3461
      %v3463 = vrot.slane %v3462, 2
      %v3464 = vmax.f32 %v3462, %v3463
      %v3465 = vrot.slane %v3464, 1
      %v3466 = vmax.f32 %v3464, %v3465
      %v3467 = vmax.f32 %v3426, %v3427
      %v3468 = vrot.slane %v3467, 4
      %v3469 = vmax.f32 %v3467, %v3468
      %v3470 = vrot.slane %v3469, 2
      %v3471 = vmax.f32 %v3469, %v3470
      %v3472 = vrot.slane %v3471, 1
      %v3473 = vmax.f32 %v3471, %v3472
      %v3474 = vmax.f32 %v3428, %v3429
      %v3475 = vrot.slane %v3474, 4
      %v3476 = vmax.f32 %v3474, %v3475
      %v3477 = vrot.slane %v3476, 2
      %v3478 = vmax.f32 %v3476, %v3477
      %v3479 = vrot.slane %v3478, 1
      %v3480 = vmax.f32 %v3478, %v3479
      %v3481 = vmax.f32 %v3430, %v3431
      %v3482 = vrot.slane %v3481, 4
      %v3483 = vmax.f32 %v3481, %v3482
      %v3484 = vrot.slane %v3483, 2
      %v3485 = vmax.f32 %v3483, %v3484
      %v3486 = vrot.slane %v3485, 1
      %v3487 = vmax.f32 %v3485, %v3486
      %vm3496 = vcmask 1041409
      %v3497 = vsel %vm3496, %v1868, %v1861
      %vm3498 = vcmask 1042434
      %v3499 = vsel %vm3498, %v1875, %v3497
      %vm3500 = vcmask 1043459
      %v3501 = vsel %vm3500, %v1882, %v3499
      %vm3502 = vcmask 1044484
      %v3503 = vsel %vm3502, %v1889, %v3501
      %vm3504 = vcmask 1045509
      %v3505 = vsel %vm3504, %v1896, %v3503
      %vm3506 = vcmask 1046534
      %v3507 = vsel %vm3506, %v1903, %v3505
      %vm3508 = vcmask 1047559
      %v3509 = vsel %vm3508, %v1910, %v3507
      %v3519 = vsel %vm3496, %v3445, %v3438
      %v3520 = vsel %vm3498, %v3452, %v3519
      %v3521 = vsel %vm3500, %v3459, %v3520
      %v3522 = vsel %vm3502, %v3466, %v3521
      %v3523 = vsel %vm3504, %v3473, %v3522
      %v3524 = vsel %vm3506, %v3480, %v3523
      %v3525 = vsel %vm3508, %v3487, %v3524
      %v3527 = vpack.c.bf16 %v3509, %v3509
      %v3528 = vpack.c.bf16 %v3525, %v3525
      %v3529 = vld [vmem:[%s5] sm:$0xf]
      %v3530 = vld [vmem:[%s5 + $0x4] sm:$0xf]
      %v3531 = vld [vmem:[%s5 + $0x8] sm:$0xf]
      %v3532 = vld [vmem:[%s5 + $0xc] sm:$0xf]
      %v3533 = vld [vmem:[%s5 + $0x10] sm:$0xf]
      %v3534 = vld [vmem:[%s5 + $0x14] sm:$0xf]
      %v3535 = vld [vmem:[%s5 + $0x18] sm:$0xf]
      %v3536 = vld [vmem:[%s5 + $0x1c] sm:$0xf]
      %v3537 = vld [vmem:[%s5 + $0x20] sm:$0xf]
      %v3538 = vld [vmem:[%s5 + $0x24] sm:$0xf]
      %v3539 = vld [vmem:[%s5 + $0x28] sm:$0xf]
      %v3540 = vld [vmem:[%s5 + $0x2c] sm:$0xf]
      %v3541 = vld [vmem:[%s5 + $0x30] sm:$0xf]
      %v3542 = vld [vmem:[%s5 + $0x34] sm:$0xf]
      %v3543 = vld [vmem:[%s5 + $0x38] sm:$0xf]
      %v3544 = vld [vmem:[%s5 + $0x3c] sm:$0xf]
      %v3545 = vld [vmem:[%s5 + $0x40] sm:$0xf]
      %v3546 = vld [vmem:[%s5 + $0x44] sm:$0xf]
      %v3547 = vld [vmem:[%s5 + $0x48] sm:$0xf]
      %v3548 = vld [vmem:[%s5 + $0x4c] sm:$0xf]
      %v3549 = vld [vmem:[%s5 + $0x50] sm:$0xf]
      %v3550 = vld [vmem:[%s5 + $0x54] sm:$0xf]
      %v3551 = vld [vmem:[%s5 + $0x58] sm:$0xf]
      %v3552 = vld [vmem:[%s5 + $0x5c] sm:$0xf]
      %v3553 = vld [vmem:[%s5 + $0x60] sm:$0xf]
      %v3554 = vld [vmem:[%s5 + $0x64] sm:$0xf]
      %v3555 = vld [vmem:[%s5 + $0x68] sm:$0xf]
      %v3556 = vld [vmem:[%s5 + $0x6c] sm:$0xf]
      %v3557 = vld [vmem:[%s5 + $0x70] sm:$0xf]
      %v3558 = vld [vmem:[%s5 + $0x74] sm:$0xf]
      %v3559 = vld [vmem:[%s5 + $0x78] sm:$0xf]
      %v3560 = vld [vmem:[%s5 + $0x7c] sm:$0xf]
      %v3561 = vld [vmem:[%s6] sm:$0x1]
      %v3563 = vlaneseq
      %v3564 = vshrl.u32 %v3563, 7
      %v3565 = vsub.s32 0, %v3564
      %v3566 = vrot.slane %v3561, %v3565
      %v3600 = vunpack.c.l.b16 %v3529
      %v3601 = vunpack.c.l.b16 %v3530
      %v3602 = vunpack.c.l.b16 %v3531
      %v3603 = vunpack.c.l.b16 %v3532
      %v3604 = vunpack.c.l.b16 %v3533
      %v3605 = vunpack.c.l.b16 %v3534
      %v3606 = vunpack.c.l.b16 %v3535
      %v3607 = vunpack.c.l.b16 %v3536
      %v3608 = vunpack.c.l.b16 %v3537
      %v3609 = vunpack.c.l.b16 %v3538
      %v3610 = vunpack.c.l.b16 %v3539
      %v3611 = vunpack.c.l.b16 %v3540
      %v3612 = vunpack.c.l.b16 %v3541
      %v3613 = vunpack.c.l.b16 %v3542
      %v3614 = vunpack.c.l.b16 %v3543
      %v3615 = vunpack.c.l.b16 %v3544
      %v3616 = vunpack.c.l.b16 %v3545
      %v3617 = vunpack.c.l.b16 %v3546
      %v3618 = vunpack.c.l.b16 %v3547
      %v3619 = vunpack.c.l.b16 %v3548
      %v3620 = vunpack.c.l.b16 %v3549
      %v3621 = vunpack.c.l.b16 %v3550
      %v3622 = vunpack.c.l.b16 %v3551
      %v3623 = vunpack.c.l.b16 %v3552
      %v3624 = vunpack.c.l.b16 %v3553
      %v3625 = vunpack.c.l.b16 %v3554
      %v3626 = vunpack.c.l.b16 %v3555
      %v3627 = vunpack.c.l.b16 %v3556
      %v3628 = vunpack.c.l.b16 %v3557
      %v3629 = vunpack.c.l.b16 %v3558
      %v3630 = vunpack.c.l.b16 %v3559
      %v3631 = vunpack.c.l.b16 %v3560
      %v3632 = vpack.c.b16 %v3601, %v3600
      %v3633 = vpack.c.b16 %v3603, %v3602
      %v3634 = vpack.c.b16 %v3605, %v3604
      %v3635 = vpack.c.b16 %v3607, %v3606
      %v3636 = vpack.c.b16 %v3609, %v3608
      %v3637 = vpack.c.b16 %v3611, %v3610
      %v3638 = vpack.c.b16 %v3613, %v3612
      %v3639 = vpack.c.b16 %v3615, %v3614
      %v3640 = vpack.c.b16 %v3617, %v3616
      %v3641 = vpack.c.b16 %v3619, %v3618
      %v3642 = vpack.c.b16 %v3621, %v3620
      %v3643 = vpack.c.b16 %v3623, %v3622
      %v3644 = vpack.c.b16 %v3625, %v3624
      %v3645 = vpack.c.b16 %v3627, %v3626
      %v3646 = vpack.c.b16 %v3629, %v3628
      %v3647 = vpack.c.b16 %v3631, %v3630
      %3664 = vmatprep.subr.bf16.mxu0 0
      %3665 = vmatpush1.bf16.msra.mxu0 %v3639
      %3666 = vmatprep.subr.bf16.mxu0 0
      %3667 = vmatpush1.bf16.msra.mxu0 %v3638
      %3668 = vmatprep.subr.bf16.mxu0 0
      %3669 = vmatpush1.bf16.msra.mxu0 %v3637
      %3670 = vmatprep.subr.bf16.mxu0 0
      %3671 = vmatpush1.bf16.msra.mxu0 %v3636
      %3672 = vmatprep.subr.bf16.mxu0 0
      %3673 = vmatpush1.bf16.msra.mxu0 %v3635
      %3674 = vmatprep.subr.bf16.mxu0 0
      %3675 = vmatpush1.bf16.msra.mxu0 %v3634
      %3676 = vmatprep.subr.bf16.mxu0 0
      %3677 = vmatpush1.bf16.msra.mxu0 %v3633
      %3678 = vmatprep.subr.bf16.mxu0 0
      %3679 = vmatpush1.bf16.msra.mxu0 %v3632
      %3680 = vmatprep.subr.bf16.mxu0 0
      %3681 = vmatpush2.bf16.msra.mxu0 %v3647
      %3682 = vmatprep.subr.bf16.mxu0 0
      %3683 = vmatpush2.bf16.msra.mxu0 %v3646
      %3684 = vmatprep.subr.bf16.mxu0 0
      %3685 = vmatpush2.bf16.msra.mxu0 %v3645
      %3686 = vmatprep.subr.bf16.mxu0 0
      %3687 = vmatpush2.bf16.msra.mxu0 %v3644
      %3688 = vmatprep.subr.bf16.mxu0 0
      %3689 = vmatpush2.bf16.msra.mxu0 %v3643
      %3690 = vmatprep.subr.bf16.mxu0 0
      %3691 = vmatpush2.bf16.msra.mxu0 %v3642
      %3692 = vmatprep.subr.bf16.mxu0 0
      %3693 = vmatpush2.bf16.msra.mxu0 %v3641
      %3694 = vmatprep.subr.bf16.mxu0 0
      %3695 = vmatpush2.bf16.msra.mxu0 %v3640
      %3696 = vmatprep.mubr.bf16.mxu0 %v3528
      %3697 = vmatmul.mubr.bf16.gmra.mxu0 %v3527
      %v3698 = vpop.f32.mrf.mxu0
      %v3699 = vadd.f32 %v3566, %v3698
      %v3700 = vpop.f32.mrf.mxu0
      %v3701 = vpop.f32.mrf.mxu0
      %v3702 = vpop.f32.mrf.mxu0
      %3703 = vdwg.mxu0
      %3704 = vmax.xlane.f32.xlu0 %v3699
      %v3705 = vpop.xlane.xlu0 %3704
      %v3706 = vsub.f32 %v3699, %v3705
      %v3707 = vmul.f32 %v3706, 1.442695
      %v3708 = vpow.pop %v3707
      %3709 = vadd.xlane.f32.xlu0 %v3708
      %v3710 = vpop.xlane.xlu0 %3709
      %v3711 = vlog2.pop %v3710
      %v3712 = vmul.f32 %v3711, 0.6931472
      %v3713 = vsub.f32 %v3706, %v3712
      %3714 = vst [vmem:[%s306] sm:$0xff] %v3713
      %p3715 = scmp.lt.s32.totalorder %s18, 1
      %s3716 = scalar_select %p3715, %s18, 1
      %s3717 = smul.addr %s3716, 8
      %s3718 = scalar_lea.vmem %s7, %s3717
      // Predicated region
      $region49: #{cnn_forward_pallas.1} parent=47 // pred_check
        %p3719 = pneg %p193
      $region50: #{cnn_forward_pallas.1} parent=47 // pred_check_branch
        %3721 = sbr.rel (%p3719) target = $region52
      $region51: #{cnn_forward_pallas.1} parent=47 // pred_region
        _
      $region52: #{cnn_forward_pallas.1} parent=47 // pred_fallthru
        _
    $region48: #{cnn_forward_pallas.1} parent=5 // pred_fallthru
      _
    %p3722 = scmp.le.s32.totalorder 2, %s13
    // Predicated region
    $region53: #{cnn_forward_pallas.1} parent=5 // pred_check
      %p3723 = pneg %p3722
    $region54: #{cnn_forward_pallas.1} parent=5 // pred_check_branch
      %3725 = sbr.rel (%p3723) target = $region56
    $region55: #{cnn_forward_pallas.1} parent=5 // pred_region
      %s3726 = ssub.s32 %s13, 2
      // Predicated region
      $region57: #{cnn_forward_pallas.1} parent=55 // pred_check
        %p3727 = pneg %p199
      $region58: #{cnn_forward_pallas.1} parent=55 // pred_check_branch
        %3729 = sbr.rel (%p3727) target = $region60
      $region59: #{cnn_forward_pallas.1} parent=55 // pred_region
        %p3730 = scmp.lt.s32.totalorder %s19, 1
        %s3731 = scalar_select %p3730, %s19, 1
        %s3732 = smul.addr %s3731, 8
        %s3733 = scalar_lea.vmem %s7, %s3732
      $region60: #{cnn_forward_pallas.1} parent=55 // pred_fallthru
        _
    $region56: #{cnn_forward_pallas.1} parent=5 // pred_fallthru
      _
  $region6: #{cnn_forward_pallas.1} parent=0 // loop_footer
    %s17 = sadd.s32 1, %s13
  $region7: #{cnn_forward_pallas.1} parent=0 // loop_footer_branch
    %12 = sbr.rel target = $region3
  $region8: #{cnn_forward_pallas.1} parent=0 // loop_exit
    _

</llo_original>
